<compile_context>
chip_gen: v7x
topology: tpu7x:2x2x1
jax: 0.10.0
libtpu: 0.0.40
codegen_flags: <defaults>
</compile_context>

<pallas_src>
import functools

import jax
import jax.numpy as jnp
from jax import lax
from jax.experimental import pallas as pl
from jax.experimental.pallas import tpu as pltpu

LN_EPS = 1e-5          # PyTorch nn.LayerNorm default eps
NEG_INF = -1e9         # matches masked_fill(-1000000000.0)


# ----------------------------- helpers -----------------------------

def _gelu(x):
    # tanh approximation of GELU (f32 math)
    c = 0.7978845608028654  # sqrt(2/pi)
    return 0.5 * x * (1.0 + jnp.tanh(c * (x + 0.044715 * x * x * x)))


def _layernorm(h, gamma, beta):
    mu = jnp.mean(h, axis=-1, keepdims=True)
    var = jnp.mean(jnp.square(h - mu), axis=-1, keepdims=True)
    return (h - mu) * lax.rsqrt(var + LN_EPS) * gamma + beta


def _row_tile(m):
    """Largest row tile (multiple of 8, preferring big tiles) that divides m."""
    for t in (512, 256, 128, 64, 32, 16, 8):
        if m % t == 0:
            return t
    return m


# ----------------------------- Pallas kernels -----------------------------

def _attn_block_kernel(x_ref, wa_ref, ba_ref, wp_ref, bp_ref, mask_ref,
                       g1_ref, be1_ref, o_ref):
    """Fused GPT-2 attention + residual add + ln_1 for one batch element (n_head == 1)."""
    x = x_ref[0]                                   # (S, E) f32
    xb = x.astype(jnp.bfloat16)
    # c_attn(x) and c_proj(x)  (h_proj is used as both key AND value, as in the reference)
    q = jnp.dot(xb, wa_ref[...], preferred_element_type=jnp.float32) + ba_ref[...]
    k = jnp.dot(xb, wp_ref[...], preferred_element_type=jnp.float32) + bp_ref[...]
    # attn_score[m, l] = sum_d h_attn[l, d] * h_proj[m, d]   (einsum 'bhld,bhmd->bhml')
    score = lax.dot_general(k.astype(jnp.bfloat16), q.astype(jnp.bfloat16),
                            (((1,), (1,)), ((), ())),
                            preferred_element_type=jnp.float32)          # (S_m, S_l)
    # pad mask: score[m, l] is killed where token l is padding (broadcast of a (1, S) row)
    m = mask_ref[0]                                                      # (1, S) int32
    score = jnp.where(m == 0, NEG_INF, score)
    # softmax over the last axis (l), f32
    smax = jnp.max(score, axis=-1, keepdims=True)
    e = jnp.exp(score - smax)
    prob = e * pl.reciprocal(jnp.sum(e, axis=-1, keepdims=True), approx=True)
    # attn_dropout / resid_dropout: identity at inference
    # attn_vec[l, d] = sum_m prob[m, l] * h_proj[m, d]        (einsum 'bhml,bhmd->bhld')
    attn = lax.dot_general(prob.astype(jnp.bfloat16), k.astype(jnp.bfloat16),
                           (((0,), (0,)), ((), ())),
                           preferred_element_type=jnp.float32)           # (S_l, E)
    # fused epilogue: ln_1(x + attn(x))
    o_ref[0] = _layernorm(x + attn, g1_ref[...], be1_ref[...]).astype(o_ref.dtype)


def attn_res_ln(x, wa, ba, wp, bp, pad_mask, gamma1, beta1):
    """x: (B, S, E) f32; pad_mask: (B, 1, S) int32; returns ln_1(x + attn(x)): (B, S, E)."""
    B, S, E = x.shape
    return pl.pallas_call(
        _attn_block_kernel,
        out_shape=jax.ShapeDtypeStruct((B, S, E), x.dtype),
        grid=(B,),
        in_specs=[
            pl.BlockSpec((1, S, E), lambda b: (b, 0, 0)),
            pl.BlockSpec((E, E), lambda b: (0, 0)),
            pl.BlockSpec((1, E), lambda b: (0, 0)),
            pl.BlockSpec((E, E), lambda b: (0, 0)),
            pl.BlockSpec((1, E), lambda b: (0, 0)),
            pl.BlockSpec((1, 1, S), lambda b: (b, 0, 0)),
            pl.BlockSpec((1, E), lambda b: (0, 0)),
            pl.BlockSpec((1, E), lambda b: (0, 0)),
        ],
        out_specs=pl.BlockSpec((1, S, E), lambda b: (b, 0, 0)),
        compiler_params=pltpu.CompilerParams(dimension_semantics=("parallel",)),
    )(x, wa, ba, wp, bp, pad_mask, gamma1, beta1)


def _mlp_block_kernel(h_ref, x_ref, w1_ref, b1_ref, w2_ref, b2_ref,
                      g2_ref, be2_ref, o_ref):
    """Fused MLP + residual add + ln_2 for one row tile."""
    hb = h_ref[...].astype(jnp.bfloat16)
    t = jnp.dot(hb, w1_ref[...], preferred_element_type=jnp.float32) + b1_ref[...]
    t = _gelu(t)
    # mlp_dropout: identity at inference
    o = jnp.dot(t.astype(jnp.bfloat16), w2_ref[...],
                preferred_element_type=jnp.float32) + b2_ref[...]
    # fused epilogue: ln_2(mlp(h) + x)
    o_ref[...] = _layernorm(o + x_ref[...], g2_ref[...], be2_ref[...]).astype(o_ref.dtype)


def mlp_res_ln(h, x, w1, b1, w2, b2, gamma2, beta2, tm):
    """h, x: (M, E) f32; w1: (E, 4E) bf16; w2: (4E, E) bf16; returns ln_2(mlp(h) + x)."""
    M, E = h.shape
    H = w1.shape[1]
    row = lambda shape: pl.BlockSpec(shape, lambda i: (i, 0))
    full = lambda shape: pl.BlockSpec(shape, lambda i: (0, 0))
    return pl.pallas_call(
        _mlp_block_kernel,
        out_shape=jax.ShapeDtypeStruct((M, E), h.dtype),
        grid=(M // tm,),
        in_specs=[row((tm, E)), row((tm, E)),
                  full((E, H)), full((1, H)), full((H, E)), full((1, E)),
                  full((1, E)), full((1, E))],
        out_specs=row((tm, E)),
        compiler_params=pltpu.CompilerParams(dimension_semantics=("parallel",)),
    )(h, x, w1, b1, w2, b2, gamma2, beta2)


def _ln_kernel(x_ref, g_ref, b_ref, o_ref):
    o_ref[...] = _layernorm(x_ref[...], g_ref[...], b_ref[...]).astype(o_ref.dtype)


def layernorm(x, gamma, beta, tm):
    """Row-tiled LayerNorm over the last axis; x: (M, E)."""
    M, E = x.shape
    row = lambda shape: pl.BlockSpec(shape, lambda i: (i, 0))
    full = lambda shape: pl.BlockSpec(shape, lambda i: (0, 0))
    return pl.pallas_call(
        _ln_kernel,
        out_shape=jax.ShapeDtypeStruct((M, E), x.dtype),
        grid=(M // tm,),
        in_specs=[row((tm, E)), full((1, E)), full((1, E))],
        out_specs=row((tm, E)),
        compiler_params=pltpu.CompilerParams(dimension_semantics=("parallel",)),
    )(x, gamma, beta)


# ----------------------------- model (glue in plain JAX) -----------------------------

def init_params(key, vocab_size, n_ctx, n_embd, n_head, n_layer):
    assert n_head == 1, "Block residual (x + attn_out) and LayerNorm(n_embd) force n_head == 1"
    def normal(k, shape, dtype=jnp.float32):
        return (0.02 * jax.random.normal(k, shape, jnp.float32)).astype(dtype)
    ones_e = jnp.ones((1, n_embd), jnp.float32)
    zeros_e = jnp.zeros((1, n_embd), jnp.float32)
    keys = jax.random.split(key, 2 + 4 * n_layer)
    params = {
        "wte": normal(keys[0], (vocab_size, n_embd)),
        "wpe": normal(keys[1], (n_ctx, n_embd)),
        "ln_f": (ones_e, zeros_e),
        "blocks": [],
    }
    bf16 = jnp.bfloat16
    for l in range(n_layer):
        k0, k1, k2, k3 = keys[2 + 4 * l: 6 + 4 * l]
        params["blocks"].append({
            # matmul weights stored in bf16 (MXU operands); biases / LN params stay f32
            "c_attn_w": normal(k0, (n_embd, n_head * n_embd), bf16),
            "c_attn_b": jnp.zeros((1, n_head * n_embd), jnp.float32),
            "c_proj_w": normal(k1, (n_embd, n_head * n_embd), bf16),
            "c_proj_b": jnp.zeros((1, n_head * n_embd), jnp.float32),
            "ln1": (ones_e, zeros_e),
            "ln2": (ones_e, zeros_e),
            "mlp_w1": normal(k2, (n_embd, 4 * n_embd), bf16),
            "mlp_b1": jnp.zeros((1, 4 * n_embd), jnp.float32),
            "mlp_w2": normal(k3, (4 * n_embd, n_embd), bf16),
            "mlp_b2": jnp.zeros((1, n_embd), jnp.float32),
        })
    return params


def gpt2_forward(params, tokens, pad_idx=0):
    B, S = tokens.shape
    E = params["wte"].shape[1]
    M = B * S
    tm = _row_tile(M)

    # pad mask kept at (B, 1, S); the (S, S) broadcast happens inside the attention kernel.
    pad_mask = (tokens != pad_idx).astype(jnp.int32)[:, None, :]

    # embedding gathers kept in plain JAX glue
    h = params["wte"][tokens] + params["wpe"][jnp.arange(S)][None, :, :]
    # self.drop: identity at inference

    for blk in params["blocks"]:
        x_in = h
        # ln_1(x + attn(x)) fused in one kernel
        h1 = attn_res_ln(x_in, blk["c_attn_w"], blk["c_attn_b"],
                         blk["c_proj_w"], blk["c_proj_b"], pad_mask, *blk["ln1"])
        # ln_2(mlp(h1) + x) fused in one kernel (row-tiled, weights resident)
        h = mlp_res_ln(h1.reshape(M, E), x_in.reshape(M, E),
                       blk["mlp_w1"], blk["mlp_b1"], blk["mlp_w2"], blk["mlp_b2"],
                       blk["ln2"][0], blk["ln2"][1], tm).reshape(B, S, E)

    return layernorm(h.reshape(M, E), *params["ln_f"], tm).reshape(B, S, E)   # ln_f(h)


if __name__ == "__main__":
    # Small demo shapes; n_embd chosen as 128 so the feature (lane) axis is dense.
    vocab_size, n_ctx, n_embd, n_head, n_layer = 64, 16, 128, 1, 2
    B, S = 2, 8

    key = jax.random.PRNGKey(0)
    pkey, tkey = jax.random.split(key)
    params = init_params(pkey, vocab_size, n_ctx, n_embd, n_head, n_layer)

    tokens = jax.random.randint(tkey, (B, S), 1, vocab_size, dtype=jnp.int32)
    tokens = tokens.at[:, -2:].set(0)   # a couple of pad tokens to exercise the mask

    fwd = jax.jit(functools.partial(gpt2_forward, pad_idx=0))
    out = fwd(params, tokens)
    jax.block_until_ready(out)
    assert out.shape == (B, S, n_embd) and out.dtype == jnp.float32
    print("KERNEL_OK")
</pallas_src>

<mosaic_0001>
module attributes {stable_mosaic.version = 11 : i64} {
  func.func @_mlp_block_kernel(%arg0: i32, %arg1: memref<16x128xf32, #tpu.memory_space<vmem>>, %arg2: memref<16x128xf32, #tpu.memory_space<vmem>>, %arg3: memref<128x512xbf16, #tpu.memory_space<vmem>>, %arg4: memref<1x512xf32, #tpu.memory_space<vmem>>, %arg5: memref<512x128xbf16, #tpu.memory_space<vmem>>, %arg6: memref<1x128xf32, #tpu.memory_space<vmem>>, %arg7: memref<1x128xf32, #tpu.memory_space<vmem>>, %arg8: memref<1x128xf32, #tpu.memory_space<vmem>>, %arg9: memref<16x128xf32, #tpu.memory_space<vmem>>) attributes {dimension_semantics = [#tpu.dimension_semantics<parallel>], iteration_bounds = array<i64: 1>, scalar_prefetch = 0 : i64, scratch_operands = 0 : i64, tpu.core_type = #tpu.core_type<tc>, window_params = [{transform_indices = @transform_0, window_bounds = array<i64: 16, 128>}, {transform_indices = @transform_1, window_bounds = array<i64: 16, 128>}, {pipeline_mode = #tpu.pipeline_mode<synchronous>, transform_indices = @transform_2, window_bounds = array<i64: 128, 512>}, {pipeline_mode = #tpu.pipeline_mode<synchronous>, transform_indices = @transform_3, window_bounds = array<i64: 1, 512>}, {pipeline_mode = #tpu.pipeline_mode<synchronous>, transform_indices = @transform_4, window_bounds = array<i64: 512, 128>}, {pipeline_mode = #tpu.pipeline_mode<synchronous>, transform_indices = @transform_5, window_bounds = array<i64: 1, 128>}, {pipeline_mode = #tpu.pipeline_mode<synchronous>, transform_indices = @transform_6, window_bounds = array<i64: 1, 128>}, {pipeline_mode = #tpu.pipeline_mode<synchronous>, transform_indices = @transform_7, window_bounds = array<i64: 1, 128>}, {transform_indices = @transform_8, window_bounds = array<i64: 16, 128>}]} {
    %c0 = arith.constant 0 : index
    %c0_0 = arith.constant 0 : index
    %0 = vector.load %arg1[%c0, %c0_0] : memref<16x128xf32, #tpu.memory_space<vmem>>, vector<16x128xf32>
    %1 = arith.truncf %0 : vector<16x128xf32> to vector<16x128xbf16>
    %c0_1 = arith.constant 0 : index
    %c0_2 = arith.constant 0 : index
    %2 = vector.load %arg3[%c0_1, %c0_2] : memref<128x512xbf16, #tpu.memory_space<vmem>>, vector<128x512xbf16>
    %cst = arith.constant dense<0.000000e+00> : vector<16x512xf32>
    %3 = tpu.matmul %1, %2, %cst {dimension_numbers = #tpu.dot_dimension_numbers<[1], [0], [0], [1], [0, 0, 1, 1], [], []>} : vector<16x128xbf16>, vector<128x512xbf16>, vector<16x512xf32> -> vector<16x512xf32>
    %c0_3 = arith.constant 0 : index
    %c0_4 = arith.constant 0 : index
    %4 = vector.load %arg4[%c0_3, %c0_4] : memref<1x512xf32, #tpu.memory_space<vmem>>, vector<1x512xf32>
    %5 = vector.broadcast %4 : vector<1x512xf32> to vector<16x512xf32>
    %6 = arith.addf %3, %5 : vector<16x512xf32>
    %cst_5 = arith.constant 5.000000e-01 : f32
    %7 = vector.broadcast %cst_5 : f32 to vector<16x512xf32>
    %8 = arith.mulf %7, %6 : vector<16x512xf32>
    %cst_6 = arith.constant 4.471500e-02 : f32
    %9 = vector.broadcast %cst_6 : f32 to vector<16x512xf32>
    %10 = arith.mulf %9, %6 : vector<16x512xf32>
    %11 = arith.mulf %10, %6 : vector<16x512xf32>
    %12 = arith.mulf %11, %6 : vector<16x512xf32>
    %13 = arith.addf %6, %12 : vector<16x512xf32>
    %cst_7 = arith.constant 0.797884583 : f32
    %14 = vector.broadcast %cst_7 : f32 to vector<16x512xf32>
    %15 = arith.mulf %14, %13 : vector<16x512xf32>
    %16 = math.tanh %15 : vector<16x512xf32>
    %cst_8 = arith.constant 1.000000e+00 : f32
    %17 = vector.broadcast %cst_8 : f32 to vector<16x512xf32>
    %18 = arith.addf %17, %16 : vector<16x512xf32>
    %19 = arith.mulf %8, %18 : vector<16x512xf32>
    %20 = arith.truncf %19 : vector<16x512xf32> to vector<16x512xbf16>
    %c0_9 = arith.constant 0 : index
    %c0_10 = arith.constant 0 : index
    %21 = vector.load %arg5[%c0_9, %c0_10] : memref<512x128xbf16, #tpu.memory_space<vmem>>, vector<512x128xbf16>
    %cst_11 = arith.constant dense<0.000000e+00> : vector<16x128xf32>
    %22 = tpu.matmul %20, %21, %cst_11 {dimension_numbers = #tpu.dot_dimension_numbers<[1], [0], [0], [1], [0, 0, 1, 1], [], []>} : vector<16x512xbf16>, vector<512x128xbf16>, vector<16x128xf32> -> vector<16x128xf32>
    %c0_12 = arith.constant 0 : index
    %c0_13 = arith.constant 0 : index
    %23 = vector.load %arg6[%c0_12, %c0_13] : memref<1x128xf32, #tpu.memory_space<vmem>>, vector<1x128xf32>
    %24 = vector.broadcast %23 : vector<1x128xf32> to vector<16x128xf32>
    %25 = arith.addf %22, %24 : vector<16x128xf32>
    %c0_14 = arith.constant 0 : index
    %c0_15 = arith.constant 0 : index
    %26 = vector.load %arg2[%c0_14, %c0_15] : memref<16x128xf32, #tpu.memory_space<vmem>>, vector<16x128xf32>
    %27 = arith.addf %25, %26 : vector<16x128xf32>
    %c0_16 = arith.constant 0 : index
    %c0_17 = arith.constant 0 : index
    %28 = vector.load %arg7[%c0_16, %c0_17] : memref<1x128xf32, #tpu.memory_space<vmem>>, vector<1x128xf32>
    %c0_18 = arith.constant 0 : index
    %c0_19 = arith.constant 0 : index
    %29 = vector.load %arg8[%c0_18, %c0_19] : memref<1x128xf32, #tpu.memory_space<vmem>>, vector<1x128xf32>
    %cst_20 = arith.constant dense<0.000000e+00> : vector<16xf32>
    %30 = vector.multi_reduction <add>, %27, %cst_20 [1] : vector<16x128xf32> to vector<16xf32>
    %31 = vector.shape_cast %30 : vector<16xf32> to vector<16x1xf32>
    %cst_21 = arith.constant 1.280000e+02 : f32
    %32 = vector.broadcast %cst_21 : f32 to vector<16x1xf32>
    %33 = arith.divf %31, %32 : vector<16x1xf32>
    %34 = vector.broadcast %33 : vector<16x1xf32> to vector<16x128xf32>
    %35 = arith.subf %27, %34 : vector<16x128xf32>
    %36 = arith.mulf %35, %35 : vector<16x128xf32>
    %cst_22 = arith.constant dense<0.000000e+00> : vector<16xf32>
    %37 = vector.multi_reduction <add>, %36, %cst_22 [1] : vector<16x128xf32> to vector<16xf32>
    %38 = vector.shape_cast %37 : vector<16xf32> to vector<16x1xf32>
    %cst_23 = arith.constant 1.280000e+02 : f32
    %39 = vector.broadcast %cst_23 : f32 to vector<16x1xf32>
    %40 = arith.divf %38, %39 : vector<16x1xf32>
    %41 = vector.broadcast %33 : vector<16x1xf32> to vector<16x128xf32>
    %42 = arith.subf %27, %41 : vector<16x128xf32>
    %cst_24 = arith.constant 9.99999974E-6 : f32
    %43 = vector.broadcast %cst_24 : f32 to vector<16x1xf32>
    %44 = arith.addf %40, %43 : vector<16x1xf32>
    %45 = math.rsqrt %44 : vector<16x1xf32>
    %46 = vector.broadcast %45 : vector<16x1xf32> to vector<16x128xf32>
    %47 = arith.mulf %42, %46 : vector<16x128xf32>
    %48 = vector.broadcast %28 : vector<1x128xf32> to vector<16x128xf32>
    %49 = arith.mulf %47, %48 : vector<16x128xf32>
    %50 = vector.broadcast %29 : vector<1x128xf32> to vector<16x128xf32>
    %51 = arith.addf %49, %50 : vector<16x128xf32>
    %c0_25 = arith.constant 0 : index
    %c0_26 = arith.constant 0 : index
    %52 = vector.load %arg9[%c0_25, %c0_26] : memref<16x128xf32, #tpu.memory_space<vmem>>, vector<16x128xf32>
    tpu.vector_store %arg9[%c0_25, %c0_26], %51 {strides = array<i32>} : memref<16x128xf32, #tpu.memory_space<vmem>>, vector<16x128xf32>,
    return
  }
  func.func @transform_0(%arg0: i32) -> (i32, i32) {
    %c0_i32 = arith.constant 0 : i32
    %c0_i32_0 = arith.constant 0 : i32
    return %arg0, %c0_i32 : i32, i32
  }
  func.func @transform_1(%arg0: i32) -> (i32, i32) {
    %c0_i32 = arith.constant 0 : i32
    %c0_i32_0 = arith.constant 0 : i32
    return %arg0, %c0_i32 : i32, i32
  }
  func.func @transform_2(%arg0: i32) -> (i32, i32) {
    %c0_i32 = arith.constant 0 : i32
    %c0_i32_0 = arith.constant 0 : i32
    %c0_i32_1 = arith.constant 0 : i32
    return %c0_i32, %c0_i32_0 : i32, i32
  }
  func.func @transform_3(%arg0: i32) -> (i32, i32) {
    %c0_i32 = arith.constant 0 : i32
    %c0_i32_0 = arith.constant 0 : i32
    %c0_i32_1 = arith.constant 0 : i32
    return %c0_i32, %c0_i32_0 : i32, i32
  }
  func.func @transform_4(%arg0: i32) -> (i32, i32) {
    %c0_i32 = arith.constant 0 : i32
    %c0_i32_0 = arith.constant 0 : i32
    %c0_i32_1 = arith.constant 0 : i32
    return %c0_i32, %c0_i32_0 : i32, i32
  }
  func.func @transform_5(%arg0: i32) -> (i32, i32) {
    %c0_i32 = arith.constant 0 : i32
    %c0_i32_0 = arith.constant 0 : i32
    %c0_i32_1 = arith.constant 0 : i32
    return %c0_i32, %c0_i32_0 : i32, i32
  }
  func.func @transform_6(%arg0: i32) -> (i32, i32) {
    %c0_i32 = arith.constant 0 : i32
    %c0_i32_0 = arith.constant 0 : i32
    %c0_i32_1 = arith.constant 0 : i32
    return %c0_i32, %c0_i32_0 : i32, i32
  }
  func.func @transform_7(%arg0: i32) -> (i32, i32) {
    %c0_i32 = arith.constant 0 : i32
    %c0_i32_0 = arith.constant 0 : i32
    %c0_i32_1 = arith.constant 0 : i32
    return %c0_i32, %c0_i32_0 : i32, i32
  }
  func.func @transform_8(%arg0: i32) -> (i32, i32) {
    %c0_i32 = arith.constant 0 : i32
    %c0_i32_0 = arith.constant 0 : i32
    return %arg0, %c0_i32 : i32, i32
  }
}

module attributes {stable_mosaic.version = 11 : i64} {
  func.func @_attn_block_kernel(%arg0: i32, %arg1: memref<1x8x128xf32, #tpu.memory_space<vmem>>, %arg2: memref<128x128xbf16, #tpu.memory_space<vmem>>, %arg3: memref<1x128xf32, #tpu.memory_space<vmem>>, %arg4: memref<128x128xbf16, #tpu.memory_space<vmem>>, %arg5: memref<1x128xf32, #tpu.memory_space<vmem>>, %arg6: memref<1x1x8xi32, #tpu.memory_space<vmem>>, %arg7: memref<1x128xf32, #tpu.memory_space<vmem>>, %arg8: memref<1x128xf32, #tpu.memory_space<vmem>>, %arg9: memref<1x8x128xf32, #tpu.memory_space<vmem>>) attributes {dimension_semantics = [#tpu.dimension_semantics<parallel>], iteration_bounds = array<i64: 2>, scalar_prefetch = 0 : i64, scratch_operands = 0 : i64, tpu.core_type = #tpu.core_type<tc>, window_params = [{transform_indices = @transform_0, window_bounds = array<i64: 1, 8, 128>}, {pipeline_mode = #tpu.pipeline_mode<synchronous>, transform_indices = @transform_1, window_bounds = array<i64: 128, 128>}, {pipeline_mode = #tpu.pipeline_mode<synchronous>, transform_indices = @transform_2, window_bounds = array<i64: 1, 128>}, {pipeline_mode = #tpu.pipeline_mode<synchronous>, transform_indices = @transform_3, window_bounds = array<i64: 128, 128>}, {pipeline_mode = #tpu.pipeline_mode<synchronous>, transform_indices = @transform_4, window_bounds = array<i64: 1, 128>}, {transform_indices = @transform_5, window_bounds = array<i64: 1, 1, 8>}, {pipeline_mode = #tpu.pipeline_mode<synchronous>, transform_indices = @transform_6, window_bounds = array<i64: 1, 128>}, {pipeline_mode = #tpu.pipeline_mode<synchronous>, transform_indices = @transform_7, window_bounds = array<i64: 1, 128>}, {transform_indices = @transform_8, window_bounds = array<i64: 1, 8, 128>}]} {
    %c0 = arith.constant 0 : index
    %c0_0 = arith.constant 0 : index
    %c0_1 = arith.constant 0 : index
    %0 = vector.load %arg1[%c0, %c0_0, %c0_1] : memref<1x8x128xf32, #tpu.memory_space<vmem>>, vector<1x8x128xf32>
    %1 = vector.shape_cast %0 : vector<1x8x128xf32> to vector<8x128xf32>
    %2 = arith.truncf %1 : vector<8x128xf32> to vector<8x128xbf16>
    %c0_2 = arith.constant 0 : index
    %c0_3 = arith.constant 0 : index
    %3 = vector.load %arg2[%c0_2, %c0_3] : memref<128x128xbf16, #tpu.memory_space<vmem>>, vector<128x128xbf16>
    %cst = arith.constant dense<0.000000e+00> : vector<8x128xf32>
    %4 = tpu.matmul %2, %3, %cst {dimension_numbers = #tpu.dot_dimension_numbers<[1], [0], [0], [1], [0, 0, 1, 1], [], []>} : vector<8x128xbf16>, vector<128x128xbf16>, vector<8x128xf32> -> vector<8x128xf32>
    %c0_4 = arith.constant 0 : index
    %c0_5 = arith.constant 0 : index
    %5 = vector.load %arg3[%c0_4, %c0_5] : memref<1x128xf32, #tpu.memory_space<vmem>>, vector<1x128xf32>
    %6 = vector.broadcast %5 : vector<1x128xf32> to vector<8x128xf32>
    %7 = arith.addf %4, %6 : vector<8x128xf32>
    %c0_6 = arith.constant 0 : index
    %c0_7 = arith.constant 0 : index
    %8 = vector.load %arg4[%c0_6, %c0_7] : memref<128x128xbf16, #tpu.memory_space<vmem>>, vector<128x128xbf16>
    %cst_8 = arith.constant dense<0.000000e+00> : vector<8x128xf32>
    %9 = tpu.matmul %2, %8, %cst_8 {dimension_numbers = #tpu.dot_dimension_numbers<[1], [0], [0], [1], [0, 0, 1, 1], [], []>} : vector<8x128xbf16>, vector<128x128xbf16>, vector<8x128xf32> -> vector<8x128xf32>
    %c0_9 = arith.constant 0 : index
    %c0_10 = arith.constant 0 : index
    %10 = vector.load %arg5[%c0_9, %c0_10] : memref<1x128xf32, #tpu.memory_space<vmem>>, vector<1x128xf32>
    %11 = vector.broadcast %10 : vector<1x128xf32> to vector<8x128xf32>
    %12 = arith.addf %9, %11 : vector<8x128xf32>
    %13 = arith.truncf %12 : vector<8x128xf32> to vector<8x128xbf16>
    %14 = arith.truncf %7 : vector<8x128xf32> to vector<8x128xbf16>
    %cst_11 = arith.constant dense<0.000000e+00> : vector<8x8xf32>
    %15 = tpu.matmul %13, %14, %cst_11 {dimension_numbers = #tpu.dot_dimension_numbers<[1], [1], [0], [0], [0, 0, 1, 0], [], []>} : vector<8x128xbf16>, vector<8x128xbf16>, vector<8x8xf32> -> vector<8x8xf32>
    %c0_12 = arith.constant 0 : index
    %c0_13 = arith.constant 0 : index
    %c0_14 = arith.constant 0 : index
    %16 = vector.load %arg6[%c0_12, %c0_13, %c0_14] : memref<1x1x8xi32, #tpu.memory_space<vmem>>, vector<1x1x8xi32>
    %17 = vector.shape_cast %16 : vector<1x1x8xi32> to vector<1x8xi32>
    %c0_i32 = arith.constant 0 : i32
    %18 = vector.broadcast %c0_i32 : i32 to vector<1x8xi32>
    %19 = arith.cmpi eq, %17, %18 : vector<1x8xi32>
    %cst_15 = arith.constant -1.000000e+09 : f32
    %20 = vector.shape_cast %19 : vector<1x8xi1> to vector<1x8xi1>
    %21 = vector.broadcast %20 : vector<1x8xi1> to vector<8x8xi1>
    %22 = vector.broadcast %cst_15 : f32 to vector<8x8xf32>
    %23 = arith.select %21, %22, %15 : vector<8x8xi1>, vector<8x8xf32>
    %cst_16 = arith.constant dense<0xFF800000> : vector<8xf32>
    %24 = vector.multi_reduction <maximumf>, %23, %cst_16 [1] : vector<8x8xf32> to vector<8xf32>
    %25 = vector.shape_cast %24 : vector<8xf32> to vector<8x1xf32>
    %26 = vector.broadcast %25 : vector<8x1xf32> to vector<8x8xf32>
    %27 = arith.subf %23, %26 : vector<8x8xf32>
    %28 = math.exp %27 : vector<8x8xf32>
    %cst_17 = arith.constant dense<0.000000e+00> : vector<8xf32>
    %29 = vector.multi_reduction <add>, %28, %cst_17 [1] : vector<8x8xf32> to vector<8xf32>
    %30 = vector.shape_cast %29 : vector<8xf32> to vector<8x1xf32>
    %31 = tpu.reciprocal %30 {approx = true} : vector<8x1xf32> -> vector<8x1xf32>
    %32 = vector.broadcast %31 : vector<8x1xf32> to vector<8x8xf32>
    %33 = arith.mulf %28, %32 : vector<8x8xf32>
    %34 = arith.truncf %33 : vector<8x8xf32> to vector<8x8xbf16>
    %35 = arith.truncf %12 : vector<8x128xf32> to vector<8x128xbf16>
    %cst_18 = arith.constant dense<0.000000e+00> : vector<8x128xf32>
    %36 = tpu.matmul %34, %35, %cst_18 {dimension_numbers = #tpu.dot_dimension_numbers<[0], [0], [1], [1], [0, 1, 1, 1], [], []>} : vector<8x8xbf16>, vector<8x128xbf16>, vector<8x128xf32> -> vector<8x128xf32>
    %37 = arith.addf %1, %36 : vector<8x128xf32>
    %c0_19 = arith.constant 0 : index
    %c0_20 = arith.constant 0 : index
    %38 = vector.load %arg7[%c0_19, %c0_20] : memref<1x128xf32, #tpu.memory_space<vmem>>, vector<1x128xf32>
    %c0_21 = arith.constant 0 : index
    %c0_22 = arith.constant 0 : index
    %39 = vector.load %arg8[%c0_21, %c0_22] : memref<1x128xf32, #tpu.memory_space<vmem>>, vector<1x128xf32>
    %cst_23 = arith.constant dense<0.000000e+00> : vector<8xf32>
    %40 = vector.multi_reduction <add>, %37, %cst_23 [1] : vector<8x128xf32> to vector<8xf32>
    %41 = vector.shape_cast %40 : vector<8xf32> to vector<8x1xf32>
    %cst_24 = arith.constant 1.280000e+02 : f32
    %42 = vector.broadcast %cst_24 : f32 to vector<8x1xf32>
    %43 = arith.divf %41, %42 : vector<8x1xf32>
    %44 = vector.broadcast %43 : vector<8x1xf32> to vector<8x128xf32>
    %45 = arith.subf %37, %44 : vector<8x128xf32>
    %46 = arith.mulf %45, %45 : vector<8x128xf32>
    %cst_25 = arith.constant dense<0.000000e+00> : vector<8xf32>
    %47 = vector.multi_reduction <add>, %46, %cst_25 [1] : vector<8x128xf32> to vector<8xf32>
    %48 = vector.shape_cast %47 : vector<8xf32> to vector<8x1xf32>
    %cst_26 = arith.constant 1.280000e+02 : f32
    %49 = vector.broadcast %cst_26 : f32 to vector<8x1xf32>
    %50 = arith.divf %48, %49 : vector<8x1xf32>
    %51 = vector.broadcast %43 : vector<8x1xf32> to vector<8x128xf32>
    %52 = arith.subf %37, %51 : vector<8x128xf32>
    %cst_27 = arith.constant 9.99999974E-6 : f32
    %53 = vector.broadcast %cst_27 : f32 to vector<8x1xf32>
    %54 = arith.addf %50, %53 : vector<8x1xf32>
    %55 = math.rsqrt %54 : vector<8x1xf32>
    %56 = vector.broadcast %55 : vector<8x1xf32> to vector<8x128xf32>
    %57 = arith.mulf %52, %56 : vector<8x128xf32>
    %58 = vector.broadcast %38 : vector<1x128xf32> to vector<8x128xf32>
    %59 = arith.mulf %57, %58 : vector<8x128xf32>
    %60 = vector.broadcast %39 : vector<1x128xf32> to vector<8x128xf32>
    %61 = arith.addf %59, %60 : vector<8x128xf32>
    %c0_28 = arith.constant 0 : index
    %c0_29 = arith.constant 0 : index
    %c0_30 = arith.constant 0 : index
    %62 = vector.load %arg9[%c0_28, %c0_29, %c0_30] : memref<1x8x128xf32, #tpu.memory_space<vmem>>, vector<1x8x128xf32>
    %63 = vector.shape_cast %62 : vector<1x8x128xf32> to vector<8x128xf32>
    %64 = vector.shape_cast %61 : vector<8x128xf32> to vector<1x8x128xf32>
    tpu.vector_store %arg9[%c0_28, %c0_29, %c0_30], %64 {strides = array<i32>} : memref<1x8x128xf32, #tpu.memory_space<vmem>>, vector<1x8x128xf32>,
    return
  }
  func.func @transform_0(%arg0: i32) -> (i32, i32, i32) {
    %c0_i32 = arith.constant 0 : i32
    %c0_i32_0 = arith.constant 0 : i32
    %c0_i32_1 = arith.constant 0 : i32
    return %arg0, %c0_i32, %c0_i32_0 : i32, i32, i32
  }
  func.func @transform_1(%arg0: i32) -> (i32, i32) {
    %c0_i32 = arith.constant 0 : i32
    %c0_i32_0 = arith.constant 0 : i32
    %c0_i32_1 = arith.constant 0 : i32
    return %c0_i32, %c0_i32_0 : i32, i32
  }
  func.func @transform_2(%arg0: i32) -> (i32, i32) {
    %c0_i32 = arith.constant 0 : i32
    %c0_i32_0 = arith.constant 0 : i32
    %c0_i32_1 = arith.constant 0 : i32
    return %c0_i32, %c0_i32_0 : i32, i32
  }
  func.func @transform_3(%arg0: i32) -> (i32, i32) {
    %c0_i32 = arith.constant 0 : i32
    %c0_i32_0 = arith.constant 0 : i32
    %c0_i32_1 = arith.constant 0 : i32
    return %c0_i32, %c0_i32_0 : i32, i32
  }
  func.func @transform_4(%arg0: i32) -> (i32, i32) {
    %c0_i32 = arith.constant 0 : i32
    %c0_i32_0 = arith.constant 0 : i32
    %c0_i32_1 = arith.constant 0 : i32
    return %c0_i32, %c0_i32_0 : i32, i32
  }
  func.func @transform_5(%arg0: i32) -> (i32, i32, i32) {
    %c0_i32 = arith.constant 0 : i32
    %c0_i32_0 = arith.constant 0 : i32
    %c0_i32_1 = arith.constant 0 : i32
    return %arg0, %c0_i32, %c0_i32_0 : i32, i32, i32
  }
  func.func @transform_6(%arg0: i32) -> (i32, i32) {
    %c0_i32 = arith.constant 0 : i32
    %c0_i32_0 = arith.constant 0 : i32
    %c0_i32_1 = arith.constant 0 : i32
    return %c0_i32, %c0_i32_0 : i32, i32
  }
  func.func @transform_7(%arg0: i32) -> (i32, i32) {
    %c0_i32 = arith.constant 0 : i32
    %c0_i32_0 = arith.constant 0 : i32
    %c0_i32_1 = arith.constant 0 : i32
    return %c0_i32, %c0_i32_0 : i32, i32
  }
  func.func @transform_8(%arg0: i32) -> (i32, i32, i32) {
    %c0_i32 = arith.constant 0 : i32
    %c0_i32_0 = arith.constant 0 : i32
    %c0_i32_1 = arith.constant 0 : i32
    return %arg0, %c0_i32, %c0_i32_0 : i32, i32, i32
  }
}

module attributes {stable_mosaic.version = 11 : i64} {
  func.func @_attn_block_kernel(%arg0: i32, %arg1: memref<1x8x128xf32, #tpu.memory_space<vmem>>, %arg2: memref<128x128xbf16, #tpu.memory_space<vmem>>, %arg3: memref<1x128xf32, #tpu.memory_space<vmem>>, %arg4: memref<128x128xbf16, #tpu.memory_space<vmem>>, %arg5: memref<1x128xf32, #tpu.memory_space<vmem>>, %arg6: memref<1x1x8xi32, #tpu.memory_space<vmem>>, %arg7: memref<1x128xf32, #tpu.memory_space<vmem>>, %arg8: memref<1x128xf32, #tpu.memory_space<vmem>>, %arg9: memref<1x8x128xf32, #tpu.memory_space<vmem>>) attributes {dimension_semantics = [#tpu.dimension_semantics<parallel>], iteration_bounds = array<i64: 2>, scalar_prefetch = 0 : i64, scratch_operands = 0 : i64, tpu.core_type = #tpu.core_type<tc>, window_params = [{transform_indices = @transform_0, window_bounds = array<i64: 1, 8, 128>}, {pipeline_mode = #tpu.pipeline_mode<synchronous>, transform_indices = @transform_1, window_bounds = array<i64: 128, 128>}, {pipeline_mode = #tpu.pipeline_mode<synchronous>, transform_indices = @transform_2, window_bounds = array<i64: 1, 128>}, {pipeline_mode = #tpu.pipeline_mode<synchronous>, transform_indices = @transform_3, window_bounds = array<i64: 128, 128>}, {pipeline_mode = #tpu.pipeline_mode<synchronous>, transform_indices = @transform_4, window_bounds = array<i64: 1, 128>}, {transform_indices = @transform_5, window_bounds = array<i64: 1, 1, 8>}, {pipeline_mode = #tpu.pipeline_mode<synchronous>, transform_indices = @transform_6, window_bounds = array<i64: 1, 128>}, {pipeline_mode = #tpu.pipeline_mode<synchronous>, transform_indices = @transform_7, window_bounds = array<i64: 1, 128>}, {transform_indices = @transform_8, window_bounds = array<i64: 1, 8, 128>}]} {
    %c0 = arith.constant 0 : index
    %c0_0 = arith.constant 0 : index
    %c0_1 = arith.constant 0 : index
    %0 = vector.load %arg1[%c0, %c0_0, %c0_1] : memref<1x8x128xf32, #tpu.memory_space<vmem>>, vector<1x8x128xf32>
    %1 = vector.shape_cast %0 : vector<1x8x128xf32> to vector<8x128xf32>
    %2 = arith.truncf %1 : vector<8x128xf32> to vector<8x128xbf16>
    %c0_2 = arith.constant 0 : index
    %c0_3 = arith.constant 0 : index
    %3 = vector.load %arg2[%c0_2, %c0_3] : memref<128x128xbf16, #tpu.memory_space<vmem>>, vector<128x128xbf16>
    %cst = arith.constant dense<0.000000e+00> : vector<8x128xf32>
    %4 = tpu.matmul %2, %3, %cst {dimension_numbers = #tpu.dot_dimension_numbers<[1], [0], [0], [1], [0, 0, 1, 1], [], []>} : vector<8x128xbf16>, vector<128x128xbf16>, vector<8x128xf32> -> vector<8x128xf32>
    %c0_4 = arith.constant 0 : index
    %c0_5 = arith.constant 0 : index
    %5 = vector.load %arg3[%c0_4, %c0_5] : memref<1x128xf32, #tpu.memory_space<vmem>>, vector<1x128xf32>
    %6 = vector.broadcast %5 : vector<1x128xf32> to vector<8x128xf32>
    %7 = arith.addf %4, %6 : vector<8x128xf32>
    %c0_6 = arith.constant 0 : index
    %c0_7 = arith.constant 0 : index
    %8 = vector.load %arg4[%c0_6, %c0_7] : memref<128x128xbf16, #tpu.memory_space<vmem>>, vector<128x128xbf16>
    %cst_8 = arith.constant dense<0.000000e+00> : vector<8x128xf32>
    %9 = tpu.matmul %2, %8, %cst_8 {dimension_numbers = #tpu.dot_dimension_numbers<[1], [0], [0], [1], [0, 0, 1, 1], [], []>} : vector<8x128xbf16>, vector<128x128xbf16>, vector<8x128xf32> -> vector<8x128xf32>
    %c0_9 = arith.constant 0 : index
    %c0_10 = arith.constant 0 : index
    %10 = vector.load %arg5[%c0_9, %c0_10] : memref<1x128xf32, #tpu.memory_space<vmem>>, vector<1x128xf32>
    %11 = vector.broadcast %10 : vector<1x128xf32> to vector<8x128xf32>
    %12 = arith.addf %9, %11 : vector<8x128xf32>
    %13 = arith.truncf %12 : vector<8x128xf32> to vector<8x128xbf16>
    %14 = arith.truncf %7 : vector<8x128xf32> to vector<8x128xbf16>
    %cst_11 = arith.constant dense<0.000000e+00> : vector<8x8xf32>
    %15 = tpu.matmul %13, %14, %cst_11 {dimension_numbers = #tpu.dot_dimension_numbers<[1], [1], [0], [0], [0, 0, 1, 0], [], []>} : vector<8x128xbf16>, vector<8x128xbf16>, vector<8x8xf32> -> vector<8x8xf32>
    %c0_12 = arith.constant 0 : index
    %c0_13 = arith.constant 0 : index
    %c0_14 = arith.constant 0 : index
    %16 = vector.load %arg6[%c0_12, %c0_13, %c0_14] : memref<1x1x8xi32, #tpu.memory_space<vmem>>, vector<1x1x8xi32>
    %17 = vector.shape_cast %16 : vector<1x1x8xi32> to vector<1x8xi32>
    %c0_i32 = arith.constant 0 : i32
    %18 = vector.broadcast %c0_i32 : i32 to vector<1x8xi32>
    %19 = arith.cmpi eq, %17, %18 : vector<1x8xi32>
    %cst_15 = arith.constant -1.000000e+09 : f32
    %20 = vector.shape_cast %19 : vector<1x8xi1> to vector<1x8xi1>
    %21 = vector.broadcast %20 : vector<1x8xi1> to vector<8x8xi1>
    %22 = vector.broadcast %cst_15 : f32 to vector<8x8xf32>
    %23 = arith.select %21, %22, %15 : vector<8x8xi1>, vector<8x8xf32>
    %cst_16 = arith.constant dense<0xFF800000> : vector<8xf32>
    %24 = vector.multi_reduction <maximumf>, %23, %cst_16 [1] : vector<8x8xf32> to vector<8xf32>
    %25 = vector.shape_cast %24 : vector<8xf32> to vector<8x1xf32>
    %26 = vector.broadcast %25 : vector<8x1xf32> to vector<8x8xf32>
    %27 = arith.subf %23, %26 : vector<8x8xf32>
    %28 = math.exp %27 : vector<8x8xf32>
    %cst_17 = arith.constant dense<0.000000e+00> : vector<8xf32>
    %29 = vector.multi_reduction <add>, %28, %cst_17 [1] : vector<8x8xf32> to vector<8xf32>
    %30 = vector.shape_cast %29 : vector<8xf32> to vector<8x1xf32>
    %31 = tpu.reciprocal %30 {approx = true} : vector<8x1xf32> -> vector<8x1xf32>
    %32 = vector.broadcast %31 : vector<8x1xf32> to vector<8x8xf32>
    %33 = arith.mulf %28, %32 : vector<8x8xf32>
    %34 = arith.truncf %33 : vector<8x8xf32> to vector<8x8xbf16>
    %35 = arith.truncf %12 : vector<8x128xf32> to vector<8x128xbf16>
    %cst_18 = arith.constant dense<0.000000e+00> : vector<8x128xf32>
    %36 = tpu.matmul %34, %35, %cst_18 {dimension_numbers = #tpu.dot_dimension_numbers<[0], [0], [1], [1], [0, 1, 1, 1], [], []>} : vector<8x8xbf16>, vector<8x128xbf16>, vector<8x128xf32> -> vector<8x128xf32>
    %37 = arith.addf %1, %36 : vector<8x128xf32>
    %c0_19 = arith.constant 0 : index
    %c0_20 = arith.constant 0 : index
    %38 = vector.load %arg7[%c0_19, %c0_20] : memref<1x128xf32, #tpu.memory_space<vmem>>, vector<1x128xf32>
    %c0_21 = arith.constant 0 : index
    %c0_22 = arith.constant 0 : index
    %39 = vector.load %arg8[%c0_21, %c0_22] : memref<1x128xf32, #tpu.memory_space<vmem>>, vector<1x128xf32>
    %cst_23 = arith.constant dense<0.000000e+00> : vector<8xf32>
    %40 = vector.multi_reduction <add>, %37, %cst_23 [1] : vector<8x128xf32> to vector<8xf32>
    %41 = vector.shape_cast %40 : vector<8xf32> to vector<8x1xf32>
    %cst_24 = arith.constant 1.280000e+02 : f32
    %42 = vector.broadcast %cst_24 : f32 to vector<8x1xf32>
    %43 = arith.divf %41, %42 : vector<8x1xf32>
    %44 = vector.broadcast %43 : vector<8x1xf32> to vector<8x128xf32>
    %45 = arith.subf %37, %44 : vector<8x128xf32>
    %46 = arith.mulf %45, %45 : vector<8x128xf32>
    %cst_25 = arith.constant dense<0.000000e+00> : vector<8xf32>
    %47 = vector.multi_reduction <add>, %46, %cst_25 [1] : vector<8x128xf32> to vector<8xf32>
    %48 = vector.shape_cast %47 : vector<8xf32> to vector<8x1xf32>
    %cst_26 = arith.constant 1.280000e+02 : f32
    %49 = vector.broadcast %cst_26 : f32 to vector<8x1xf32>
    %50 = arith.divf %48, %49 : vector<8x1xf32>
    %51 = vector.broadcast %43 : vector<8x1xf32> to vector<8x128xf32>
    %52 = arith.subf %37, %51 : vector<8x128xf32>
    %cst_27 = arith.constant 9.99999974E-6 : f32
    %53 = vector.broadcast %cst_27 : f32 to vector<8x1xf32>
    %54 = arith.addf %50, %53 : vector<8x1xf32>
    %55 = math.rsqrt %54 : vector<8x1xf32>
    %56 = vector.broadcast %55 : vector<8x1xf32> to vector<8x128xf32>
    %57 = arith.mulf %52, %56 : vector<8x128xf32>
    %58 = vector.broadcast %38 : vector<1x128xf32> to vector<8x128xf32>
    %59 = arith.mulf %57, %58 : vector<8x128xf32>
    %60 = vector.broadcast %39 : vector<1x128xf32> to vector<8x128xf32>
    %61 = arith.addf %59, %60 : vector<8x128xf32>
    %c0_28 = arith.constant 0 : index
    %c0_29 = arith.constant 0 : index
    %c0_30 = arith.constant 0 : index
    %62 = vector.load %arg9[%c0_28, %c0_29, %c0_30] : memref<1x8x128xf32, #tpu.memory_space<vmem>>, vector<1x8x128xf32>
    %63 = vector.shape_cast %62 : vector<1x8x128xf32> to vector<8x128xf32>
    %64 = vector.shape_cast %61 : vector<8x128xf32> to vector<1x8x128xf32>
    tpu.vector_store %arg9[%c0_28, %c0_29, %c0_30], %64 {strides = array<i32>} : memref<1x8x128xf32, #tpu.memory_space<vmem>>, vector<1x8x128xf32>,
    return
  }
  func.func @transform_0(%arg0: i32) -> (i32, i32, i32) {
    %c0_i32 = arith.constant 0 : i32
    %c0_i32_0 = arith.constant 0 : i32
    %c0_i32_1 = arith.constant 0 : i32
    return %arg0, %c0_i32, %c0_i32_0 : i32, i32, i32
  }
  func.func @transform_1(%arg0: i32) -> (i32, i32) {
    %c0_i32 = arith.constant 0 : i32
    %c0_i32_0 = arith.constant 0 : i32
    %c0_i32_1 = arith.constant 0 : i32
    return %c0_i32, %c0_i32_0 : i32, i32
  }
  func.func @transform_2(%arg0: i32) -> (i32, i32) {
    %c0_i32 = arith.constant 0 : i32
    %c0_i32_0 = arith.constant 0 : i32
    %c0_i32_1 = arith.constant 0 : i32
    return %c0_i32, %c0_i32_0 : i32, i32
  }
  func.func @transform_3(%arg0: i32) -> (i32, i32) {
    %c0_i32 = arith.constant 0 : i32
    %c0_i32_0 = arith.constant 0 : i32
    %c0_i32_1 = arith.constant 0 : i32
    return %c0_i32, %c0_i32_0 : i32, i32
  }
  func.func @transform_4(%arg0: i32) -> (i32, i32) {
    %c0_i32 = arith.constant 0 : i32
    %c0_i32_0 = arith.constant 0 : i32
    %c0_i32_1 = arith.constant 0 : i32
    return %c0_i32, %c0_i32_0 : i32, i32
  }
  func.func @transform_5(%arg0: i32) -> (i32, i32, i32) {
    %c0_i32 = arith.constant 0 : i32
    %c0_i32_0 = arith.constant 0 : i32
    %c0_i32_1 = arith.constant 0 : i32
    return %arg0, %c0_i32, %c0_i32_0 : i32, i32, i32
  }
  func.func @transform_6(%arg0: i32) -> (i32, i32) {
    %c0_i32 = arith.constant 0 : i32
    %c0_i32_0 = arith.constant 0 : i32
    %c0_i32_1 = arith.constant 0 : i32
    return %c0_i32, %c0_i32_0 : i32, i32
  }
  func.func @transform_7(%arg0: i32) -> (i32, i32) {
    %c0_i32 = arith.constant 0 : i32
    %c0_i32_0 = arith.constant 0 : i32
    %c0_i32_1 = arith.constant 0 : i32
    return %c0_i32, %c0_i32_0 : i32, i32
  }
  func.func @transform_8(%arg0: i32) -> (i32, i32, i32) {
    %c0_i32 = arith.constant 0 : i32
    %c0_i32_0 = arith.constant 0 : i32
    %c0_i32_1 = arith.constant 0 : i32
    return %arg0, %c0_i32, %c0_i32_0 : i32, i32, i32
  }
}

module attributes {stable_mosaic.version = 11 : i64} {
  func.func @_mlp_block_kernel(%arg0: i32, %arg1: memref<16x128xf32, #tpu.memory_space<vmem>>, %arg2: memref<16x128xf32, #tpu.memory_space<vmem>>, %arg3: memref<128x512xbf16, #tpu.memory_space<vmem>>, %arg4: memref<1x512xf32, #tpu.memory_space<vmem>>, %arg5: memref<512x128xbf16, #tpu.memory_space<vmem>>, %arg6: memref<1x128xf32, #tpu.memory_space<vmem>>, %arg7: memref<1x128xf32, #tpu.memory_space<vmem>>, %arg8: memref<1x128xf32, #tpu.memory_space<vmem>>, %arg9: memref<16x128xf32, #tpu.memory_space<vmem>>) attributes {dimension_semantics = [#tpu.dimension_semantics<parallel>], iteration_bounds = array<i64: 1>, scalar_prefetch = 0 : i64, scratch_operands = 0 : i64, tpu.core_type = #tpu.core_type<tc>, window_params = [{transform_indices = @transform_0, window_bounds = array<i64: 16, 128>}, {transform_indices = @transform_1, window_bounds = array<i64: 16, 128>}, {pipeline_mode = #tpu.pipeline_mode<synchronous>, transform_indices = @transform_2, window_bounds = array<i64: 128, 512>}, {pipeline_mode = #tpu.pipeline_mode<synchronous>, transform_indices = @transform_3, window_bounds = array<i64: 1, 512>}, {pipeline_mode = #tpu.pipeline_mode<synchronous>, transform_indices = @transform_4, window_bounds = array<i64: 512, 128>}, {pipeline_mode = #tpu.pipeline_mode<synchronous>, transform_indices = @transform_5, window_bounds = array<i64: 1, 128>}, {pipeline_mode = #tpu.pipeline_mode<synchronous>, transform_indices = @transform_6, window_bounds = array<i64: 1, 128>}, {pipeline_mode = #tpu.pipeline_mode<synchronous>, transform_indices = @transform_7, window_bounds = array<i64: 1, 128>}, {transform_indices = @transform_8, window_bounds = array<i64: 16, 128>}]} {
    %c0 = arith.constant 0 : index
    %c0_0 = arith.constant 0 : index
    %0 = vector.load %arg1[%c0, %c0_0] : memref<16x128xf32, #tpu.memory_space<vmem>>, vector<16x128xf32>
    %1 = arith.truncf %0 : vector<16x128xf32> to vector<16x128xbf16>
    %c0_1 = arith.constant 0 : index
    %c0_2 = arith.constant 0 : index
    %2 = vector.load %arg3[%c0_1, %c0_2] : memref<128x512xbf16, #tpu.memory_space<vmem>>, vector<128x512xbf16>
    %cst = arith.constant dense<0.000000e+00> : vector<16x512xf32>
    %3 = tpu.matmul %1, %2, %cst {dimension_numbers = #tpu.dot_dimension_numbers<[1], [0], [0], [1], [0, 0, 1, 1], [], []>} : vector<16x128xbf16>, vector<128x512xbf16>, vector<16x512xf32> -> vector<16x512xf32>
    %c0_3 = arith.constant 0 : index
    %c0_4 = arith.constant 0 : index
    %4 = vector.load %arg4[%c0_3, %c0_4] : memref<1x512xf32, #tpu.memory_space<vmem>>, vector<1x512xf32>
    %5 = vector.broadcast %4 : vector<1x512xf32> to vector<16x512xf32>
    %6 = arith.addf %3, %5 : vector<16x512xf32>
    %cst_5 = arith.constant 5.000000e-01 : f32
    %7 = vector.broadcast %cst_5 : f32 to vector<16x512xf32>
    %8 = arith.mulf %7, %6 : vector<16x512xf32>
    %cst_6 = arith.constant 4.471500e-02 : f32
    %9 = vector.broadcast %cst_6 : f32 to vector<16x512xf32>
    %10 = arith.mulf %9, %6 : vector<16x512xf32>
    %11 = arith.mulf %10, %6 : vector<16x512xf32>
    %12 = arith.mulf %11, %6 : vector<16x512xf32>
    %13 = arith.addf %6, %12 : vector<16x512xf32>
    %cst_7 = arith.constant 0.797884583 : f32
    %14 = vector.broadcast %cst_7 : f32 to vector<16x512xf32>
    %15 = arith.mulf %14, %13 : vector<16x512xf32>
    %16 = math.tanh %15 : vector<16x512xf32>
    %cst_8 = arith.constant 1.000000e+00 : f32
    %17 = vector.broadcast %cst_8 : f32 to vector<16x512xf32>
    %18 = arith.addf %17, %16 : vector<16x512xf32>
    %19 = arith.mulf %8, %18 : vector<16x512xf32>
    %20 = arith.truncf %19 : vector<16x512xf32> to vector<16x512xbf16>
    %c0_9 = arith.constant 0 : index
    %c0_10 = arith.constant 0 : index
    %21 = vector.load %arg5[%c0_9, %c0_10] : memref<512x128xbf16, #tpu.memory_space<vmem>>, vector<512x128xbf16>
    %cst_11 = arith.constant dense<0.000000e+00> : vector<16x128xf32>
    %22 = tpu.matmul %20, %21, %cst_11 {dimension_numbers = #tpu.dot_dimension_numbers<[1], [0], [0], [1], [0, 0, 1, 1], [], []>} : vector<16x512xbf16>, vector<512x128xbf16>, vector<16x128xf32> -> vector<16x128xf32>
    %c0_12 = arith.constant 0 : index
    %c0_13 = arith.constant 0 : index
    %23 = vector.load %arg6[%c0_12, %c0_13] : memref<1x128xf32, #tpu.memory_space<vmem>>, vector<1x128xf32>
    %24 = vector.broadcast %23 : vector<1x128xf32> to vector<16x128xf32>
    %25 = arith.addf %22, %24 : vector<16x128xf32>
    %c0_14 = arith.constant 0 : index
    %c0_15 = arith.constant 0 : index
    %26 = vector.load %arg2[%c0_14, %c0_15] : memref<16x128xf32, #tpu.memory_space<vmem>>, vector<16x128xf32>
    %27 = arith.addf %25, %26 : vector<16x128xf32>
    %c0_16 = arith.constant 0 : index
    %c0_17 = arith.constant 0 : index
    %28 = vector.load %arg7[%c0_16, %c0_17] : memref<1x128xf32, #tpu.memory_space<vmem>>, vector<1x128xf32>
    %c0_18 = arith.constant 0 : index
    %c0_19 = arith.constant 0 : index
    %29 = vector.load %arg8[%c0_18, %c0_19] : memref<1x128xf32, #tpu.memory_space<vmem>>, vector<1x128xf32>
    %cst_20 = arith.constant dense<0.000000e+00> : vector<16xf32>
    %30 = vector.multi_reduction <add>, %27, %cst_20 [1] : vector<16x128xf32> to vector<16xf32>
    %31 = vector.shape_cast %30 : vector<16xf32> to vector<16x1xf32>
    %cst_21 = arith.constant 1.280000e+02 : f32
    %32 = vector.broadcast %cst_21 : f32 to vector<16x1xf32>
    %33 = arith.divf %31, %32 : vector<16x1xf32>
    %34 = vector.broadcast %33 : vector<16x1xf32> to vector<16x128xf32>
    %35 = arith.subf %27, %34 : vector<16x128xf32>
    %36 = arith.mulf %35, %35 : vector<16x128xf32>
    %cst_22 = arith.constant dense<0.000000e+00> : vector<16xf32>
    %37 = vector.multi_reduction <add>, %36, %cst_22 [1] : vector<16x128xf32> to vector<16xf32>
    %38 = vector.shape_cast %37 : vector<16xf32> to vector<16x1xf32>
    %cst_23 = arith.constant 1.280000e+02 : f32
    %39 = vector.broadcast %cst_23 : f32 to vector<16x1xf32>
    %40 = arith.divf %38, %39 : vector<16x1xf32>
    %41 = vector.broadcast %33 : vector<16x1xf32> to vector<16x128xf32>
    %42 = arith.subf %27, %41 : vector<16x128xf32>
    %cst_24 = arith.constant 9.99999974E-6 : f32
    %43 = vector.broadcast %cst_24 : f32 to vector<16x1xf32>
    %44 = arith.addf %40, %43 : vector<16x1xf32>
    %45 = math.rsqrt %44 : vector<16x1xf32>
    %46 = vector.broadcast %45 : vector<16x1xf32> to vector<16x128xf32>
    %47 = arith.mulf %42, %46 : vector<16x128xf32>
    %48 = vector.broadcast %28 : vector<1x128xf32> to vector<16x128xf32>
    %49 = arith.mulf %47, %48 : vector<16x128xf32>
    %50 = vector.broadcast %29 : vector<1x128xf32> to vector<16x128xf32>
    %51 = arith.addf %49, %50 : vector<16x128xf32>
    %c0_25 = arith.constant 0 : index
    %c0_26 = arith.constant 0 : index
    %52 = vector.load %arg9[%c0_25, %c0_26] : memref<16x128xf32, #tpu.memory_space<vmem>>, vector<16x128xf32>
    tpu.vector_store %arg9[%c0_25, %c0_26], %51 {strides = array<i32>} : memref<16x128xf32, #tpu.memory_space<vmem>>, vector<16x128xf32>,
    return
  }
  func.func @transform_0(%arg0: i32) -> (i32, i32) {
    %c0_i32 = arith.constant 0 : i32
    %c0_i32_0 = arith.constant 0 : i32
    return %arg0, %c0_i32 : i32, i32
  }
  func.func @transform_1(%arg0: i32) -> (i32, i32) {
    %c0_i32 = arith.constant 0 : i32
    %c0_i32_0 = arith.constant 0 : i32
    return %arg0, %c0_i32 : i32, i32
  }
  func.func @transform_2(%arg0: i32) -> (i32, i32) {
    %c0_i32 = arith.constant 0 : i32
    %c0_i32_0 = arith.constant 0 : i32
    %c0_i32_1 = arith.constant 0 : i32
    return %c0_i32, %c0_i32_0 : i32, i32
  }
  func.func @transform_3(%arg0: i32) -> (i32, i32) {
    %c0_i32 = arith.constant 0 : i32
    %c0_i32_0 = arith.constant 0 : i32
    %c0_i32_1 = arith.constant 0 : i32
    return %c0_i32, %c0_i32_0 : i32, i32
  }
  func.func @transform_4(%arg0: i32) -> (i32, i32) {
    %c0_i32 = arith.constant 0 : i32
    %c0_i32_0 = arith.constant 0 : i32
    %c0_i32_1 = arith.constant 0 : i32
    return %c0_i32, %c0_i32_0 : i32, i32
  }
  func.func @transform_5(%arg0: i32) -> (i32, i32) {
    %c0_i32 = arith.constant 0 : i32
    %c0_i32_0 = arith.constant 0 : i32
    %c0_i32_1 = arith.constant 0 : i32
    return %c0_i32, %c0_i32_0 : i32, i32
  }
  func.func @transform_6(%arg0: i32) -> (i32, i32) {
    %c0_i32 = arith.constant 0 : i32
    %c0_i32_0 = arith.constant 0 : i32
    %c0_i32_1 = arith.constant 0 : i32
    return %c0_i32, %c0_i32_0 : i32, i32
  }
  func.func @transform_7(%arg0: i32) -> (i32, i32) {
    %c0_i32 = arith.constant 0 : i32
    %c0_i32_0 = arith.constant 0 : i32
    %c0_i32_1 = arith.constant 0 : i32
    return %c0_i32, %c0_i32_0 : i32, i32
  }
  func.func @transform_8(%arg0: i32) -> (i32, i32) {
    %c0_i32 = arith.constant 0 : i32
    %c0_i32_0 = arith.constant 0 : i32
    return %arg0, %c0_i32 : i32, i32
  }
}

module attributes {stable_mosaic.version = 11 : i64} {
  func.func @_ln_kernel(%arg0: i32, %arg1: memref<16x128xf32, #tpu.memory_space<vmem>>, %arg2: memref<1x128xf32, #tpu.memory_space<vmem>>, %arg3: memref<1x128xf32, #tpu.memory_space<vmem>>, %arg4: memref<16x128xf32, #tpu.memory_space<vmem>>) attributes {dimension_semantics = [#tpu.dimension_semantics<parallel>], iteration_bounds = array<i64: 1>, scalar_prefetch = 0 : i64, scratch_operands = 0 : i64, tpu.core_type = #tpu.core_type<tc>, window_params = [{transform_indices = @transform_0, window_bounds = array<i64: 16, 128>}, {pipeline_mode = #tpu.pipeline_mode<synchronous>, transform_indices = @transform_1, window_bounds = array<i64: 1, 128>}, {pipeline_mode = #tpu.pipeline_mode<synchronous>, transform_indices = @transform_2, window_bounds = array<i64: 1, 128>}, {transform_indices = @transform_3, window_bounds = array<i64: 16, 128>}]} {
    %c0 = arith.constant 0 : index
    %c0_0 = arith.constant 0 : index
    %0 = vector.load %arg1[%c0, %c0_0] : memref<16x128xf32, #tpu.memory_space<vmem>>, vector<16x128xf32>
    %c0_1 = arith.constant 0 : index
    %c0_2 = arith.constant 0 : index
    %1 = vector.load %arg2[%c0_1, %c0_2] : memref<1x128xf32, #tpu.memory_space<vmem>>, vector<1x128xf32>
    %c0_3 = arith.constant 0 : index
    %c0_4 = arith.constant 0 : index
    %2 = vector.load %arg3[%c0_3, %c0_4] : memref<1x128xf32, #tpu.memory_space<vmem>>, vector<1x128xf32>
    %cst = arith.constant dense<0.000000e+00> : vector<16xf32>
    %3 = vector.multi_reduction <add>, %0, %cst [1] : vector<16x128xf32> to vector<16xf32>
    %4 = vector.shape_cast %3 : vector<16xf32> to vector<16x1xf32>
    %cst_5 = arith.constant 1.280000e+02 : f32
    %5 = vector.broadcast %cst_5 : f32 to vector<16x1xf32>
    %6 = arith.divf %4, %5 : vector<16x1xf32>
    %7 = vector.broadcast %6 : vector<16x1xf32> to vector<16x128xf32>
    %8 = arith.subf %0, %7 : vector<16x128xf32>
    %9 = arith.mulf %8, %8 : vector<16x128xf32>
    %cst_6 = arith.constant dense<0.000000e+00> : vector<16xf32>
    %10 = vector.multi_reduction <add>, %9, %cst_6 [1] : vector<16x128xf32> to vector<16xf32>
    %11 = vector.shape_cast %10 : vector<16xf32> to vector<16x1xf32>
    %cst_7 = arith.constant 1.280000e+02 : f32
    %12 = vector.broadcast %cst_7 : f32 to vector<16x1xf32>
    %13 = arith.divf %11, %12 : vector<16x1xf32>
    %14 = vector.broadcast %6 : vector<16x1xf32> to vector<16x128xf32>
    %15 = arith.subf %0, %14 : vector<16x128xf32>
    %cst_8 = arith.constant 9.99999974E-6 : f32
    %16 = vector.broadcast %cst_8 : f32 to vector<16x1xf32>
    %17 = arith.addf %13, %16 : vector<16x1xf32>
    %18 = math.rsqrt %17 : vector<16x1xf32>
    %19 = vector.broadcast %18 : vector<16x1xf32> to vector<16x128xf32>
    %20 = arith.mulf %15, %19 : vector<16x128xf32>
    %21 = vector.broadcast %1 : vector<1x128xf32> to vector<16x128xf32>
    %22 = arith.mulf %20, %21 : vector<16x128xf32>
    %23 = vector.broadcast %2 : vector<1x128xf32> to vector<16x128xf32>
    %24 = arith.addf %22, %23 : vector<16x128xf32>
    %c0_9 = arith.constant 0 : index
    %c0_10 = arith.constant 0 : index
    %25 = vector.load %arg4[%c0_9, %c0_10] : memref<16x128xf32, #tpu.memory_space<vmem>>, vector<16x128xf32>
    tpu.vector_store %arg4[%c0_9, %c0_10], %24 {strides = array<i32>} : memref<16x128xf32, #tpu.memory_space<vmem>>, vector<16x128xf32>,
    return
  }
  func.func @transform_0(%arg0: i32) -> (i32, i32) {
    %c0_i32 = arith.constant 0 : i32
    %c0_i32_0 = arith.constant 0 : i32
    return %arg0, %c0_i32 : i32, i32
  }
  func.func @transform_1(%arg0: i32) -> (i32, i32) {
    %c0_i32 = arith.constant 0 : i32
    %c0_i32_0 = arith.constant 0 : i32
    %c0_i32_1 = arith.constant 0 : i32
    return %c0_i32, %c0_i32_0 : i32, i32
  }
  func.func @transform_2(%arg0: i32) -> (i32, i32) {
    %c0_i32 = arith.constant 0 : i32
    %c0_i32_0 = arith.constant 0 : i32
    %c0_i32_1 = arith.constant 0 : i32
    return %c0_i32, %c0_i32_0 : i32, i32
  }
  func.func @transform_3(%arg0: i32) -> (i32, i32) {
    %c0_i32 = arith.constant 0 : i32
    %c0_i32_0 = arith.constant 0 : i32
    return %arg0, %c0_i32 : i32, i32
  }
}

</mosaic_0001>

<llo_original>
// kernel: gpt2_forward.7
$region0: #{gpt2_forward.7}
  #allocation0 [shape = 'u32[]', space=smem, size = 0x4, offset = 0x4, fixed_abs, tag = 'smem constant byte address 0x4 - core index']
  #allocation1 [shape = 'u32[144,128]{1,0:T(1,128)}', space=vmem, size = 0x12000, scoped, tag = 'internal scratch']
  %s0 = inlined_call_operand.vmem [shape: f32[2,8,128], index: 0, kind: input, shape index: {}]
  %s1 = inlined_call_operand.vmem [shape: bf16[128,128], index: 1, kind: input, shape index: {}]
  %s2 = inlined_call_operand.vmem [shape: f32[1,128], index: 2, kind: input, shape index: {}]
  %s3 = inlined_call_operand.vmem [shape: bf16[128,128], index: 3, kind: input, shape index: {}]
  %s4 = inlined_call_operand.vmem [shape: f32[1,128], index: 4, kind: input, shape index: {}]
  %s5 = inlined_call_operand.vmem [shape: s32[2,1,8], index: 5, kind: input, shape index: {}]
  %s6 = inlined_call_operand.vmem [shape: f32[1,128], index: 6, kind: input, shape index: {}]
  %s7 = inlined_call_operand.vmem [shape: f32[1,128], index: 7, kind: input, shape index: {}]
  %s8 = inlined_call_operand.vmem [shape: f32[2,8,128], index: 8, kind: output, shape index: {}]
  %s9 = sld [smem:[#allocation0]]
  $region65: #{gpt2_forward.7} parent=0
    _
  %s11 = ssub.s32 1, %s9
  %s12 = scalar_select 0, %s11, %s9
  loop: start=0, step=1, limit=4
  $region2: #{gpt2_forward.7} parent=0 // loop_pre_header
    _
  $region3: #{gpt2_forward.7} parent=0 // loop_header
    %s14 = sphi 0, %s18
    %p15 = scmp.ge.s32.totalorder %s14, 4
    %s24 = sphi 0, %s26
    %s27 = sphi 0, %s24
    %s28 = sphi 0, %s27
    %s44 = sphi 0, %s28
    %s48 = sphi 0, %s48
    %s50 = sphi 0, %s48
    %s51 = sphi 0, %s50
    %s65 = sphi 0, %s51
    %s69 = sphi 0, %s69
    %s71 = sphi 0, %s69
    %s72 = sphi 0, %s71
    %s86 = sphi 0, %s72
    %s90 = sphi 0, %s90
    %s92 = sphi 0, %s90
    %s93 = sphi 0, %s92
    %s107 = sphi 0, %s93
    %s111 = sphi 0, %s111
    %s113 = sphi 0, %s111
    %s114 = sphi 0, %s113
    %s128 = sphi 0, %s114
    %s134 = sphi 0, %s136
    %s137 = sphi 0, %s134
    %s138 = sphi 0, %s137
    %s154 = sphi 0, %s138
    %s158 = sphi 0, %s158
    %s160 = sphi 0, %s158
    %s161 = sphi 0, %s160
    %s175 = sphi 0, %s161
    %s179 = sphi 0, %s179
    %s181 = sphi 0, %s179
    %s182 = sphi 0, %s181
    %s196 = sphi 0, %s182
    %s202 = sphi 0, %s204
    %s205 = sphi 0, %s202
    %s206 = sphi 0, %s205
    %s222 = sphi 0, %s206
  $region4: #{gpt2_forward.7} parent=0 // loop_header_branch
    %17 = sbr.rel (%p15) target = $region8
  $region5: #{gpt2_forward.7} parent=0 // loop_body
    %s19 = ssub.s32 %s14, 1
    %s20 = ssub.s32 %s14, 2
    %s21 = sadd.s32 %s14, 1
    %s22 = ssub.s32 %s14, %s21
    %p23 = scmp.eq.s32.totalorder %s22, 0
    %s25 = sadd.s32 %s24, 1
    %s26 = scalar_select %p23, %s24, %s25
    %p29 = pneg %p23
    %p30 = scmp.eq.s32.totalorder %s14, 1
    %p31 = por %p29, %p30
    %p32 = scmp.ne.s32.totalorder %s24, %s27
    %p33 = scmp.eq.s32.totalorder %s14, 0
    %p34 = por %p32, %p33
    %p35 = scmp.ne.s32.totalorder %s24, %s27
    %p36 = scmp.eq.s32.totalorder %s19, 1
    %p37 = por %p35, %p36
    %p38 = scmp.ne.s32.totalorder %s27, %s28
    %p39 = scmp.eq.s32.totalorder %s19, 0
    %p40 = por %p38, %p39
    %p41 = scmp.ne.s32.totalorder %s27, %s28
    %p42 = scmp.eq.s32.totalorder %s20, 1
    %p43 = por %p41, %p42
    %p45 = scmp.ne.s32.totalorder %s28, %s44
    %p46 = scmp.eq.s32.totalorder %s20, 0
    %p47 = por %p45, %p46
    %s49 = sadd.s32 %s48, 1
    %p52 = scmp.eq.s32.totalorder %s14, 1
    %p53 = scmp.ne.s32.totalorder %s48, %s50
    %p54 = scmp.eq.s32.totalorder %s14, 0
    %p55 = por %p53, %p54
    %p56 = scmp.ne.s32.totalorder %s48, %s50
    %p57 = scmp.eq.s32.totalorder %s19, 1
    %p58 = por %p56, %p57
    %p59 = scmp.ne.s32.totalorder %s50, %s51
    %p60 = scmp.eq.s32.totalorder %s19, 0
    %p61 = por %p59, %p60
    %p62 = scmp.ne.s32.totalorder %s50, %s51
    %p63 = scmp.eq.s32.totalorder %s20, 1
    %p64 = por %p62, %p63
    %p66 = scmp.ne.s32.totalorder %s51, %s65
    %p67 = scmp.eq.s32.totalorder %s20, 0
    %p68 = por %p66, %p67
    %s70 = sadd.s32 %s69, 1
    %p73 = scmp.eq.s32.totalorder %s14, 1
    %p74 = scmp.ne.s32.totalorder %s69, %s71
    %p75 = scmp.eq.s32.totalorder %s14, 0
    %p76 = por %p74, %p75
    %p77 = scmp.ne.s32.totalorder %s69, %s71
    %p78 = scmp.eq.s32.totalorder %s19, 1
    %p79 = por %p77, %p78
    %p80 = scmp.ne.s32.totalorder %s71, %s72
    %p81 = scmp.eq.s32.totalorder %s19, 0
    %p82 = por %p80, %p81
    %p83 = scmp.ne.s32.totalorder %s71, %s72
    %p84 = scmp.eq.s32.totalorder %s20, 1
    %p85 = por %p83, %p84
    %p87 = scmp.ne.s32.totalorder %s72, %s86
    %p88 = scmp.eq.s32.totalorder %s20, 0
    %p89 = por %p87, %p88
    %s91 = sadd.s32 %s90, 1
    %p94 = scmp.eq.s32.totalorder %s14, 1
    %p95 = scmp.ne.s32.totalorder %s90, %s92
    %p96 = scmp.eq.s32.totalorder %s14, 0
    %p97 = por %p95, %p96
    %p98 = scmp.ne.s32.totalorder %s90, %s92
    %p99 = scmp.eq.s32.totalorder %s19, 1
    %p100 = por %p98, %p99
    %p101 = scmp.ne.s32.totalorder %s92, %s93
    %p102 = scmp.eq.s32.totalorder %s19, 0
    %p103 = por %p101, %p102
    %p104 = scmp.ne.s32.totalorder %s92, %s93
    %p105 = scmp.eq.s32.totalorder %s20, 1
    %p106 = por %p104, %p105
    %p108 = scmp.ne.s32.totalorder %s93, %s107
    %p109 = scmp.eq.s32.totalorder %s20, 0
    %p110 = por %p108, %p109
    %s112 = sadd.s32 %s111, 1
    %p115 = scmp.eq.s32.totalorder %s14, 1
    %p116 = scmp.ne.s32.totalorder %s111, %s113
    %p117 = scmp.eq.s32.totalorder %s14, 0
    %p118 = por %p116, %p117
    %p119 = scmp.ne.s32.totalorder %s111, %s113
    %p120 = scmp.eq.s32.totalorder %s19, 1
    %p121 = por %p119, %p120
    %p122 = scmp.ne.s32.totalorder %s113, %s114
    %p123 = scmp.eq.s32.totalorder %s19, 0
    %p124 = por %p122, %p123
    %p125 = scmp.ne.s32.totalorder %s113, %s114
    %p126 = scmp.eq.s32.totalorder %s20, 1
    %p127 = por %p125, %p126
    %p129 = scmp.ne.s32.totalorder %s114, %s128
    %p130 = scmp.eq.s32.totalorder %s20, 0
    %p131 = por %p129, %p130
    %s132 = ssub.s32 %s14, %s21
    %p133 = scmp.eq.s32.totalorder %s132, 0
    %s135 = sadd.s32 %s134, 1
    %s136 = scalar_select %p133, %s134, %s135
    %p139 = pneg %p133
    %p140 = scmp.eq.s32.totalorder %s14, 1
    %p141 = por %p139, %p140
    %p142 = scmp.ne.s32.totalorder %s134, %s137
    %p143 = scmp.eq.s32.totalorder %s14, 0
    %p144 = por %p142, %p143
    %p145 = scmp.ne.s32.totalorder %s134, %s137
    %p146 = scmp.eq.s32.totalorder %s19, 1
    %p147 = por %p145, %p146
    %p148 = scmp.ne.s32.totalorder %s137, %s138
    %p149 = scmp.eq.s32.totalorder %s19, 0
    %p150 = por %p148, %p149
    %p151 = scmp.ne.s32.totalorder %s137, %s138
    %p152 = scmp.eq.s32.totalorder %s20, 1
    %p153 = por %p151, %p152
    %p155 = scmp.ne.s32.totalorder %s138, %s154
    %p156 = scmp.eq.s32.totalorder %s20, 0
    %p157 = por %p155, %p156
    %s159 = sadd.s32 %s158, 1
    %p162 = scmp.eq.s32.totalorder %s14, 1
    %p163 = scmp.ne.s32.totalorder %s158, %s160
    %p164 = scmp.eq.s32.totalorder %s14, 0
    %p165 = por %p163, %p164
    %p166 = scmp.ne.s32.totalorder %s158, %s160
    %p167 = scmp.eq.s32.totalorder %s19, 1
    %p168 = por %p166, %p167
    %p169 = scmp.ne.s32.totalorder %s160, %s161
    %p170 = scmp.eq.s32.totalorder %s19, 0
    %p171 = por %p169, %p170
    %p172 = scmp.ne.s32.totalorder %s160, %s161
    %p173 = scmp.eq.s32.totalorder %s20, 1
    %p174 = por %p172, %p173
    %p176 = scmp.ne.s32.totalorder %s161, %s175
    %p177 = scmp.eq.s32.totalorder %s20, 0
    %p178 = por %p176, %p177
    %s180 = sadd.s32 %s179, 1
    %p183 = scmp.eq.s32.totalorder %s14, 1
    %p184 = scmp.ne.s32.totalorder %s179, %s181
    %p185 = scmp.eq.s32.totalorder %s14, 0
    %p186 = por %p184, %p185
    %p187 = scmp.ne.s32.totalorder %s179, %s181
    %p188 = scmp.eq.s32.totalorder %s19, 1
    %p189 = por %p187, %p188
    %p190 = scmp.ne.s32.totalorder %s181, %s182
    %p191 = scmp.eq.s32.totalorder %s19, 0
    %p192 = por %p190, %p191
    %p193 = scmp.ne.s32.totalorder %s181, %s182
    %p194 = scmp.eq.s32.totalorder %s20, 1
    %p195 = por %p193, %p194
    %p197 = scmp.ne.s32.totalorder %s182, %s196
    %p198 = scmp.eq.s32.totalorder %s20, 0
    %p199 = por %p197, %p198
    %s200 = ssub.s32 %s14, %s21
    %p201 = scmp.eq.s32.totalorder %s200, 0
    %s203 = sadd.s32 %s202, 1
    %s204 = scalar_select %p201, %s202, %s203
    %p207 = pneg %p201
    %p208 = scmp.eq.s32.totalorder %s14, 1
    %p209 = por %p207, %p208
    %p210 = scmp.ne.s32.totalorder %s202, %s205
    %p211 = scmp.eq.s32.totalorder %s14, 0
    %p212 = por %p210, %p211
    %p213 = scmp.ne.s32.totalorder %s202, %s205
    %p214 = scmp.eq.s32.totalorder %s19, 1
    %p215 = por %p213, %p214
    %p216 = scmp.ne.s32.totalorder %s205, %s206
    %p217 = scmp.eq.s32.totalorder %s19, 0
    %p218 = por %p216, %p217
    %p219 = scmp.ne.s32.totalorder %s205, %s206
    %p220 = scmp.eq.s32.totalorder %s20, 1
    %p221 = por %p219, %p220
    %p223 = scmp.ne.s32.totalorder %s206, %s222
    %p224 = scmp.eq.s32.totalorder %s20, 0
    %p225 = por %p223, %p224
    %p226 = scmp.le.s32.totalorder 1, %s14
    %p227 = scmp.lt.s32.totalorder %s14, 3
    %p228 = pnand %p226, %p227
    %p229 = pneg %p228
    // Predicated region
    $region9: #{gpt2_forward.7} parent=5 // pred_check
      _
    $region10: #{gpt2_forward.7} parent=5 // pred_check_branch
      %231 = sbr.rel (%p228) target = $region12
    $region11: #{gpt2_forward.7} parent=5 // pred_region
      %s232 = ssub.s32 %s14, 1
      // Predicated region
      $region13: #{gpt2_forward.7} parent=11 // pred_check
        %p233 = pneg %p61
      $region14: #{gpt2_forward.7} parent=11 // pred_check_branch
        %235 = sbr.rel (%p233) target = $region16
      $region15: #{gpt2_forward.7} parent=11 // pred_region
        _
      $region16: #{gpt2_forward.7} parent=11 // pred_fallthru
        _
      // Predicated region
      $region17: #{gpt2_forward.7} parent=11 // pred_check
        %p236 = pneg %p82
      $region18: #{gpt2_forward.7} parent=11 // pred_check_branch
        %238 = sbr.rel (%p236) target = $region20
      $region19: #{gpt2_forward.7} parent=11 // pred_region
        _
      $region20: #{gpt2_forward.7} parent=11 // pred_fallthru
        _
      // Predicated region
      $region21: #{gpt2_forward.7} parent=11 // pred_check
        %p239 = pneg %p103
      $region22: #{gpt2_forward.7} parent=11 // pred_check_branch
        %241 = sbr.rel (%p239) target = $region24
      $region23: #{gpt2_forward.7} parent=11 // pred_region
        _
      $region24: #{gpt2_forward.7} parent=11 // pred_fallthru
        _
      // Predicated region
      $region25: #{gpt2_forward.7} parent=11 // pred_check
        %p242 = pneg %p124
      $region26: #{gpt2_forward.7} parent=11 // pred_check_branch
        %244 = sbr.rel (%p242) target = $region28
      $region27: #{gpt2_forward.7} parent=11 // pred_region
        _
      $region28: #{gpt2_forward.7} parent=11 // pred_fallthru
        _
      // Predicated region
      $region29: #{gpt2_forward.7} parent=11 // pred_check
        %p245 = pneg %p171
      $region30: #{gpt2_forward.7} parent=11 // pred_check_branch
        %247 = sbr.rel (%p245) target = $region32
      $region31: #{gpt2_forward.7} parent=11 // pred_region
        _
      $region32: #{gpt2_forward.7} parent=11 // pred_fallthru
        _
      // Predicated region
      $region33: #{gpt2_forward.7} parent=11 // pred_check
        %p248 = pneg %p192
      $region34: #{gpt2_forward.7} parent=11 // pred_check_branch
        %250 = sbr.rel (%p248) target = $region36
      $region35: #{gpt2_forward.7} parent=11 // pred_region
        _
      $region36: #{gpt2_forward.7} parent=11 // pred_fallthru
        _
    $region12: #{gpt2_forward.7} parent=5 // pred_fallthru
      _
    %p251 = scmp.lt.s32.totalorder %s14, 2
    // Predicated region
    $region37: #{gpt2_forward.7} parent=5 // pred_check
      %p252 = pneg %p251
    $region38: #{gpt2_forward.7} parent=5 // pred_check_branch
      %254 = sbr.rel (%p252) target = $region40
    $region39: #{gpt2_forward.7} parent=5 // pred_region
      // Predicated region
      $region41: #{gpt2_forward.7} parent=39 // pred_check
        %p255 = pneg %p34
      $region42: #{gpt2_forward.7} parent=39 // pred_check_branch
        %257 = sbr.rel (%p255) target = $region44
      $region43: #{gpt2_forward.7} parent=39 // pred_region
        %p258 = scmp.lt.s32.totalorder %s14, 1
        %s259 = scalar_select %p258, %s14, 1
        %s260 = smul.addr %s259, 8
        %s261 = scalar_lea.vmem %s0, %s260
      $region44: #{gpt2_forward.7} parent=39 // pred_fallthru
        _
      // Predicated region
      $region45: #{gpt2_forward.7} parent=39 // pred_check
        %p262 = pneg %p144
      $region46: #{gpt2_forward.7} parent=39 // pred_check_branch
        %264 = sbr.rel (%p262) target = $region48
      $region47: #{gpt2_forward.7} parent=39 // pred_region
        %p265 = scmp.lt.s32.totalorder %s14, 1
        %s266 = scalar_select %p265, %s14, 1
        %s267 = scalar_lea.vmem %s5, %s266
      $region48: #{gpt2_forward.7} parent=39 // pred_fallthru
        _
    $region40: #{gpt2_forward.7} parent=5 // pred_fallthru
      _
    %p268 = scmp.le.s32.totalorder 1, %s14
    %p269 = scmp.lt.s32.totalorder %s14, 3
    %p270 = pnand %p268, %p269
    %p271 = pneg %p270
    // Predicated region
    $region49: #{gpt2_forward.7} parent=5 // pred_check
      _
    $region50: #{gpt2_forward.7} parent=5 // pred_check_branch
      %273 = sbr.rel (%p270) target = $region52
    $region51: #{gpt2_forward.7} parent=5 // pred_region
      %s274 = ssub.s32 %s14, 1
      %p275 = scmp.lt.s32.totalorder %s19, 1
      %s276 = scalar_select %p275, %s19, 1
      %s277 = smul.addr %s276, 8
      %s278 = scalar_lea.vmem %s0, %s277
      %p279 = pneg %p40
      %p280 = pneg %p37
      %p281 = pneg %p61
      %p282 = pneg %p58
      %p283 = pneg %p82
      %p284 = pneg %p79
      %p285 = pneg %p103
      %p286 = pneg %p100
      %p287 = pneg %p124
      %p288 = pneg %p121
      %p289 = scmp.lt.s32.totalorder %s19, 1
      %s290 = scalar_select %p289, %s19, 1
      %s291 = scalar_lea.vmem %s5, %s290
      %p292 = pneg %p150
      %p293 = pneg %p147
      %p294 = pneg %p171
      %p295 = pneg %p168
      %p296 = pneg %p192
      %p297 = pneg %p189
      %p298 = pneg %p218
      %p299 = pneg %p215
      %p300 = scmp.lt.s32.totalorder %s19, 1
      %s301 = scalar_select %p300, %s19, 1
      %s302 = smul.addr %s301, 8
      %s303 = scalar_lea.vmem %s8, %s302
      %p304 = scmp.lt.s32.totalorder %s19, 1
      %s305 = scalar_select %p304, %s19, 1
      %s306 = smul.addr %s305, 8
      %s307 = scalar_lea.vmem %s0, %s306
      %p308 = scmp.lt.s32.totalorder %s19, 1
      %s309 = scalar_select %p308, %s19, 1
      %s310 = scalar_lea.vmem %s5, %s309
      %p311 = scmp.lt.s32.totalorder %s19, 1
      %s312 = scalar_select %p311, %s19, 1
      %s313 = smul.addr %s312, 8
      %s314 = scalar_lea.vmem %s8, %s313
      %v316 = vld [vmem:[%s307] sm:$0xff]
      %v317 = vpack.c.bf16 %v316, %v316
      %v318 = vld [vmem:[%s1] sm:$0xf]
      %v319 = vld [vmem:[%s1 + $0x4] sm:$0xf]
      %v320 = vld [vmem:[%s1 + $0x8] sm:$0xf]
      %v321 = vld [vmem:[%s1 + $0xc] sm:$0xf]
      %v322 = vld [vmem:[%s1 + $0x10] sm:$0xf]
      %v323 = vld [vmem:[%s1 + $0x14] sm:$0xf]
      %v324 = vld [vmem:[%s1 + $0x18] sm:$0xf]
      %v325 = vld [vmem:[%s1 + $0x1c] sm:$0xf]
      %v326 = vld [vmem:[%s1 + $0x20] sm:$0xf]
      %v327 = vld [vmem:[%s1 + $0x24] sm:$0xf]
      %v328 = vld [vmem:[%s1 + $0x28] sm:$0xf]
      %v329 = vld [vmem:[%s1 + $0x2c] sm:$0xf]
      %v330 = vld [vmem:[%s1 + $0x30] sm:$0xf]
      %v331 = vld [vmem:[%s1 + $0x34] sm:$0xf]
      %v332 = vld [vmem:[%s1 + $0x38] sm:$0xf]
      %v333 = vld [vmem:[%s1 + $0x3c] sm:$0xf]
      %v334 = vld [vmem:[%s2] sm:$0x1]
      %v336 = vlaneseq
      %v337 = vshrl.u32 %v336, 7
      %v338 = vsub.s32 0, %v337
      %v339 = vrot.slane %v334, %v338
      %v357 = vunpack.c.l.b16 %v318
      %v358 = vunpack.c.l.b16 %v319
      %v359 = vunpack.c.l.b16 %v320
      %v360 = vunpack.c.l.b16 %v321
      %v361 = vunpack.c.l.b16 %v322
      %v362 = vunpack.c.l.b16 %v323
      %v363 = vunpack.c.l.b16 %v324
      %v364 = vunpack.c.l.b16 %v325
      %v365 = vunpack.c.l.b16 %v326
      %v366 = vunpack.c.l.b16 %v327
      %v367 = vunpack.c.l.b16 %v328
      %v368 = vunpack.c.l.b16 %v329
      %v369 = vunpack.c.l.b16 %v330
      %v370 = vunpack.c.l.b16 %v331
      %v371 = vunpack.c.l.b16 %v332
      %v372 = vunpack.c.l.b16 %v333
      %v373 = vpack.c.b16 %v358, %v357
      %v374 = vpack.c.b16 %v360, %v359
      %v375 = vpack.c.b16 %v362, %v361
      %v376 = vpack.c.b16 %v364, %v363
      %v377 = vpack.c.b16 %v366, %v365
      %v378 = vpack.c.b16 %v368, %v367
      %v379 = vpack.c.b16 %v370, %v369
      %v380 = vpack.c.b16 %v372, %v371
      %389 = vmatprep.subr.bf16.mxu0 0
      %390 = vmatpush1.bf16.msra.mxu0 %v373
      %391 = vmatprep.subr.bf16.mxu0 0
      %392 = vmatpush1.bf16.msra.mxu0 %v374
      %393 = vmatprep.subr.bf16.mxu0 0
      %394 = vmatpush1.bf16.msra.mxu0 %v375
      %395 = vmatprep.subr.bf16.mxu0 0
      %396 = vmatpush1.bf16.msra.mxu0 %v376
      %397 = vmatprep.subr.bf16.mxu0 0
      %398 = vmatpush1.bf16.msra.mxu0 %v377
      %399 = vmatprep.subr.bf16.mxu0 0
      %400 = vmatpush1.bf16.msra.mxu0 %v378
      %401 = vmatprep.subr.bf16.mxu0 0
      %402 = vmatpush1.bf16.msra.mxu0 %v379
      %403 = vmatprep.subr.bf16.mxu0 0
      %404 = vmatpush1.bf16.msra.mxu0 %v380
      %405 = vmatprep.subr.bf16.mxu0 0
      %406 = vmatpush1.bf16.msra.mxu0 0
      %407 = vmatprep.subr.bf16.mxu0 0
      %408 = vmatpush1.bf16.msra.mxu0 0
      %409 = vmatprep.subr.bf16.mxu0 0
      %410 = vmatpush1.bf16.msra.mxu0 0
      %411 = vmatprep.subr.bf16.mxu0 0
      %412 = vmatpush1.bf16.msra.mxu0 0
      %413 = vmatprep.subr.bf16.mxu0 0
      %414 = vmatpush1.bf16.msra.mxu0 0
      %415 = vmatprep.subr.bf16.mxu0 0
      %416 = vmatpush1.bf16.msra.mxu0 0
      %417 = vmatprep.subr.bf16.mxu0 0
      %418 = vmatpush1.bf16.msra.mxu0 0
      %419 = vmatprep.subr.bf16.mxu0 0
      %420 = vmatpush1.bf16.msra.mxu0 0
      %421 = vmatprep.mubr.bf16.mxu0 0
      %422 = vmatmul.mubr.bf16.gmra.mrb[0].mxu0 %v317
      %v423 = vpop.f32.mrb[0].mxu0
      %v424 = vadd.f32 %v339, %v423
      %v425 = vpop.f32.mrb[0].mxu0
      %v426 = vpop.f32.mrb[0].mxu0
      %v427 = vpop.f32.mrb[0].mxu0
      %428 = vdwg.mxu0
      %v429 = vld [vmem:[%s3] sm:$0xf]
      %v430 = vld [vmem:[%s3 + $0x4] sm:$0xf]
      %v431 = vld [vmem:[%s3 + $0x8] sm:$0xf]
      %v432 = vld [vmem:[%s3 + $0xc] sm:$0xf]
      %v433 = vld [vmem:[%s3 + $0x10] sm:$0xf]
      %v434 = vld [vmem:[%s3 + $0x14] sm:$0xf]
      %v435 = vld [vmem:[%s3 + $0x18] sm:$0xf]
      %v436 = vld [vmem:[%s3 + $0x1c] sm:$0xf]
      %v437 = vld [vmem:[%s3 + $0x20] sm:$0xf]
      %v438 = vld [vmem:[%s3 + $0x24] sm:$0xf]
      %v439 = vld [vmem:[%s3 + $0x28] sm:$0xf]
      %v440 = vld [vmem:[%s3 + $0x2c] sm:$0xf]
      %v441 = vld [vmem:[%s3 + $0x30] sm:$0xf]
      %v442 = vld [vmem:[%s3 + $0x34] sm:$0xf]
      %v443 = vld [vmem:[%s3 + $0x38] sm:$0xf]
      %v444 = vld [vmem:[%s3 + $0x3c] sm:$0xf]
      %v445 = vld [vmem:[%s4] sm:$0x1]
      %v447 = vlaneseq
      %v448 = vshrl.u32 %v447, 7
      %v449 = vsub.s32 0, %v448
      %v450 = vrot.slane %v445, %v449
      %v468 = vunpack.c.l.b16 %v429
      %v469 = vunpack.c.l.b16 %v430
      %v470 = vunpack.c.l.b16 %v431
      %v471 = vunpack.c.l.b16 %v432
      %v472 = vunpack.c.l.b16 %v433
      %v473 = vunpack.c.l.b16 %v434
      %v474 = vunpack.c.l.b16 %v435
      %v475 = vunpack.c.l.b16 %v436
      %v476 = vunpack.c.l.b16 %v437
      %v477 = vunpack.c.l.b16 %v438
      %v478 = vunpack.c.l.b16 %v439
      %v479 = vunpack.c.l.b16 %v440
      %v480 = vunpack.c.l.b16 %v441
      %v481 = vunpack.c.l.b16 %v442
      %v482 = vunpack.c.l.b16 %v443
      %v483 = vunpack.c.l.b16 %v444
      %v484 = vpack.c.b16 %v469, %v468
      %v485 = vpack.c.b16 %v471, %v470
      %v486 = vpack.c.b16 %v473, %v472
      %v487 = vpack.c.b16 %v475, %v474
      %v488 = vpack.c.b16 %v477, %v476
      %v489 = vpack.c.b16 %v479, %v478
      %v490 = vpack.c.b16 %v481, %v480
      %v491 = vpack.c.b16 %v483, %v482
      %500 = vmatprep.subr.bf16.mxu0 0
      %501 = vmatpush1.bf16.msra.mxu0 %v484
      %502 = vmatprep.subr.bf16.mxu0 0
      %503 = vmatpush1.bf16.msra.mxu0 %v485
      %504 = vmatprep.subr.bf16.mxu0 0
      %505 = vmatpush1.bf16.msra.mxu0 %v486
      %506 = vmatprep.subr.bf16.mxu0 0
      %507 = vmatpush1.bf16.msra.mxu0 %v487
      %508 = vmatprep.subr.bf16.mxu0 0
      %509 = vmatpush1.bf16.msra.mxu0 %v488
      %510 = vmatprep.subr.bf16.mxu0 0
      %511 = vmatpush1.bf16.msra.mxu0 %v489
      %512 = vmatprep.subr.bf16.mxu0 0
      %513 = vmatpush1.bf16.msra.mxu0 %v490
      %514 = vmatprep.subr.bf16.mxu0 0
      %515 = vmatpush1.bf16.msra.mxu0 %v491
      %516 = vmatprep.subr.bf16.mxu0 0
      %517 = vmatpush1.bf16.msra.mxu0 0
      %518 = vmatprep.subr.bf16.mxu0 0
      %519 = vmatpush1.bf16.msra.mxu0 0
      %520 = vmatprep.subr.bf16.mxu0 0
      %521 = vmatpush1.bf16.msra.mxu0 0
      %522 = vmatprep.subr.bf16.mxu0 0
      %523 = vmatpush1.bf16.msra.mxu0 0
      %524 = vmatprep.subr.bf16.mxu0 0
      %525 = vmatpush1.bf16.msra.mxu0 0
      %526 = vmatprep.subr.bf16.mxu0 0
      %527 = vmatpush1.bf16.msra.mxu0 0
      %528 = vmatprep.subr.bf16.mxu0 0
      %529 = vmatpush1.bf16.msra.mxu0 0
      %530 = vmatprep.subr.bf16.mxu0 0
      %531 = vmatpush1.bf16.msra.mxu0 0
      %532 = vmatprep.mubr.bf16.mxu0 0
      %533 = vmatmul.mubr.bf16.gmra.mrb[0].mxu0 %v317
      %v534 = vpop.f32.mrb[0].mxu0
      %v535 = vadd.f32 %v450, %v534
      %v536 = vpop.f32.mrb[0].mxu0
      %v537 = vpop.f32.mrb[0].mxu0
      %v538 = vpop.f32.mrb[0].mxu0
      %539 = vdwg.mxu0
      %v540 = vpack.c.bf16 %v535, %v535
      %v541 = vpack.c.bf16 %v424, %v424
      %542 = vmatprep.subr.bf16.mxu0 0
      %543 = vmatpush1.bf16.xpose.msra.mxu0 %v541
      %544 = vmatprep.subr.bf16.mxu0 0
      %545 = vmatpush1.bf16.xpose.msra.mxu0 0
      %546 = vmatprep.subr.bf16.mxu0 0
      %547 = vmatpush1.bf16.xpose.msra.mxu0 0
      %548 = vmatprep.subr.bf16.mxu0 0
      %549 = vmatpush1.bf16.xpose.msra.mxu0 0
      %550 = vmatprep.subr.bf16.mxu0 0
      %551 = vmatpush1.bf16.xpose.msra.mxu0 0
      %552 = vmatprep.subr.bf16.mxu0 0
      %553 = vmatpush1.bf16.xpose.msra.mxu0 0
      %554 = vmatprep.subr.bf16.mxu0 0
      %555 = vmatpush1.bf16.xpose.msra.mxu0 0
      %556 = vmatprep.subr.bf16.mxu0 0
      %557 = vmatpush1.bf16.xpose.msra.mxu0 0
      %558 = vmatprep.subr.bf16.mxu0 0
      %559 = vmatpush1.bf16.xpose.msra.mxu0 0
      %560 = vmatprep.subr.bf16.mxu0 0
      %561 = vmatpush1.bf16.xpose.msra.mxu0 0
      %562 = vmatprep.subr.bf16.mxu0 0
      %563 = vmatpush1.bf16.xpose.msra.mxu0 0
      %564 = vmatprep.subr.bf16.mxu0 0
      %565 = vmatpush1.bf16.xpose.msra.mxu0 0
      %566 = vmatprep.subr.bf16.mxu0 0
      %567 = vmatpush1.bf16.xpose.msra.mxu0 0
      %568 = vmatprep.subr.bf16.mxu0 0
      %569 = vmatpush1.bf16.xpose.msra.mxu0 0
      %570 = vmatprep.subr.bf16.mxu0 0
      %571 = vmatpush1.bf16.xpose.msra.mxu0 0
      %572 = vmatprep.subr.bf16.mxu0 0
      %573 = vmatpush1.bf16.xpose.msra.mxu0 0
      %574 = vmatprep.mubr.bf16.mxu0 0
      %575 = vmatmul.mubr.bf16.gmra.mrb[0].mxu0 %v540
      %v576 = vpop.f32.mrb[0].mxu0
      %v577 = vadd.f32 0.0, %v576
      %v578 = vpop.f32.mrb[0].mxu0
      %v579 = vpop.f32.mrb[0].mxu0
      %v580 = vpop.f32.mrb[0].mxu0
      %581 = vdwg.mxu0
      %v582 = vld [vmem:[%s310] sm:$0x1]
      %vm583 = vcmp.eq.s32.totalorder %v582, 0
      %v584 = vsel %vm583, 1, 0
      %v585 = vlaneseq
      %v586 = vshrl.u32 %v585, 7
      %v587 = vsub.s32 0, %v586
      %v588 = vrot.slane %v584, %v587
      %vm589 = vcmp.eq.s32.totalorder %v588, 1
      %v590 = vsel %vm589, -1e+09, %v577
      %vm591 = vcmask 64512
      %v592 = vsel %vm591, %v590, -inf
      %593 = vmax.xlane.f32.xlu0 %v592
      %v594 = vpop.xlane.xlu0 %593
      %v595 = vsub.f32 %v590, %v594
      %v596 = vmul.f32 %v595, 1.442695
      %v597 = vpow.pop %v596
      %v598 = vsel %vm591, %v597, 0.0
      %599 = vadd.xlane.f32.xlu0 %v598
      %v600 = vpop.xlane.xlu0 %599
      %v601 = vrcp.pop %v600
      %v602 = vmul.f32 %v597, %v601
      %v603 = vpack.c.bf16 %v602, %v602
      %604 = vxpose.xlu0.c.b16.start [1/8] %v603, 128
      %605 = vxpose.xlu0.c.b16.cont [2/8] 0, 128
      %606 = vxpose.xlu0.c.b16.cont [3/8] 0, 128
      %607 = vxpose.xlu0.c.b16.cont [4/8] 0, 128
      %608 = vxpose.xlu0.c.b16.cont [5/8] 0, 128
      %609 = vxpose.xlu0.c.b16.cont [6/8] 0, 128
      %610 = vxpose.xlu0.c.b16.cont [7/8] 0, 128
      %611 = vxpose.xlu0.c.b16.end [8/8] 0, 128
      %v612 = vpop.trf.xlu0
      %v613 = vpop.trf.xlu0
      %v614 = vpop.trf.xlu0
      %v615 = vpop.trf.xlu0
      %v616 = vpop.trf.xlu0
      %v617 = vpop.trf.xlu0
      %v618 = vpop.trf.xlu0
      %v619 = vpop.trf.xlu0
      %v621 = vsel %vm591, %v612, 0
      %vm623 = vcmask 1043456
      %v625 = vsel %vm623, %v540, 0
      %627 = vmatprep.subr.bf16.mxu0 0
      %628 = vmatpush1.bf16.msra.mxu0 %v625
      %629 = vmatprep.subr.bf16.mxu0 0
      %630 = vmatpush1.bf16.msra.mxu0 0
      %631 = vmatprep.subr.bf16.mxu0 0
      %632 = vmatpush1.bf16.msra.mxu0 0
      %633 = vmatprep.subr.bf16.mxu0 0
      %634 = vmatpush1.bf16.msra.mxu0 0
      %635 = vmatprep.subr.bf16.mxu0 0
      %636 = vmatpush1.bf16.msra.mxu0 0
      %637 = vmatprep.subr.bf16.mxu0 0
      %638 = vmatpush1.bf16.msra.mxu0 0
      %639 = vmatprep.subr.bf16.mxu0 0
      %640 = vmatpush1.bf16.msra.mxu0 0
      %641 = vmatprep.subr.bf16.mxu0 0
      %642 = vmatpush1.bf16.msra.mxu0 0
      %643 = vmatprep.subr.bf16.mxu0 0
      %644 = vmatpush1.bf16.msra.mxu0 0
      %645 = vmatprep.subr.bf16.mxu0 0
      %646 = vmatpush1.bf16.msra.mxu0 0
      %647 = vmatprep.subr.bf16.mxu0 0
      %648 = vmatpush1.bf16.msra.mxu0 0
      %649 = vmatprep.subr.bf16.mxu0 0
      %650 = vmatpush1.bf16.msra.mxu0 0
      %651 = vmatprep.subr.bf16.mxu0 0
      %652 = vmatpush1.bf16.msra.mxu0 0
      %653 = vmatprep.subr.bf16.mxu0 0
      %654 = vmatpush1.bf16.msra.mxu0 0
      %655 = vmatprep.subr.bf16.mxu0 0
      %656 = vmatpush1.bf16.msra.mxu0 0
      %657 = vmatprep.subr.bf16.mxu0 0
      %658 = vmatpush1.bf16.msra.mxu0 0
      %659 = vmatprep.mubr.bf16.mxu0 0
      %660 = vmatmul.mubr.bf16.gmra.mrb[0].mxu0 %v621
      %v661 = vpop.f32.mrb[0].mxu0
      %v662 = vadd.f32 0.0, %v661
      %v663 = vpop.f32.mrb[0].mxu0
      %v664 = vpop.f32.mrb[0].mxu0
      %v665 = vpop.f32.mrb[0].mxu0
      %666 = vdwg.mxu0
      %v667 = vadd.f32 %v316, %v662
      %v668 = vld [vmem:[%s6] sm:$0x1]
      %v669 = vld [vmem:[%s7] sm:$0x1]
      %670 = vadd.xlane.f32.xlu0 %v667
      %v671 = vpop.xlane.xlu0 %670
      %v672 = vrcp.pop 128.0
      %v673 = vmul.f32 %v671, %v672
      %v674 = vsub.f32 %v667, %v673
      %v675 = vmul.f32 %v674, %v674
      %676 = vadd.xlane.f32.xlu0 %v675
      %v677 = vpop.xlane.xlu0 %676
      %v678 = vmul.f32 %v677, %v672
      %v679 = vadd.f32 %v678, 1e-05
      %v680 = vrsqrt.pop %v679
      %v681 = vmul.f32 %v674, %v680
      %v683 = vlaneseq
      %v684 = vshrl.u32 %v683, 7
      %v685 = vsub.s32 0, %v684
      %v686 = vrot.slane %v668, %v685
      %v688 = vmul.f32 %v681, %v686
      %v690 = vlaneseq
      %v691 = vshrl.u32 %v690, 7
      %v692 = vsub.s32 0, %v691
      %v693 = vrot.slane %v669, %v692
      %v695 = vadd.f32 %v688, %v693
      %696 = vst [vmem:[%s314] sm:$0xff] %v695
      %p697 = scmp.lt.s32.totalorder %s19, 1
      %s698 = scalar_select %p697, %s19, 1
      %s699 = smul.addr %s698, 8
      %s700 = scalar_lea.vmem %s8, %s699
      // Predicated region
      $region53: #{gpt2_forward.7} parent=51 // pred_check
        %p701 = pneg %p215
      $region54: #{gpt2_forward.7} parent=51 // pred_check_branch
        %703 = sbr.rel (%p701) target = $region56
      $region55: #{gpt2_forward.7} parent=51 // pred_region
        _
      $region56: #{gpt2_forward.7} parent=51 // pred_fallthru
        _
    $region52: #{gpt2_forward.7} parent=5 // pred_fallthru
      _
    %p704 = scmp.le.s32.totalorder 2, %s14
    // Predicated region
    $region57: #{gpt2_forward.7} parent=5 // pred_check
      %p705 = pneg %p704
    $region58: #{gpt2_forward.7} parent=5 // pred_check_branch
      %707 = sbr.rel (%p705) target = $region60
    $region59: #{gpt2_forward.7} parent=5 // pred_region
      %s708 = ssub.s32 %s14, 2
      // Predicated region
      $region61: #{gpt2_forward.7} parent=59 // pred_check
        %p709 = pneg %p221
      $region62: #{gpt2_forward.7} parent=59 // pred_check_branch
        %711 = sbr.rel (%p709) target = $region64
      $region63: #{gpt2_forward.7} parent=59 // pred_region
        %p712 = scmp.lt.s32.totalorder %s20, 1
        %s713 = scalar_select %p712, %s20, 1
        %s714 = smul.addr %s713, 8
        %s715 = scalar_lea.vmem %s8, %s714
      $region64: #{gpt2_forward.7} parent=59 // pred_fallthru
        _
    $region60: #{gpt2_forward.7} parent=5 // pred_fallthru
      _
  $region6: #{gpt2_forward.7} parent=0 // loop_footer
    %s18 = sadd.s32 1, %s14
  $region7: #{gpt2_forward.7} parent=0 // loop_footer_branch
    %13 = sbr.rel target = $region3
  $region8: #{gpt2_forward.7} parent=0 // loop_exit
    _

// kernel: gpt2_forward.5
$region0: #{gpt2_forward.5}
  #allocation0 [shape = 'u32[]', space=smem, size = 0x4, offset = 0x4, fixed_abs, tag = 'smem constant byte address 0x4 - core index']
  #allocation1 [shape = 'u32[144,128]{1,0:T(1,128)}', space=vmem, size = 0x12000, scoped, tag = 'internal scratch']
  %s0 = inlined_call_operand.vmem [shape: f32[2,8,128], index: 0, kind: input, shape index: {}]
  %s1 = inlined_call_operand.hbm [shape: bf16[128,128], index: 1, kind: input, shape index: {}]
  %s2 = inlined_call_operand.vmem [shape: f32[1,128], index: 2, kind: input, shape index: {}]
  %s3 = inlined_call_operand.hbm [shape: bf16[128,128], index: 3, kind: input, shape index: {}]
  %s4 = inlined_call_operand.vmem [shape: f32[1,128], index: 4, kind: input, shape index: {}]
  %s5 = inlined_call_operand.vmem [shape: s32[2,1,8], index: 5, kind: input, shape index: {}]
  %s6 = inlined_call_operand.vmem [shape: f32[1,128], index: 6, kind: input, shape index: {}]
  %s7 = inlined_call_operand.vmem [shape: f32[1,128], index: 7, kind: input, shape index: {}]
  %s8 = inlined_call_operand.vmem [shape: f32[2,8,128], index: 8, kind: output, shape index: {}]
  %s9 = sld [smem:[#allocation0]]
  $region73: #{gpt2_forward.5} parent=0
    _
  %s11 = ssub.s32 1, %s9
  %s12 = scalar_select 0, %s11, %s9
  $region1: #{gpt2_forward.5} parent=0
    #allocation2 [shape = 'u8[32768]{0}', space=vmem, size = 0x8000, scoped, tag = 'input window, operand 1, single buffered']
    #allocation3 [shape = 's32[2]{0}', space=sflag, size = 0x8, scoped, tag = 'scoped memory for gpt2_forward.5']
    #allocation4 [shape = 'u8[32768]{0}', space=vmem, size = 0x8000, scoped, tag = 'input window, operand 3, single buffered']
    #allocation5 [shape = 's32[1]{0}', space=sflag, size = 0x4, scoped, tag = 'scoped memory for gpt2_forward.5']
    %13 = vsyncpa [#allocation3], 0
    %14 = vsyncpa [#allocation5], 0
    loop: start=0, step=1, limit=4
    $region2: #{gpt2_forward.5} parent=1 // loop_pre_header
      _
    $region3: #{gpt2_forward.5} parent=1 // loop_header
      %s16 = sphi 0, %s20
      %p17 = scmp.ge.s32.totalorder %s16, 4
      %s26 = sphi 0, %s28
      %s29 = sphi 0, %s26
      %s30 = sphi 0, %s29
      %s46 = sphi 0, %s30
      %s50 = sphi 0, %s50
      %s52 = sphi 0, %s50
      %s53 = sphi 0, %s52
      %s67 = sphi 0, %s53
      %s71 = sphi 0, %s71
      %s73 = sphi 0, %s71
      %s74 = sphi 0, %s73
      %s88 = sphi 0, %s74
      %s92 = sphi 0, %s92
      %s94 = sphi 0, %s92
      %s95 = sphi 0, %s94
      %s109 = sphi 0, %s95
      %s113 = sphi 0, %s113
      %s115 = sphi 0, %s113
      %s116 = sphi 0, %s115
      %s130 = sphi 0, %s116
      %s136 = sphi 0, %s138
      %s139 = sphi 0, %s136
      %s140 = sphi 0, %s139
      %s156 = sphi 0, %s140
      %s160 = sphi 0, %s160
      %s162 = sphi 0, %s160
      %s163 = sphi 0, %s162
      %s177 = sphi 0, %s163
      %s181 = sphi 0, %s181
      %s183 = sphi 0, %s181
      %s184 = sphi 0, %s183
      %s198 = sphi 0, %s184
      %s204 = sphi 0, %s206
      %s207 = sphi 0, %s204
      %s208 = sphi 0, %s207
      %s224 = sphi 0, %s208
    $region4: #{gpt2_forward.5} parent=1 // loop_header_branch
      %19 = sbr.rel (%p17) target = $region8
    $region5: #{gpt2_forward.5} parent=1 // loop_body
      %s21 = ssub.s32 %s16, 1
      %s22 = ssub.s32 %s16, 2
      %s23 = sadd.s32 %s16, 1
      %s24 = ssub.s32 %s16, %s23
      %p25 = scmp.eq.s32.totalorder %s24, 0
      %s27 = sadd.s32 %s26, 1
      %s28 = scalar_select %p25, %s26, %s27
      %p31 = pneg %p25
      %p32 = scmp.eq.s32.totalorder %s16, 1
      %p33 = por %p31, %p32
      %p34 = scmp.ne.s32.totalorder %s26, %s29
      %p35 = scmp.eq.s32.totalorder %s16, 0
      %p36 = por %p34, %p35
      %p37 = scmp.ne.s32.totalorder %s26, %s29
      %p38 = scmp.eq.s32.totalorder %s21, 1
      %p39 = por %p37, %p38
      %p40 = scmp.ne.s32.totalorder %s29, %s30
      %p41 = scmp.eq.s32.totalorder %s21, 0
      %p42 = por %p40, %p41
      %p43 = scmp.ne.s32.totalorder %s29, %s30
      %p44 = scmp.eq.s32.totalorder %s22, 1
      %p45 = por %p43, %p44
      %p47 = scmp.ne.s32.totalorder %s30, %s46
      %p48 = scmp.eq.s32.totalorder %s22, 0
      %p49 = por %p47, %p48
      %s51 = sadd.s32 %s50, 1
      %p54 = scmp.eq.s32.totalorder %s16, 1
      %p55 = scmp.ne.s32.totalorder %s50, %s52
      %p56 = scmp.eq.s32.totalorder %s16, 0
      %p57 = por %p55, %p56
      %p58 = scmp.ne.s32.totalorder %s50, %s52
      %p59 = scmp.eq.s32.totalorder %s21, 1
      %p60 = por %p58, %p59
      %p61 = scmp.ne.s32.totalorder %s52, %s53
      %p62 = scmp.eq.s32.totalorder %s21, 0
      %p63 = por %p61, %p62
      %p64 = scmp.ne.s32.totalorder %s52, %s53
      %p65 = scmp.eq.s32.totalorder %s22, 1
      %p66 = por %p64, %p65
      %p68 = scmp.ne.s32.totalorder %s53, %s67
      %p69 = scmp.eq.s32.totalorder %s22, 0
      %p70 = por %p68, %p69
      %s72 = sadd.s32 %s71, 1
      %p75 = scmp.eq.s32.totalorder %s16, 1
      %p76 = scmp.ne.s32.totalorder %s71, %s73
      %p77 = scmp.eq.s32.totalorder %s16, 0
      %p78 = por %p76, %p77
      %p79 = scmp.ne.s32.totalorder %s71, %s73
      %p80 = scmp.eq.s32.totalorder %s21, 1
      %p81 = por %p79, %p80
      %p82 = scmp.ne.s32.totalorder %s73, %s74
      %p83 = scmp.eq.s32.totalorder %s21, 0
      %p84 = por %p82, %p83
      %p85 = scmp.ne.s32.totalorder %s73, %s74
      %p86 = scmp.eq.s32.totalorder %s22, 1
      %p87 = por %p85, %p86
      %p89 = scmp.ne.s32.totalorder %s74, %s88
      %p90 = scmp.eq.s32.totalorder %s22, 0
      %p91 = por %p89, %p90
      %s93 = sadd.s32 %s92, 1
      %p96 = scmp.eq.s32.totalorder %s16, 1
      %p97 = scmp.ne.s32.totalorder %s92, %s94
      %p98 = scmp.eq.s32.totalorder %s16, 0
      %p99 = por %p97, %p98
      %p100 = scmp.ne.s32.totalorder %s92, %s94
      %p101 = scmp.eq.s32.totalorder %s21, 1
      %p102 = por %p100, %p101
      %p103 = scmp.ne.s32.totalorder %s94, %s95
      %p104 = scmp.eq.s32.totalorder %s21, 0
      %p105 = por %p103, %p104
      %p106 = scmp.ne.s32.totalorder %s94, %s95
      %p107 = scmp.eq.s32.totalorder %s22, 1
      %p108 = por %p106, %p107
      %p110 = scmp.ne.s32.totalorder %s95, %s109
      %p111 = scmp.eq.s32.totalorder %s22, 0
      %p112 = por %p110, %p111
      %s114 = sadd.s32 %s113, 1
      %p117 = scmp.eq.s32.totalorder %s16, 1
      %p118 = scmp.ne.s32.totalorder %s113, %s115
      %p119 = scmp.eq.s32.totalorder %s16, 0
      %p120 = por %p118, %p119
      %p121 = scmp.ne.s32.totalorder %s113, %s115
      %p122 = scmp.eq.s32.totalorder %s21, 1
      %p123 = por %p121, %p122
      %p124 = scmp.ne.s32.totalorder %s115, %s116
      %p125 = scmp.eq.s32.totalorder %s21, 0
      %p126 = por %p124, %p125
      %p127 = scmp.ne.s32.totalorder %s115, %s116
      %p128 = scmp.eq.s32.totalorder %s22, 1
      %p129 = por %p127, %p128
      %p131 = scmp.ne.s32.totalorder %s116, %s130
      %p132 = scmp.eq.s32.totalorder %s22, 0
      %p133 = por %p131, %p132
      %s134 = ssub.s32 %s16, %s23
      %p135 = scmp.eq.s32.totalorder %s134, 0
      %s137 = sadd.s32 %s136, 1
      %s138 = scalar_select %p135, %s136, %s137
      %p141 = pneg %p135
      %p142 = scmp.eq.s32.totalorder %s16, 1
      %p143 = por %p141, %p142
      %p144 = scmp.ne.s32.totalorder %s136, %s139
      %p145 = scmp.eq.s32.totalorder %s16, 0
      %p146 = por %p144, %p145
      %p147 = scmp.ne.s32.totalorder %s136, %s139
      %p148 = scmp.eq.s32.totalorder %s21, 1
      %p149 = por %p147, %p148
      %p150 = scmp.ne.s32.totalorder %s139, %s140
      %p151 = scmp.eq.s32.totalorder %s21, 0
      %p152 = por %p150, %p151
      %p153 = scmp.ne.s32.totalorder %s139, %s140
      %p154 = scmp.eq.s32.totalorder %s22, 1
      %p155 = por %p153, %p154
      %p157 = scmp.ne.s32.totalorder %s140, %s156
      %p158 = scmp.eq.s32.totalorder %s22, 0
      %p159 = por %p157, %p158
      %s161 = sadd.s32 %s160, 1
      %p164 = scmp.eq.s32.totalorder %s16, 1
      %p165 = scmp.ne.s32.totalorder %s160, %s162
      %p166 = scmp.eq.s32.totalorder %s16, 0
      %p167 = por %p165, %p166
      %p168 = scmp.ne.s32.totalorder %s160, %s162
      %p169 = scmp.eq.s32.totalorder %s21, 1
      %p170 = por %p168, %p169
      %p171 = scmp.ne.s32.totalorder %s162, %s163
      %p172 = scmp.eq.s32.totalorder %s21, 0
      %p173 = por %p171, %p172
      %p174 = scmp.ne.s32.totalorder %s162, %s163
      %p175 = scmp.eq.s32.totalorder %s22, 1
      %p176 = por %p174, %p175
      %p178 = scmp.ne.s32.totalorder %s163, %s177
      %p179 = scmp.eq.s32.totalorder %s22, 0
      %p180 = por %p178, %p179
      %s182 = sadd.s32 %s181, 1
      %p185 = scmp.eq.s32.totalorder %s16, 1
      %p186 = scmp.ne.s32.totalorder %s181, %s183
      %p187 = scmp.eq.s32.totalorder %s16, 0
      %p188 = por %p186, %p187
      %p189 = scmp.ne.s32.totalorder %s181, %s183
      %p190 = scmp.eq.s32.totalorder %s21, 1
      %p191 = por %p189, %p190
      %p192 = scmp.ne.s32.totalorder %s183, %s184
      %p193 = scmp.eq.s32.totalorder %s21, 0
      %p194 = por %p192, %p193
      %p195 = scmp.ne.s32.totalorder %s183, %s184
      %p196 = scmp.eq.s32.totalorder %s22, 1
      %p197 = por %p195, %p196
      %p199 = scmp.ne.s32.totalorder %s184, %s198
      %p200 = scmp.eq.s32.totalorder %s22, 0
      %p201 = por %p199, %p200
      %s202 = ssub.s32 %s16, %s23
      %p203 = scmp.eq.s32.totalorder %s202, 0
      %s205 = sadd.s32 %s204, 1
      %s206 = scalar_select %p203, %s204, %s205
      %p209 = pneg %p203
      %p210 = scmp.eq.s32.totalorder %s16, 1
      %p211 = por %p209, %p210
      %p212 = scmp.ne.s32.totalorder %s204, %s207
      %p213 = scmp.eq.s32.totalorder %s16, 0
      %p214 = por %p212, %p213
      %p215 = scmp.ne.s32.totalorder %s204, %s207
      %p216 = scmp.eq.s32.totalorder %s21, 1
      %p217 = por %p215, %p216
      %p218 = scmp.ne.s32.totalorder %s207, %s208
      %p219 = scmp.eq.s32.totalorder %s21, 0
      %p220 = por %p218, %p219
      %p221 = scmp.ne.s32.totalorder %s207, %s208
      %p222 = scmp.eq.s32.totalorder %s22, 1
      %p223 = por %p221, %p222
      %p225 = scmp.ne.s32.totalorder %s208, %s224
      %p226 = scmp.eq.s32.totalorder %s22, 0
      %p227 = por %p225, %p226
      %p228 = scmp.le.s32.totalorder 1, %s16
      %p229 = scmp.lt.s32.totalorder %s16, 3
      %p230 = pnand %p228, %p229
      %p231 = pneg %p230
      // Predicated region
      $region9: #{gpt2_forward.5} parent=5 // pred_check
        _
      $region10: #{gpt2_forward.5} parent=5 // pred_check_branch
        %233 = sbr.rel (%p230) target = $region12
      $region11: #{gpt2_forward.5} parent=5 // pred_region
        %s234 = ssub.s32 %s16, 1
        // Predicated region
        $region13: #{gpt2_forward.5} parent=11 // pred_check
          %p235 = pneg %p63
        $region14: #{gpt2_forward.5} parent=11 // pred_check_branch
          %237 = sbr.rel (%p235) target = $region16
        $region15: #{gpt2_forward.5} parent=11 // pred_region
          %s239 = ssub.s32 1024, 1024
          %240 = vsyncadd [#allocation3], %s239
          %s241 = sshll.u32 [#allocation2], 4
          %s242 = int_to_ptr.vmem [resolvable:$true] %s241
          %247 = dma.hbm_to_vmem [thread:$0]  %s1, 1024, %s242, [#allocation3], 64, 64, 4
        $region16: #{gpt2_forward.5} parent=11 // pred_fallthru
          _
        // Predicated region
        $region17: #{gpt2_forward.5} parent=11 // pred_check
          %p248 = pneg %p84
        $region18: #{gpt2_forward.5} parent=11 // pred_check_branch
          %250 = sbr.rel (%p248) target = $region20
        $region19: #{gpt2_forward.5} parent=11 // pred_region
          _
        $region20: #{gpt2_forward.5} parent=11 // pred_fallthru
          _
        // Predicated region
        $region21: #{gpt2_forward.5} parent=11 // pred_check
          %p251 = pneg %p105
        $region22: #{gpt2_forward.5} parent=11 // pred_check_branch
          %253 = sbr.rel (%p251) target = $region24
        $region23: #{gpt2_forward.5} parent=11 // pred_region
          %s255 = ssub.s32 1024, 1024
          %256 = vsyncadd [#allocation5], %s255
          %s257 = sshll.u32 [#allocation4], 4
          %s258 = int_to_ptr.vmem [resolvable:$true] %s257
          %263 = dma.hbm_to_vmem [thread:$0]  %s3, 1024, %s258, [#allocation5], 64, 64, 4
        $region24: #{gpt2_forward.5} parent=11 // pred_fallthru
          _
        // Predicated region
        $region25: #{gpt2_forward.5} parent=11 // pred_check
          %p264 = pneg %p126
        $region26: #{gpt2_forward.5} parent=11 // pred_check_branch
          %266 = sbr.rel (%p264) target = $region28
        $region27: #{gpt2_forward.5} parent=11 // pred_region
          _
        $region28: #{gpt2_forward.5} parent=11 // pred_fallthru
          _
        // Predicated region
        $region29: #{gpt2_forward.5} parent=11 // pred_check
          %p267 = pneg %p173
        $region30: #{gpt2_forward.5} parent=11 // pred_check_branch
          %269 = sbr.rel (%p267) target = $region32
        $region31: #{gpt2_forward.5} parent=11 // pred_region
          _
        $region32: #{gpt2_forward.5} parent=11 // pred_fallthru
          _
        // Predicated region
        $region33: #{gpt2_forward.5} parent=11 // pred_check
          %p270 = pneg %p194
        $region34: #{gpt2_forward.5} parent=11 // pred_check_branch
          %272 = sbr.rel (%p270) target = $region36
        $region35: #{gpt2_forward.5} parent=11 // pred_region
          _
        $region36: #{gpt2_forward.5} parent=11 // pred_fallthru
          _
      $region12: #{gpt2_forward.5} parent=5 // pred_fallthru
        _
      %p273 = scmp.lt.s32.totalorder %s16, 2
      // Predicated region
      $region37: #{gpt2_forward.5} parent=5 // pred_check
        %p274 = pneg %p273
      $region38: #{gpt2_forward.5} parent=5 // pred_check_branch
        %276 = sbr.rel (%p274) target = $region40
      $region39: #{gpt2_forward.5} parent=5 // pred_region
        // Predicated region
        $region41: #{gpt2_forward.5} parent=39 // pred_check
          %p277 = pneg %p36
        $region42: #{gpt2_forward.5} parent=39 // pred_check_branch
          %279 = sbr.rel (%p277) target = $region44
        $region43: #{gpt2_forward.5} parent=39 // pred_region
          %p280 = scmp.lt.s32.totalorder %s16, 1
          %s281 = scalar_select %p280, %s16, 1
          %s282 = smul.addr %s281, 8
          %s283 = scalar_lea.vmem %s0, %s282
        $region44: #{gpt2_forward.5} parent=39 // pred_fallthru
          _
        // Predicated region
        $region45: #{gpt2_forward.5} parent=39 // pred_check
          %p284 = pneg %p146
        $region46: #{gpt2_forward.5} parent=39 // pred_check_branch
          %286 = sbr.rel (%p284) target = $region48
        $region47: #{gpt2_forward.5} parent=39 // pred_region
          %p287 = scmp.lt.s32.totalorder %s16, 1
          %s288 = scalar_select %p287, %s16, 1
          %s289 = scalar_lea.vmem %s5, %s288
        $region48: #{gpt2_forward.5} parent=39 // pred_fallthru
          _
      $region40: #{gpt2_forward.5} parent=5 // pred_fallthru
        _
      %p290 = scmp.le.s32.totalorder 1, %s16
      %p291 = scmp.lt.s32.totalorder %s16, 3
      %p292 = pnand %p290, %p291
      %p293 = pneg %p292
      // Predicated region
      $region49: #{gpt2_forward.5} parent=5 // pred_check
        _
      $region50: #{gpt2_forward.5} parent=5 // pred_check_branch
        %295 = sbr.rel (%p292) target = $region52
      $region51: #{gpt2_forward.5} parent=5 // pred_region
        %s296 = ssub.s32 %s16, 1
        // Predicated region
        $region53: #{gpt2_forward.5} parent=51 // pred_check
          %p297 = pneg %p63
        $region54: #{gpt2_forward.5} parent=51 // pred_check_branch
          %299 = sbr.rel (%p297) target = $region56
        $region55: #{gpt2_forward.5} parent=51 // pred_region
          %300 = dma.done [#allocation3], 1024
        $region56: #{gpt2_forward.5} parent=51 // pred_fallthru
          _
        // Predicated region
        $region57: #{gpt2_forward.5} parent=51 // pred_check
          %p301 = pneg %p105
        $region58: #{gpt2_forward.5} parent=51 // pred_check_branch
          %303 = sbr.rel (%p301) target = $region60
        $region59: #{gpt2_forward.5} parent=51 // pred_region
          %304 = dma.done [#allocation5], 1024
        $region60: #{gpt2_forward.5} parent=51 // pred_fallthru
          _
        %p305 = scmp.lt.s32.totalorder %s21, 1
        %s306 = scalar_select %p305, %s21, 1
        %s307 = smul.addr %s306, 8
        %s308 = scalar_lea.vmem %s0, %s307
        %p309 = pneg %p42
        %p310 = pneg %p39
        %p311 = pneg %p63
        %p312 = pneg %p60
        %p313 = pneg %p84
        %p314 = pneg %p81
        %p315 = pneg %p105
        %p316 = pneg %p102
        %p317 = pneg %p126
        %p318 = pneg %p123
        %p319 = scmp.lt.s32.totalorder %s21, 1
        %s320 = scalar_select %p319, %s21, 1
        %s321 = scalar_lea.vmem %s5, %s320
        %p322 = pneg %p152
        %p323 = pneg %p149
        %p324 = pneg %p173
        %p325 = pneg %p170
        %p326 = pneg %p194
        %p327 = pneg %p191
        %p328 = pneg %p220
        %p329 = pneg %p217
        %p330 = scmp.lt.s32.totalorder %s21, 1
        %s331 = scalar_select %p330, %s21, 1
        %s332 = smul.addr %s331, 8
        %s333 = scalar_lea.vmem %s8, %s332
        %p334 = scmp.lt.s32.totalorder %s21, 1
        %s335 = scalar_select %p334, %s21, 1
        %s336 = smul.addr %s335, 8
        %s337 = scalar_lea.vmem %s0, %s336
        %p338 = scmp.lt.s32.totalorder %s21, 1
        %s339 = scalar_select %p338, %s21, 1
        %s340 = scalar_lea.vmem %s5, %s339
        %p341 = scmp.lt.s32.totalorder %s21, 1
        %s342 = scalar_select %p341, %s21, 1
        %s343 = smul.addr %s342, 8
        %s344 = scalar_lea.vmem %s8, %s343
        %v346 = vld [vmem:[%s337] sm:$0xff]
        %v347 = vpack.c.bf16 %v346, %v346
        %v348 = vld [vmem:[#allocation2] sm:$0xf]
        %v349 = vld [vmem:[#allocation2 + $0x4] sm:$0xf]
        %v350 = vld [vmem:[#allocation2 + $0x8] sm:$0xf]
        %v351 = vld [vmem:[#allocation2 + $0xc] sm:$0xf]
        %v352 = vld [vmem:[#allocation2 + $0x10] sm:$0xf]
        %v353 = vld [vmem:[#allocation2 + $0x14] sm:$0xf]
        %v354 = vld [vmem:[#allocation2 + $0x18] sm:$0xf]
        %v355 = vld [vmem:[#allocation2 + $0x1c] sm:$0xf]
        %v356 = vld [vmem:[#allocation2 + $0x20] sm:$0xf]
        %v357 = vld [vmem:[#allocation2 + $0x24] sm:$0xf]
        %v358 = vld [vmem:[#allocation2 + $0x28] sm:$0xf]
        %v359 = vld [vmem:[#allocation2 + $0x2c] sm:$0xf]
        %v360 = vld [vmem:[#allocation2 + $0x30] sm:$0xf]
        %v361 = vld [vmem:[#allocation2 + $0x34] sm:$0xf]
        %v362 = vld [vmem:[#allocation2 + $0x38] sm:$0xf]
        %v363 = vld [vmem:[#allocation2 + $0x3c] sm:$0xf]
        %v364 = vld [vmem:[%s2] sm:$0x1]
        %v366 = vlaneseq
        %v367 = vshrl.u32 %v366, 7
        %v368 = vsub.s32 0, %v367
        %v369 = vrot.slane %v364, %v368
        %v387 = vunpack.c.l.b16 %v348
        %v388 = vunpack.c.l.b16 %v349
        %v389 = vunpack.c.l.b16 %v350
        %v390 = vunpack.c.l.b16 %v351
        %v391 = vunpack.c.l.b16 %v352
        %v392 = vunpack.c.l.b16 %v353
        %v393 = vunpack.c.l.b16 %v354
        %v394 = vunpack.c.l.b16 %v355
        %v395 = vunpack.c.l.b16 %v356
        %v396 = vunpack.c.l.b16 %v357
        %v397 = vunpack.c.l.b16 %v358
        %v398 = vunpack.c.l.b16 %v359
        %v399 = vunpack.c.l.b16 %v360
        %v400 = vunpack.c.l.b16 %v361
        %v401 = vunpack.c.l.b16 %v362
        %v402 = vunpack.c.l.b16 %v363
        %v403 = vpack.c.b16 %v388, %v387
        %v404 = vpack.c.b16 %v390, %v389
        %v405 = vpack.c.b16 %v392, %v391
        %v406 = vpack.c.b16 %v394, %v393
        %v407 = vpack.c.b16 %v396, %v395
        %v408 = vpack.c.b16 %v398, %v397
        %v409 = vpack.c.b16 %v400, %v399
        %v410 = vpack.c.b16 %v402, %v401
        %419 = vmatprep.subr.bf16.mxu0 0
        %420 = vmatpush1.bf16.msra.mxu0 %v403
        %421 = vmatprep.subr.bf16.mxu0 0
        %422 = vmatpush1.bf16.msra.mxu0 %v404
        %423 = vmatprep.subr.bf16.mxu0 0
        %424 = vmatpush1.bf16.msra.mxu0 %v405
        %425 = vmatprep.subr.bf16.mxu0 0
        %426 = vmatpush1.bf16.msra.mxu0 %v406
        %427 = vmatprep.subr.bf16.mxu0 0
        %428 = vmatpush1.bf16.msra.mxu0 %v407
        %429 = vmatprep.subr.bf16.mxu0 0
        %430 = vmatpush1.bf16.msra.mxu0 %v408
        %431 = vmatprep.subr.bf16.mxu0 0
        %432 = vmatpush1.bf16.msra.mxu0 %v409
        %433 = vmatprep.subr.bf16.mxu0 0
        %434 = vmatpush1.bf16.msra.mxu0 %v410
        %435 = vmatprep.subr.bf16.mxu0 0
        %436 = vmatpush1.bf16.msra.mxu0 0
        %437 = vmatprep.subr.bf16.mxu0 0
        %438 = vmatpush1.bf16.msra.mxu0 0
        %439 = vmatprep.subr.bf16.mxu0 0
        %440 = vmatpush1.bf16.msra.mxu0 0
        %441 = vmatprep.subr.bf16.mxu0 0
        %442 = vmatpush1.bf16.msra.mxu0 0
        %443 = vmatprep.subr.bf16.mxu0 0
        %444 = vmatpush1.bf16.msra.mxu0 0
        %445 = vmatprep.subr.bf16.mxu0 0
        %446 = vmatpush1.bf16.msra.mxu0 0
        %447 = vmatprep.subr.bf16.mxu0 0
        %448 = vmatpush1.bf16.msra.mxu0 0
        %449 = vmatprep.subr.bf16.mxu0 0
        %450 = vmatpush1.bf16.msra.mxu0 0
        %451 = vmatprep.mubr.bf16.mxu0 0
        %452 = vmatmul.mubr.bf16.gmra.mrb[0].mxu0 %v347
        %v453 = vpop.f32.mrb[0].mxu0
        %v454 = vadd.f32 %v369, %v453
        %v455 = vpop.f32.mrb[0].mxu0
        %v456 = vpop.f32.mrb[0].mxu0
        %v457 = vpop.f32.mrb[0].mxu0
        %458 = vdwg.mxu0
        %v459 = vld [vmem:[#allocation4] sm:$0xf]
        %v460 = vld [vmem:[#allocation4 + $0x4] sm:$0xf]
        %v461 = vld [vmem:[#allocation4 + $0x8] sm:$0xf]
        %v462 = vld [vmem:[#allocation4 + $0xc] sm:$0xf]
        %v463 = vld [vmem:[#allocation4 + $0x10] sm:$0xf]
        %v464 = vld [vmem:[#allocation4 + $0x14] sm:$0xf]
        %v465 = vld [vmem:[#allocation4 + $0x18] sm:$0xf]
        %v466 = vld [vmem:[#allocation4 + $0x1c] sm:$0xf]
        %v467 = vld [vmem:[#allocation4 + $0x20] sm:$0xf]
        %v468 = vld [vmem:[#allocation4 + $0x24] sm:$0xf]
        %v469 = vld [vmem:[#allocation4 + $0x28] sm:$0xf]
        %v470 = vld [vmem:[#allocation4 + $0x2c] sm:$0xf]
        %v471 = vld [vmem:[#allocation4 + $0x30] sm:$0xf]
        %v472 = vld [vmem:[#allocation4 + $0x34] sm:$0xf]
        %v473 = vld [vmem:[#allocation4 + $0x38] sm:$0xf]
        %v474 = vld [vmem:[#allocation4 + $0x3c] sm:$0xf]
        %v475 = vld [vmem:[%s4] sm:$0x1]
        %v477 = vlaneseq
        %v478 = vshrl.u32 %v477, 7
        %v479 = vsub.s32 0, %v478
        %v480 = vrot.slane %v475, %v479
        %v498 = vunpack.c.l.b16 %v459
        %v499 = vunpack.c.l.b16 %v460
        %v500 = vunpack.c.l.b16 %v461
        %v501 = vunpack.c.l.b16 %v462
        %v502 = vunpack.c.l.b16 %v463
        %v503 = vunpack.c.l.b16 %v464
        %v504 = vunpack.c.l.b16 %v465
        %v505 = vunpack.c.l.b16 %v466
        %v506 = vunpack.c.l.b16 %v467
        %v507 = vunpack.c.l.b16 %v468
        %v508 = vunpack.c.l.b16 %v469
        %v509 = vunpack.c.l.b16 %v470
        %v510 = vunpack.c.l.b16 %v471
        %v511 = vunpack.c.l.b16 %v472
        %v512 = vunpack.c.l.b16 %v473
        %v513 = vunpack.c.l.b16 %v474
        %v514 = vpack.c.b16 %v499, %v498
        %v515 = vpack.c.b16 %v501, %v500
        %v516 = vpack.c.b16 %v503, %v502
        %v517 = vpack.c.b16 %v505, %v504
        %v518 = vpack.c.b16 %v507, %v506
        %v519 = vpack.c.b16 %v509, %v508
        %v520 = vpack.c.b16 %v511, %v510
        %v521 = vpack.c.b16 %v513, %v512
        %530 = vmatprep.subr.bf16.mxu0 0
        %531 = vmatpush1.bf16.msra.mxu0 %v514
        %532 = vmatprep.subr.bf16.mxu0 0
        %533 = vmatpush1.bf16.msra.mxu0 %v515
        %534 = vmatprep.subr.bf16.mxu0 0
        %535 = vmatpush1.bf16.msra.mxu0 %v516
        %536 = vmatprep.subr.bf16.mxu0 0
        %537 = vmatpush1.bf16.msra.mxu0 %v517
        %538 = vmatprep.subr.bf16.mxu0 0
        %539 = vmatpush1.bf16.msra.mxu0 %v518
        %540 = vmatprep.subr.bf16.mxu0 0
        %541 = vmatpush1.bf16.msra.mxu0 %v519
        %542 = vmatprep.subr.bf16.mxu0 0
        %543 = vmatpush1.bf16.msra.mxu0 %v520
        %544 = vmatprep.subr.bf16.mxu0 0
        %545 = vmatpush1.bf16.msra.mxu0 %v521
        %546 = vmatprep.subr.bf16.mxu0 0
        %547 = vmatpush1.bf16.msra.mxu0 0
        %548 = vmatprep.subr.bf16.mxu0 0
        %549 = vmatpush1.bf16.msra.mxu0 0
        %550 = vmatprep.subr.bf16.mxu0 0
        %551 = vmatpush1.bf16.msra.mxu0 0
        %552 = vmatprep.subr.bf16.mxu0 0
        %553 = vmatpush1.bf16.msra.mxu0 0
        %554 = vmatprep.subr.bf16.mxu0 0
        %555 = vmatpush1.bf16.msra.mxu0 0
        %556 = vmatprep.subr.bf16.mxu0 0
        %557 = vmatpush1.bf16.msra.mxu0 0
        %558 = vmatprep.subr.bf16.mxu0 0
        %559 = vmatpush1.bf16.msra.mxu0 0
        %560 = vmatprep.subr.bf16.mxu0 0
        %561 = vmatpush1.bf16.msra.mxu0 0
        %562 = vmatprep.mubr.bf16.mxu0 0
        %563 = vmatmul.mubr.bf16.gmra.mrb[0].mxu0 %v347
        %v564 = vpop.f32.mrb[0].mxu0
        %v565 = vadd.f32 %v480, %v564
        %v566 = vpop.f32.mrb[0].mxu0
        %v567 = vpop.f32.mrb[0].mxu0
        %v568 = vpop.f32.mrb[0].mxu0
        %569 = vdwg.mxu0
        %v570 = vpack.c.bf16 %v565, %v565
        %v571 = vpack.c.bf16 %v454, %v454
        %572 = vmatprep.subr.bf16.mxu0 0
        %573 = vmatpush1.bf16.xpose.msra.mxu0 %v571
        %574 = vmatprep.subr.bf16.mxu0 0
        %575 = vmatpush1.bf16.xpose.msra.mxu0 0
        %576 = vmatprep.subr.bf16.mxu0 0
        %577 = vmatpush1.bf16.xpose.msra.mxu0 0
        %578 = vmatprep.subr.bf16.mxu0 0
        %579 = vmatpush1.bf16.xpose.msra.mxu0 0
        %580 = vmatprep.subr.bf16.mxu0 0
        %581 = vmatpush1.bf16.xpose.msra.mxu0 0
        %582 = vmatprep.subr.bf16.mxu0 0
        %583 = vmatpush1.bf16.xpose.msra.mxu0 0
        %584 = vmatprep.subr.bf16.mxu0 0
        %585 = vmatpush1.bf16.xpose.msra.mxu0 0
        %586 = vmatprep.subr.bf16.mxu0 0
        %587 = vmatpush1.bf16.xpose.msra.mxu0 0
        %588 = vmatprep.subr.bf16.mxu0 0
        %589 = vmatpush1.bf16.xpose.msra.mxu0 0
        %590 = vmatprep.subr.bf16.mxu0 0
        %591 = vmatpush1.bf16.xpose.msra.mxu0 0
        %592 = vmatprep.subr.bf16.mxu0 0
        %593 = vmatpush1.bf16.xpose.msra.mxu0 0
        %594 = vmatprep.subr.bf16.mxu0 0
        %595 = vmatpush1.bf16.xpose.msra.mxu0 0
        %596 = vmatprep.subr.bf16.mxu0 0
        %597 = vmatpush1.bf16.xpose.msra.mxu0 0
        %598 = vmatprep.subr.bf16.mxu0 0
        %599 = vmatpush1.bf16.xpose.msra.mxu0 0
        %600 = vmatprep.subr.bf16.mxu0 0
        %601 = vmatpush1.bf16.xpose.msra.mxu0 0
        %602 = vmatprep.subr.bf16.mxu0 0
        %603 = vmatpush1.bf16.xpose.msra.mxu0 0
        %604 = vmatprep.mubr.bf16.mxu0 0
        %605 = vmatmul.mubr.bf16.gmra.mrb[0].mxu0 %v570
        %v606 = vpop.f32.mrb[0].mxu0
        %v607 = vadd.f32 0.0, %v606
        %v608 = vpop.f32.mrb[0].mxu0
        %v609 = vpop.f32.mrb[0].mxu0
        %v610 = vpop.f32.mrb[0].mxu0
        %611 = vdwg.mxu0
        %v612 = vld [vmem:[%s340] sm:$0x1]
        %vm613 = vcmp.eq.s32.totalorder %v612, 0
        %v614 = vsel %vm613, 1, 0
        %v615 = vlaneseq
        %v616 = vshrl.u32 %v615, 7
        %v617 = vsub.s32 0, %v616
        %v618 = vrot.slane %v614, %v617
        %vm619 = vcmp.eq.s32.totalorder %v618, 1
        %v620 = vsel %vm619, -1e+09, %v607
        %vm621 = vcmask 64512
        %v622 = vsel %vm621, %v620, -inf
        %623 = vmax.xlane.f32.xlu0 %v622
        %v624 = vpop.xlane.xlu0 %623
        %v625 = vsub.f32 %v620, %v624
        %v626 = vmul.f32 %v625, 1.442695
        %v627 = vpow.pop %v626
        %v628 = vsel %vm621, %v627, 0.0
        %629 = vadd.xlane.f32.xlu0 %v628
        %v630 = vpop.xlane.xlu0 %629
        %v631 = vrcp.pop %v630
        %v632 = vmul.f32 %v627, %v631
        %v633 = vpack.c.bf16 %v632, %v632
        %634 = vxpose.xlu0.c.b16.start [1/8] %v633, 128
        %635 = vxpose.xlu0.c.b16.cont [2/8] 0, 128
        %636 = vxpose.xlu0.c.b16.cont [3/8] 0, 128
        %637 = vxpose.xlu0.c.b16.cont [4/8] 0, 128
        %638 = vxpose.xlu0.c.b16.cont [5/8] 0, 128
        %639 = vxpose.xlu0.c.b16.cont [6/8] 0, 128
        %640 = vxpose.xlu0.c.b16.cont [7/8] 0, 128
        %641 = vxpose.xlu0.c.b16.end [8/8] 0, 128
        %v642 = vpop.trf.xlu0
        %v643 = vpop.trf.xlu0
        %v644 = vpop.trf.xlu0
        %v645 = vpop.trf.xlu0
        %v646 = vpop.trf.xlu0
        %v647 = vpop.trf.xlu0
        %v648 = vpop.trf.xlu0
        %v649 = vpop.trf.xlu0
        %v651 = vsel %vm621, %v642, 0
        %vm653 = vcmask 1043456
        %v655 = vsel %vm653, %v570, 0
        %657 = vmatprep.subr.bf16.mxu0 0
        %658 = vmatpush1.bf16.msra.mxu0 %v655
        %659 = vmatprep.subr.bf16.mxu0 0
        %660 = vmatpush1.bf16.msra.mxu0 0
        %661 = vmatprep.subr.bf16.mxu0 0
        %662 = vmatpush1.bf16.msra.mxu0 0
        %663 = vmatprep.subr.bf16.mxu0 0
        %664 = vmatpush1.bf16.msra.mxu0 0
        %665 = vmatprep.subr.bf16.mxu0 0
        %666 = vmatpush1.bf16.msra.mxu0 0
        %667 = vmatprep.subr.bf16.mxu0 0
        %668 = vmatpush1.bf16.msra.mxu0 0
        %669 = vmatprep.subr.bf16.mxu0 0
        %670 = vmatpush1.bf16.msra.mxu0 0
        %671 = vmatprep.subr.bf16.mxu0 0
        %672 = vmatpush1.bf16.msra.mxu0 0
        %673 = vmatprep.subr.bf16.mxu0 0
        %674 = vmatpush1.bf16.msra.mxu0 0
        %675 = vmatprep.subr.bf16.mxu0 0
        %676 = vmatpush1.bf16.msra.mxu0 0
        %677 = vmatprep.subr.bf16.mxu0 0
        %678 = vmatpush1.bf16.msra.mxu0 0
        %679 = vmatprep.subr.bf16.mxu0 0
        %680 = vmatpush1.bf16.msra.mxu0 0
        %681 = vmatprep.subr.bf16.mxu0 0
        %682 = vmatpush1.bf16.msra.mxu0 0
        %683 = vmatprep.subr.bf16.mxu0 0
        %684 = vmatpush1.bf16.msra.mxu0 0
        %685 = vmatprep.subr.bf16.mxu0 0
        %686 = vmatpush1.bf16.msra.mxu0 0
        %687 = vmatprep.subr.bf16.mxu0 0
        %688 = vmatpush1.bf16.msra.mxu0 0
        %689 = vmatprep.mubr.bf16.mxu0 0
        %690 = vmatmul.mubr.bf16.gmra.mrb[0].mxu0 %v651
        %v691 = vpop.f32.mrb[0].mxu0
        %v692 = vadd.f32 0.0, %v691
        %v693 = vpop.f32.mrb[0].mxu0
        %v694 = vpop.f32.mrb[0].mxu0
        %v695 = vpop.f32.mrb[0].mxu0
        %696 = vdwg.mxu0
        %v697 = vadd.f32 %v346, %v692
        %v698 = vld [vmem:[%s6] sm:$0x1]
        %v699 = vld [vmem:[%s7] sm:$0x1]
        %700 = vadd.xlane.f32.xlu0 %v697
        %v701 = vpop.xlane.xlu0 %700
        %v702 = vrcp.pop 128.0
        %v703 = vmul.f32 %v701, %v702
        %v704 = vsub.f32 %v697, %v703
        %v705 = vmul.f32 %v704, %v704
        %706 = vadd.xlane.f32.xlu0 %v705
        %v707 = vpop.xlane.xlu0 %706
        %v708 = vmul.f32 %v707, %v702
        %v709 = vadd.f32 %v708, 1e-05
        %v710 = vrsqrt.pop %v709
        %v711 = vmul.f32 %v704, %v710
        %v713 = vlaneseq
        %v714 = vshrl.u32 %v713, 7
        %v715 = vsub.s32 0, %v714
        %v716 = vrot.slane %v698, %v715
        %v718 = vmul.f32 %v711, %v716
        %v720 = vlaneseq
        %v721 = vshrl.u32 %v720, 7
        %v722 = vsub.s32 0, %v721
        %v723 = vrot.slane %v699, %v722
        %v725 = vadd.f32 %v718, %v723
        %726 = vst [vmem:[%s344] sm:$0xff] %v725
        %p727 = scmp.lt.s32.totalorder %s21, 1
        %s728 = scalar_select %p727, %s21, 1
        %s729 = smul.addr %s728, 8
        %s730 = scalar_lea.vmem %s8, %s729
        // Predicated region
        $region61: #{gpt2_forward.5} parent=51 // pred_check
          %p731 = pneg %p217
        $region62: #{gpt2_forward.5} parent=51 // pred_check_branch
          %733 = sbr.rel (%p731) target = $region64
        $region63: #{gpt2_forward.5} parent=51 // pred_region
          _
        $region64: #{gpt2_forward.5} parent=51 // pred_fallthru
          _
      $region52: #{gpt2_forward.5} parent=5 // pred_fallthru
        _
      %p734 = scmp.le.s32.totalorder 2, %s16
      // Predicated region
      $region65: #{gpt2_forward.5} parent=5 // pred_check
        %p735 = pneg %p734
      $region66: #{gpt2_forward.5} parent=5 // pred_check_branch
        %737 = sbr.rel (%p735) target = $region68
      $region67: #{gpt2_forward.5} parent=5 // pred_region
        %s738 = ssub.s32 %s16, 2
        // Predicated region
        $region69: #{gpt2_forward.5} parent=67 // pred_check
          %p739 = pneg %p223
        $region70: #{gpt2_forward.5} parent=67 // pred_check_branch
          %741 = sbr.rel (%p739) target = $region72
        $region71: #{gpt2_forward.5} parent=67 // pred_region
          %p742 = scmp.lt.s32.totalorder %s22, 1
          %s743 = scalar_select %p742, %s22, 1
          %s744 = smul.addr %s743, 8
          %s745 = scalar_lea.vmem %s8, %s744
        $region72: #{gpt2_forward.5} parent=67 // pred_fallthru
          _
      $region68: #{gpt2_forward.5} parent=5 // pred_fallthru
        _
    $region6: #{gpt2_forward.5} parent=1 // loop_footer
      %s20 = sadd.s32 1, %s16
    $region7: #{gpt2_forward.5} parent=1 // loop_footer_branch
      %15 = sbr.rel target = $region3
    $region8: #{gpt2_forward.5} parent=1 // loop_exit
      _
    %746 = vsyncpa [#allocation3], 1
    %s747 = scalar_lea.sflag [#allocation3], 1
    %748 = vsyncpa %s747, 1
    %749 = vsyncpa [#allocation5], 1

// kernel: gpt2_forward.8
$region0: #{gpt2_forward.8}
  #allocation0 [shape = 'u32[]', space=smem, size = 0x4, offset = 0x4, fixed_abs, tag = 'smem constant byte address 0x4 - core index']
  #allocation1 [shape = 'u32[144,128]{1,0:T(1,128)}', space=vmem, size = 0x12000, scoped, tag = 'internal scratch']
  %s0 = inlined_call_operand.vmem [shape: f32[16,128], index: 0, kind: input, shape index: {}]
  %s1 = inlined_call_operand.vmem [shape: f32[16,128], index: 1, kind: input, shape index: {}]
  %s2 = inlined_call_operand.vmem [shape: bf16[128,512], index: 2, kind: input, shape index: {}]
  %s3 = inlined_call_operand.vmem [shape: f32[1,512], index: 3, kind: input, shape index: {}]
  %s4 = inlined_call_operand.vmem [shape: bf16[512,128], index: 4, kind: input, shape index: {}]
  %s5 = inlined_call_operand.vmem [shape: f32[1,128], index: 5, kind: input, shape index: {}]
  %s6 = inlined_call_operand.vmem [shape: f32[1,128], index: 6, kind: input, shape index: {}]
  %s7 = inlined_call_operand.vmem [shape: f32[1,128], index: 7, kind: input, shape index: {}]
  %s8 = inlined_call_operand.vmem [shape: f32[16,128], index: 8, kind: output, shape index: {}]
  %s9 = sld [smem:[#allocation0]]
  $region42: #{gpt2_forward.8} parent=0
    _
  %s11 = ssub.s32 1, %s9
  %s12 = scalar_select 0, %s11, %s9
  // Predicated region
  $region2: #{gpt2_forward.8} parent=0 // pred_check
    _
  $region3: #{gpt2_forward.8} parent=0 // pred_check_branch
    %14 = sbr.rel (0) target = $region5
  $region4: #{gpt2_forward.8} parent=0 // pred_region
    _
  $region5: #{gpt2_forward.8} parent=0 // pred_fallthru
    _
  // Predicated region
  $region6: #{gpt2_forward.8} parent=0 // pred_check
    _
  $region7: #{gpt2_forward.8} parent=0 // pred_check_branch
    %16 = sbr.rel (0) target = $region9
  $region8: #{gpt2_forward.8} parent=0 // pred_region
    _
  $region9: #{gpt2_forward.8} parent=0 // pred_fallthru
    _
  // Predicated region
  $region10: #{gpt2_forward.8} parent=0 // pred_check
    _
  $region11: #{gpt2_forward.8} parent=0 // pred_check_branch
    %18 = sbr.rel (0) target = $region13
  $region12: #{gpt2_forward.8} parent=0 // pred_region
    _
  $region13: #{gpt2_forward.8} parent=0 // pred_fallthru
    _
  // Predicated region
  $region14: #{gpt2_forward.8} parent=0 // pred_check
    _
  $region15: #{gpt2_forward.8} parent=0 // pred_check_branch
    %20 = sbr.rel (0) target = $region17
  $region16: #{gpt2_forward.8} parent=0 // pred_region
    _
  $region17: #{gpt2_forward.8} parent=0 // pred_fallthru
    _
  // Predicated region
  $region18: #{gpt2_forward.8} parent=0 // pred_check
    _
  $region19: #{gpt2_forward.8} parent=0 // pred_check_branch
    %22 = sbr.rel (0) target = $region21
  $region20: #{gpt2_forward.8} parent=0 // pred_region
    _
  $region21: #{gpt2_forward.8} parent=0 // pred_fallthru
    _
  // Predicated region
  $region22: #{gpt2_forward.8} parent=0 // pred_check
    _
  $region23: #{gpt2_forward.8} parent=0 // pred_check_branch
    %24 = sbr.rel (0) target = $region25
  $region24: #{gpt2_forward.8} parent=0 // pred_region
    _
  $region25: #{gpt2_forward.8} parent=0 // pred_fallthru
    _
  // Predicated region
  $region26: #{gpt2_forward.8} parent=0 // pred_check
    _
  $region27: #{gpt2_forward.8} parent=0 // pred_check_branch
    %26 = sbr.rel (0) target = $region29
  $region28: #{gpt2_forward.8} parent=0 // pred_region
    _
  $region29: #{gpt2_forward.8} parent=0 // pred_fallthru
    _
  // Predicated region
  $region30: #{gpt2_forward.8} parent=0 // pred_check
    _
  $region31: #{gpt2_forward.8} parent=0 // pred_check_branch
    %28 = sbr.rel (0) target = $region33
  $region32: #{gpt2_forward.8} parent=0 // pred_region
    _
  $region33: #{gpt2_forward.8} parent=0 // pred_fallthru
    _
  %v30 = vld [vmem:[%s0] sm:$0xff]
  %v31 = vld [vmem:[%s0 + $0x8] sm:$0xff]
  %v32 = vpack.c.bf16 %v31, %v30
  %v33 = vld [vmem:[%s2] sm:$0xff]
  %v34 = vld [vmem:[%s2 + $0x8] sm:$0xff]
  %v35 = vld [vmem:[%s2 + $0x10] sm:$0xff]
  %v36 = vld [vmem:[%s2 + $0x18] sm:$0xff]
  %v37 = vld [vmem:[%s2 + $0x20] sm:$0xff]
  %v38 = vld [vmem:[%s2 + $0x28] sm:$0xff]
  %v39 = vld [vmem:[%s2 + $0x30] sm:$0xff]
  %v40 = vld [vmem:[%s2 + $0x38] sm:$0xff]
  %v41 = vld [vmem:[%s2 + $0x40] sm:$0xff]
  %v42 = vld [vmem:[%s2 + $0x48] sm:$0xff]
  %v43 = vld [vmem:[%s2 + $0x50] sm:$0xff]
  %v44 = vld [vmem:[%s2 + $0x58] sm:$0xff]
  %v45 = vld [vmem:[%s2 + $0x60] sm:$0xff]
  %v46 = vld [vmem:[%s2 + $0x68] sm:$0xff]
  %v47 = vld [vmem:[%s2 + $0x70] sm:$0xff]
  %v48 = vld [vmem:[%s2 + $0x78] sm:$0xff]
  %v49 = vld [vmem:[%s2 + $0x80] sm:$0xff]
  %v50 = vld [vmem:[%s2 + $0x88] sm:$0xff]
  %v51 = vld [vmem:[%s2 + $0x90] sm:$0xff]
  %v52 = vld [vmem:[%s2 + $0x98] sm:$0xff]
  %v53 = vld [vmem:[%s2 + $0xa0] sm:$0xff]
  %v54 = vld [vmem:[%s2 + $0xa8] sm:$0xff]
  %v55 = vld [vmem:[%s2 + $0xb0] sm:$0xff]
  %v56 = vld [vmem:[%s2 + $0xb8] sm:$0xff]
  %v57 = vld [vmem:[%s2 + $0xc0] sm:$0xff]
  %v58 = vld [vmem:[%s2 + $0xc8] sm:$0xff]
  %v59 = vld [vmem:[%s2 + $0xd0] sm:$0xff]
  %v60 = vld [vmem:[%s2 + $0xd8] sm:$0xff]
  %v61 = vld [vmem:[%s2 + $0xe0] sm:$0xff]
  %v62 = vld [vmem:[%s2 + $0xe8] sm:$0xff]
  %v63 = vld [vmem:[%s2 + $0xf0] sm:$0xff]
  %v64 = vld [vmem:[%s2 + $0xf8] sm:$0xff]
  %v65 = vld [vmem:[%s3] sm:$0xf]
  %v67 = vlaneseq
  %v68 = vshrl.u32 %v67, 7
  %v69 = vsub.s32 0, %v68
  %v70 = vrot.slane %v65, %v69
  %v71 = vlaneseq
  %v72 = vshrl.u32 %v71, 7
  %v73 = vsub.s32 1, %v72
  %v74 = vrot.slane %v65, %v73
  %v75 = vlaneseq
  %v76 = vshrl.u32 %v75, 7
  %v77 = vsub.s32 2, %v76
  %v78 = vrot.slane %v65, %v77
  %v79 = vlaneseq
  %v80 = vshrl.u32 %v79, 7
  %v81 = vsub.s32 3, %v80
  %v82 = vrot.slane %v65, %v81
  %v119 = vunpack.c.l.b16 %v33
  %v120 = vunpack.c.h.b16 %v33
  %v121 = vunpack.c.l.b16 %v34
  %v122 = vunpack.c.h.b16 %v34
  %v123 = vunpack.c.l.b16 %v35
  %v124 = vunpack.c.h.b16 %v35
  %v125 = vunpack.c.l.b16 %v36
  %v126 = vunpack.c.h.b16 %v36
  %v127 = vunpack.c.l.b16 %v37
  %v128 = vunpack.c.h.b16 %v37
  %v129 = vunpack.c.l.b16 %v38
  %v130 = vunpack.c.h.b16 %v38
  %v131 = vunpack.c.l.b16 %v39
  %v132 = vunpack.c.h.b16 %v39
  %v133 = vunpack.c.l.b16 %v40
  %v134 = vunpack.c.h.b16 %v40
  %v135 = vunpack.c.l.b16 %v41
  %v136 = vunpack.c.h.b16 %v41
  %v137 = vunpack.c.l.b16 %v42
  %v138 = vunpack.c.h.b16 %v42
  %v139 = vunpack.c.l.b16 %v43
  %v140 = vunpack.c.h.b16 %v43
  %v141 = vunpack.c.l.b16 %v44
  %v142 = vunpack.c.h.b16 %v44
  %v143 = vunpack.c.l.b16 %v45
  %v144 = vunpack.c.h.b16 %v45
  %v145 = vunpack.c.l.b16 %v46
  %v146 = vunpack.c.h.b16 %v46
  %v147 = vunpack.c.l.b16 %v47
  %v148 = vunpack.c.h.b16 %v47
  %v149 = vunpack.c.l.b16 %v48
  %v150 = vunpack.c.h.b16 %v48
  %v151 = vunpack.c.l.b16 %v49
  %v152 = vunpack.c.h.b16 %v49
  %v153 = vunpack.c.l.b16 %v50
  %v154 = vunpack.c.h.b16 %v50
  %v155 = vunpack.c.l.b16 %v51
  %v156 = vunpack.c.h.b16 %v51
  %v157 = vunpack.c.l.b16 %v52
  %v158 = vunpack.c.h.b16 %v52
  %v159 = vunpack.c.l.b16 %v53
  %v160 = vunpack.c.h.b16 %v53
  %v161 = vunpack.c.l.b16 %v54
  %v162 = vunpack.c.h.b16 %v54
  %v163 = vunpack.c.l.b16 %v55
  %v164 = vunpack.c.h.b16 %v55
  %v165 = vunpack.c.l.b16 %v56
  %v166 = vunpack.c.h.b16 %v56
  %v167 = vunpack.c.l.b16 %v57
  %v168 = vunpack.c.h.b16 %v57
  %v169 = vunpack.c.l.b16 %v58
  %v170 = vunpack.c.h.b16 %v58
  %v171 = vunpack.c.l.b16 %v59
  %v172 = vunpack.c.h.b16 %v59
  %v173 = vunpack.c.l.b16 %v60
  %v174 = vunpack.c.h.b16 %v60
  %v175 = vunpack.c.l.b16 %v61
  %v176 = vunpack.c.h.b16 %v61
  %v177 = vunpack.c.l.b16 %v62
  %v178 = vunpack.c.h.b16 %v62
  %v179 = vunpack.c.l.b16 %v63
  %v180 = vunpack.c.h.b16 %v63
  %v181 = vunpack.c.l.b16 %v64
  %v182 = vunpack.c.h.b16 %v64
  %v183 = vpack.c.b16 %v123, %v119
  %v184 = vpack.c.b16 %v124, %v120
  %v185 = vpack.c.b16 %v125, %v121
  %v186 = vpack.c.b16 %v126, %v122
  %v187 = vpack.c.b16 %v131, %v127
  %v188 = vpack.c.b16 %v132, %v128
  %v189 = vpack.c.b16 %v133, %v129
  %v190 = vpack.c.b16 %v134, %v130
  %v191 = vpack.c.b16 %v139, %v135
  %v192 = vpack.c.b16 %v140, %v136
  %v193 = vpack.c.b16 %v141, %v137
  %v194 = vpack.c.b16 %v142, %v138
  %v195 = vpack.c.b16 %v147, %v143
  %v196 = vpack.c.b16 %v148, %v144
  %v197 = vpack.c.b16 %v149, %v145
  %v198 = vpack.c.b16 %v150, %v146
  %v199 = vpack.c.b16 %v155, %v151
  %v200 = vpack.c.b16 %v156, %v152
  %v201 = vpack.c.b16 %v157, %v153
  %v202 = vpack.c.b16 %v158, %v154
  %v203 = vpack.c.b16 %v163, %v159
  %v204 = vpack.c.b16 %v164, %v160
  %v205 = vpack.c.b16 %v165, %v161
  %v206 = vpack.c.b16 %v166, %v162
  %v207 = vpack.c.b16 %v171, %v167
  %v208 = vpack.c.b16 %v172, %v168
  %v209 = vpack.c.b16 %v173, %v169
  %v210 = vpack.c.b16 %v174, %v170
  %v211 = vpack.c.b16 %v179, %v175
  %v212 = vpack.c.b16 %v180, %v176
  %v213 = vpack.c.b16 %v181, %v177
  %v214 = vpack.c.b16 %v182, %v178
  %247 = vmatprep.subr.bf16.mxu0 %v184
  %248 = vmatpush1.bf16.msra.mxu0 %v183
  %249 = vmatprep.subr.bf16.mxu0 %v188
  %250 = vmatpush1.bf16.msra.mxu0 %v187
  %251 = vmatprep.subr.bf16.mxu0 %v192
  %252 = vmatpush1.bf16.msra.mxu0 %v191
  %253 = vmatprep.subr.bf16.mxu0 %v196
  %254 = vmatpush1.bf16.msra.mxu0 %v195
  %255 = vmatprep.subr.bf16.mxu0 %v200
  %256 = vmatpush1.bf16.msra.mxu0 %v199
  %257 = vmatprep.subr.bf16.mxu0 %v204
  %258 = vmatpush1.bf16.msra.mxu0 %v203
  %259 = vmatprep.subr.bf16.mxu0 %v208
  %260 = vmatpush1.bf16.msra.mxu0 %v207
  %261 = vmatprep.subr.bf16.mxu0 %v212
  %262 = vmatpush1.bf16.msra.mxu0 %v211
  %263 = vmatprep.subr.bf16.mxu0 0
  %264 = vmatpush1.bf16.msra.mxu0 0
  %265 = vmatprep.subr.bf16.mxu0 0
  %266 = vmatpush1.bf16.msra.mxu0 0
  %267 = vmatprep.subr.bf16.mxu0 0
  %268 = vmatpush1.bf16.msra.mxu0 0
  %269 = vmatprep.subr.bf16.mxu0 0
  %270 = vmatpush1.bf16.msra.mxu0 0
  %271 = vmatprep.subr.bf16.mxu0 0
  %272 = vmatpush1.bf16.msra.mxu0 0
  %273 = vmatprep.subr.bf16.mxu0 0
  %274 = vmatpush1.bf16.msra.mxu0 0
  %275 = vmatprep.subr.bf16.mxu0 0
  %276 = vmatpush1.bf16.msra.mxu0 0
  %277 = vmatprep.subr.bf16.mxu0 0
  %278 = vmatpush1.bf16.msra.mxu0 0
  %279 = vmatprep.mubr.bf16.mxu0 0
  %280 = vmatmul.mubr.bf16.gmra.mrb[0].mxu0 %v32
  %v281 = vpop.f32.mrb[0].mxu0
  %v282 = vadd.f32 %v70, %v281
  %v283 = vpop.f32.mrb[0].mxu0
  %v284 = vadd.f32 %v74, %v283
  %v285 = vpop.f32.mrb[0].mxu0
  %v286 = vadd.f32 %v70, %v285
  %v287 = vpop.f32.mrb[0].mxu0
  %v288 = vadd.f32 %v74, %v287
  %289 = vdwg.mxu0
  %290 = vmatprep.subr.bf16.mxu0 %v186
  %291 = vmatpush1.bf16.msra.mxu0 %v185
  %292 = vmatprep.subr.bf16.mxu0 %v190
  %293 = vmatpush1.bf16.msra.mxu0 %v189
  %294 = vmatprep.subr.bf16.mxu0 %v194
  %295 = vmatpush1.bf16.msra.mxu0 %v193
  %296 = vmatprep.subr.bf16.mxu0 %v198
  %297 = vmatpush1.bf16.msra.mxu0 %v197
  %298 = vmatprep.subr.bf16.mxu0 %v202
  %299 = vmatpush1.bf16.msra.mxu0 %v201
  %300 = vmatprep.subr.bf16.mxu0 %v206
  %301 = vmatpush1.bf16.msra.mxu0 %v205
  %302 = vmatprep.subr.bf16.mxu0 %v210
  %303 = vmatpush1.bf16.msra.mxu0 %v209
  %304 = vmatprep.subr.bf16.mxu0 %v214
  %305 = vmatpush1.bf16.msra.mxu0 %v213
  %306 = vmatprep.subr.bf16.mxu0 0
  %307 = vmatpush1.bf16.msra.mxu0 0
  %308 = vmatprep.subr.bf16.mxu0 0
  %309 = vmatpush1.bf16.msra.mxu0 0
  %310 = vmatprep.subr.bf16.mxu0 0
  %311 = vmatpush1.bf16.msra.mxu0 0
  %312 = vmatprep.subr.bf16.mxu0 0
  %313 = vmatpush1.bf16.msra.mxu0 0
  %314 = vmatprep.subr.bf16.mxu0 0
  %315 = vmatpush1.bf16.msra.mxu0 0
  %316 = vmatprep.subr.bf16.mxu0 0
  %317 = vmatpush1.bf16.msra.mxu0 0
  %318 = vmatprep.subr.bf16.mxu0 0
  %319 = vmatpush1.bf16.msra.mxu0 0
  %320 = vmatprep.subr.bf16.mxu0 0
  %321 = vmatpush1.bf16.msra.mxu0 0
  %322 = vmatprep.mubr.bf16.mxu0 0
  %323 = vmatmul.mubr.bf16.gmra.mrb[0].mxu0 %v32
  %v324 = vpop.f32.mrb[0].mxu0
  %v325 = vadd.f32 %v78, %v324
  %v326 = vpop.f32.mrb[0].mxu0
  %v327 = vadd.f32 %v82, %v326
  %v328 = vpop.f32.mrb[0].mxu0
  %v329 = vadd.f32 %v78, %v328
  %v330 = vpop.f32.mrb[0].mxu0
  %v331 = vadd.f32 %v82, %v330
  %332 = vdwg.mxu0
  %v333 = vmul.f32 %v282, 0.5
  %v334 = vmul.f32 %v284, 0.5
  %v335 = vmul.f32 %v325, 0.5
  %v336 = vmul.f32 %v327, 0.5
  %v337 = vmul.f32 %v286, 0.5
  %v338 = vmul.f32 %v288, 0.5
  %v339 = vmul.f32 %v329, 0.5
  %v340 = vmul.f32 %v331, 0.5
  %v341 = vmul.f32 %v282, 0.044715
  %v342 = vmul.f32 %v284, 0.044715
  %v343 = vmul.f32 %v325, 0.044715
  %v344 = vmul.f32 %v327, 0.044715
  %v345 = vmul.f32 %v286, 0.044715
  %v346 = vmul.f32 %v288, 0.044715
  %v347 = vmul.f32 %v329, 0.044715
  %v348 = vmul.f32 %v331, 0.044715
  %v349 = vmul.f32 %v341, %v282
  %v350 = vmul.f32 %v342, %v284
  %v351 = vmul.f32 %v343, %v325
  %v352 = vmul.f32 %v344, %v327
  %v353 = vmul.f32 %v345, %v286
  %v354 = vmul.f32 %v346, %v288
  %v355 = vmul.f32 %v347, %v329
  %v356 = vmul.f32 %v348, %v331
  %v357 = vmul.f32 %v349, %v282
  %v358 = vmul.f32 %v350, %v284
  %v359 = vmul.f32 %v351, %v325
  %v360 = vmul.f32 %v352, %v327
  %v361 = vmul.f32 %v353, %v286
  %v362 = vmul.f32 %v354, %v288
  %v363 = vmul.f32 %v355, %v329
  %v364 = vmul.f32 %v356, %v331
  %v365 = vadd.f32 %v282, %v357
  %v366 = vadd.f32 %v284, %v358
  %v367 = vadd.f32 %v325, %v359
  %v368 = vadd.f32 %v327, %v360
  %v369 = vadd.f32 %v286, %v361
  %v370 = vadd.f32 %v288, %v362
  %v371 = vadd.f32 %v329, %v363
  %v372 = vadd.f32 %v331, %v364
  %v373 = vmul.f32 %v365, 0.7978846
  %v374 = vmul.f32 %v366, 0.7978846
  %v375 = vmul.f32 %v367, 0.7978846
  %v376 = vmul.f32 %v368, 0.7978846
  %v377 = vmul.f32 %v369, 0.7978846
  %v378 = vmul.f32 %v370, 0.7978846
  %v379 = vmul.f32 %v371, 0.7978846
  %v380 = vmul.f32 %v372, 0.7978846
  %v381 = vtanh.pop %v373
  %v382 = vtanh.pop %v374
  %v383 = vtanh.pop %v375
  %v384 = vtanh.pop %v376
  %v385 = vtanh.pop %v377
  %v386 = vtanh.pop %v378
  %v387 = vtanh.pop %v379
  %v388 = vtanh.pop %v380
  %v389 = vadd.f32 %v381, 1.0
  %v390 = vadd.f32 %v382, 1.0
  %v391 = vadd.f32 %v383, 1.0
  %v392 = vadd.f32 %v384, 1.0
  %v393 = vadd.f32 %v385, 1.0
  %v394 = vadd.f32 %v386, 1.0
  %v395 = vadd.f32 %v387, 1.0
  %v396 = vadd.f32 %v388, 1.0
  %v397 = vmul.f32 %v333, %v389
  %v398 = vmul.f32 %v334, %v390
  %v399 = vmul.f32 %v335, %v391
  %v400 = vmul.f32 %v336, %v392
  %v401 = vmul.f32 %v337, %v393
  %v402 = vmul.f32 %v338, %v394
  %v403 = vmul.f32 %v339, %v395
  %v404 = vmul.f32 %v340, %v396
  %v405 = vpack.c.bf16 %v401, %v397
  %v406 = vpack.c.bf16 %v402, %v398
  %v407 = vpack.c.bf16 %v403, %v399
  %v408 = vpack.c.bf16 %v404, %v400
  %v409 = vld [vmem:[%s4] sm:$0xf]
  %v410 = vld [vmem:[%s4 + $0x4] sm:$0xf]
  %v411 = vld [vmem:[%s4 + $0x8] sm:$0xf]
  %v412 = vld [vmem:[%s4 + $0xc] sm:$0xf]
  %v413 = vld [vmem:[%s4 + $0x10] sm:$0xf]
  %v414 = vld [vmem:[%s4 + $0x14] sm:$0xf]
  %v415 = vld [vmem:[%s4 + $0x18] sm:$0xf]
  %v416 = vld [vmem:[%s4 + $0x1c] sm:$0xf]
  %v417 = vld [vmem:[%s4 + $0x20] sm:$0xf]
  %v418 = vld [vmem:[%s4 + $0x24] sm:$0xf]
  %v419 = vld [vmem:[%s4 + $0x28] sm:$0xf]
  %v420 = vld [vmem:[%s4 + $0x2c] sm:$0xf]
  %v421 = vld [vmem:[%s4 + $0x30] sm:$0xf]
  %v422 = vld [vmem:[%s4 + $0x34] sm:$0xf]
  %v423 = vld [vmem:[%s4 + $0x38] sm:$0xf]
  %v424 = vld [vmem:[%s4 + $0x3c] sm:$0xf]
  %v425 = vld [vmem:[%s4 + $0x40] sm:$0xf]
  %v426 = vld [vmem:[%s4 + $0x44] sm:$0xf]
  %v427 = vld [vmem:[%s4 + $0x48] sm:$0xf]
  %v428 = vld [vmem:[%s4 + $0x4c] sm:$0xf]
  %v429 = vld [vmem:[%s4 + $0x50] sm:$0xf]
  %v430 = vld [vmem:[%s4 + $0x54] sm:$0xf]
  %v431 = vld [vmem:[%s4 + $0x58] sm:$0xf]
  %v432 = vld [vmem:[%s4 + $0x5c] sm:$0xf]
  %v433 = vld [vmem:[%s4 + $0x60] sm:$0xf]
  %v434 = vld [vmem:[%s4 + $0x64] sm:$0xf]
  %v435 = vld [vmem:[%s4 + $0x68] sm:$0xf]
  %v436 = vld [vmem:[%s4 + $0x6c] sm:$0xf]
  %v437 = vld [vmem:[%s4 + $0x70] sm:$0xf]
  %v438 = vld [vmem:[%s4 + $0x74] sm:$0xf]
  %v439 = vld [vmem:[%s4 + $0x78] sm:$0xf]
  %v440 = vld [vmem:[%s4 + $0x7c] sm:$0xf]
  %v441 = vld [vmem:[%s4 + $0x80] sm:$0xf]
  %v442 = vld [vmem:[%s4 + $0x84] sm:$0xf]
  %v443 = vld [vmem:[%s4 + $0x88] sm:$0xf]
  %v444 = vld [vmem:[%s4 + $0x8c] sm:$0xf]
  %v445 = vld [vmem:[%s4 + $0x90] sm:$0xf]
  %v446 = vld [vmem:[%s4 + $0x94] sm:$0xf]
  %v447 = vld [vmem:[%s4 + $0x98] sm:$0xf]
  %v448 = vld [vmem:[%s4 + $0x9c] sm:$0xf]
  %v449 = vld [vmem:[%s4 + $0xa0] sm:$0xf]
  %v450 = vld [vmem:[%s4 + $0xa4] sm:$0xf]
  %v451 = vld [vmem:[%s4 + $0xa8] sm:$0xf]
  %v452 = vld [vmem:[%s4 + $0xac] sm:$0xf]
  %v453 = vld [vmem:[%s4 + $0xb0] sm:$0xf]
  %v454 = vld [vmem:[%s4 + $0xb4] sm:$0xf]
  %v455 = vld [vmem:[%s4 + $0xb8] sm:$0xf]
  %v456 = vld [vmem:[%s4 + $0xbc] sm:$0xf]
  %v457 = vld [vmem:[%s4 + $0xc0] sm:$0xf]
  %v458 = vld [vmem:[%s4 + $0xc4] sm:$0xf]
  %v459 = vld [vmem:[%s4 + $0xc8] sm:$0xf]
  %v460 = vld [vmem:[%s4 + $0xcc] sm:$0xf]
  %v461 = vld [vmem:[%s4 + $0xd0] sm:$0xf]
  %v462 = vld [vmem:[%s4 + $0xd4] sm:$0xf]
  %v463 = vld [vmem:[%s4 + $0xd8] sm:$0xf]
  %v464 = vld [vmem:[%s4 + $0xdc] sm:$0xf]
  %v465 = vld [vmem:[%s4 + $0xe0] sm:$0xf]
  %v466 = vld [vmem:[%s4 + $0xe4] sm:$0xf]
  %v467 = vld [vmem:[%s4 + $0xe8] sm:$0xf]
  %v468 = vld [vmem:[%s4 + $0xec] sm:$0xf]
  %v469 = vld [vmem:[%s4 + $0xf0] sm:$0xf]
  %v470 = vld [vmem:[%s4 + $0xf4] sm:$0xf]
  %v471 = vld [vmem:[%s4 + $0xf8] sm:$0xf]
  %v472 = vld [vmem:[%s4 + $0xfc] sm:$0xf]
  %v473 = vld [vmem:[%s5] sm:$0x1]
  %v475 = vlaneseq
  %v476 = vshrl.u32 %v475, 7
  %v477 = vsub.s32 0, %v476
  %v478 = vrot.slane %v473, %v477
  %v544 = vunpack.c.l.b16 %v409
  %v545 = vunpack.c.l.b16 %v410
  %v546 = vunpack.c.l.b16 %v411
  %v547 = vunpack.c.l.b16 %v412
  %v548 = vunpack.c.l.b16 %v413
  %v549 = vunpack.c.l.b16 %v414
  %v550 = vunpack.c.l.b16 %v415
  %v551 = vunpack.c.l.b16 %v416
  %v552 = vunpack.c.l.b16 %v417
  %v553 = vunpack.c.l.b16 %v418
  %v554 = vunpack.c.l.b16 %v419
  %v555 = vunpack.c.l.b16 %v420
  %v556 = vunpack.c.l.b16 %v421
  %v557 = vunpack.c.l.b16 %v422
  %v558 = vunpack.c.l.b16 %v423
  %v559 = vunpack.c.l.b16 %v424
  %v560 = vunpack.c.l.b16 %v425
  %v561 = vunpack.c.l.b16 %v426
  %v562 = vunpack.c.l.b16 %v427
  %v563 = vunpack.c.l.b16 %v428
  %v564 = vunpack.c.l.b16 %v429
  %v565 = vunpack.c.l.b16 %v430
  %v566 = vunpack.c.l.b16 %v431
  %v567 = vunpack.c.l.b16 %v432
  %v568 = vunpack.c.l.b16 %v433
  %v569 = vunpack.c.l.b16 %v434
  %v570 = vunpack.c.l.b16 %v435
  %v571 = vunpack.c.l.b16 %v436
  %v572 = vunpack.c.l.b16 %v437
  %v573 = vunpack.c.l.b16 %v438
  %v574 = vunpack.c.l.b16 %v439
  %v575 = vunpack.c.l.b16 %v440
  %v576 = vunpack.c.l.b16 %v441
  %v577 = vunpack.c.l.b16 %v442
  %v578 = vunpack.c.l.b16 %v443
  %v579 = vunpack.c.l.b16 %v444
  %v580 = vunpack.c.l.b16 %v445
  %v581 = vunpack.c.l.b16 %v446
  %v582 = vunpack.c.l.b16 %v447
  %v583 = vunpack.c.l.b16 %v448
  %v584 = vunpack.c.l.b16 %v449
  %v585 = vunpack.c.l.b16 %v450
  %v586 = vunpack.c.l.b16 %v451
  %v587 = vunpack.c.l.b16 %v452
  %v588 = vunpack.c.l.b16 %v453
  %v589 = vunpack.c.l.b16 %v454
  %v590 = vunpack.c.l.b16 %v455
  %v591 = vunpack.c.l.b16 %v456
  %v592 = vunpack.c.l.b16 %v457
  %v593 = vunpack.c.l.b16 %v458
  %v594 = vunpack.c.l.b16 %v459
  %v595 = vunpack.c.l.b16 %v460
  %v596 = vunpack.c.l.b16 %v461
  %v597 = vunpack.c.l.b16 %v462
  %v598 = vunpack.c.l.b16 %v463
  %v599 = vunpack.c.l.b16 %v464
  %v600 = vunpack.c.l.b16 %v465
  %v601 = vunpack.c.l.b16 %v466
  %v602 = vunpack.c.l.b16 %v467
  %v603 = vunpack.c.l.b16 %v468
  %v604 = vunpack.c.l.b16 %v469
  %v605 = vunpack.c.l.b16 %v470
  %v606 = vunpack.c.l.b16 %v471
  %v607 = vunpack.c.l.b16 %v472
  %v608 = vpack.c.b16 %v545, %v544
  %v609 = vpack.c.b16 %v547, %v546
  %v610 = vpack.c.b16 %v549, %v548
  %v611 = vpack.c.b16 %v551, %v550
  %v612 = vpack.c.b16 %v553, %v552
  %v613 = vpack.c.b16 %v555, %v554
  %v614 = vpack.c.b16 %v557, %v556
  %v615 = vpack.c.b16 %v559, %v558
  %v616 = vpack.c.b16 %v561, %v560
  %v617 = vpack.c.b16 %v563, %v562
  %v618 = vpack.c.b16 %v565, %v564
  %v619 = vpack.c.b16 %v567, %v566
  %v620 = vpack.c.b16 %v569, %v568
  %v621 = vpack.c.b16 %v571, %v570
  %v622 = vpack.c.b16 %v573, %v572
  %v623 = vpack.c.b16 %v575, %v574
  %v624 = vpack.c.b16 %v577, %v576
  %v625 = vpack.c.b16 %v579, %v578
  %v626 = vpack.c.b16 %v581, %v580
  %v627 = vpack.c.b16 %v583, %v582
  %v628 = vpack.c.b16 %v585, %v584
  %v629 = vpack.c.b16 %v587, %v586
  %v630 = vpack.c.b16 %v589, %v588
  %v631 = vpack.c.b16 %v591, %v590
  %v632 = vpack.c.b16 %v593, %v592
  %v633 = vpack.c.b16 %v595, %v594
  %v634 = vpack.c.b16 %v597, %v596
  %v635 = vpack.c.b16 %v599, %v598
  %v636 = vpack.c.b16 %v601, %v600
  %v637 = vpack.c.b16 %v603, %v602
  %v638 = vpack.c.b16 %v605, %v604
  %v639 = vpack.c.b16 %v607, %v606
  %672 = vmatprep.subr.bf16.mxu0 0
  %673 = vmatpush1.bf16.msra.mxu0 %v608
  %674 = vmatprep.subr.bf16.mxu0 0
  %675 = vmatpush1.bf16.msra.mxu0 %v609
  %676 = vmatprep.subr.bf16.mxu0 0
  %677 = vmatpush1.bf16.msra.mxu0 %v610
  %678 = vmatprep.subr.bf16.mxu0 0
  %679 = vmatpush1.bf16.msra.mxu0 %v611
  %680 = vmatprep.subr.bf16.mxu0 0
  %681 = vmatpush1.bf16.msra.mxu0 %v612
  %682 = vmatprep.subr.bf16.mxu0 0
  %683 = vmatpush1.bf16.msra.mxu0 %v613
  %684 = vmatprep.subr.bf16.mxu0 0
  %685 = vmatpush1.bf16.msra.mxu0 %v614
  %686 = vmatprep.subr.bf16.mxu0 0
  %687 = vmatpush1.bf16.msra.mxu0 %v615
  %688 = vmatprep.subr.bf16.mxu0 0
  %689 = vmatpush1.bf16.msra.mxu0 %v616
  %690 = vmatprep.subr.bf16.mxu0 0
  %691 = vmatpush1.bf16.msra.mxu0 %v617
  %692 = vmatprep.subr.bf16.mxu0 0
  %693 = vmatpush1.bf16.msra.mxu0 %v618
  %694 = vmatprep.subr.bf16.mxu0 0
  %695 = vmatpush1.bf16.msra.mxu0 %v619
  %696 = vmatprep.subr.bf16.mxu0 0
  %697 = vmatpush1.bf16.msra.mxu0 %v620
  %698 = vmatprep.subr.bf16.mxu0 0
  %699 = vmatpush1.bf16.msra.mxu0 %v621
  %700 = vmatprep.subr.bf16.mxu0 0
  %701 = vmatpush1.bf16.msra.mxu0 %v622
  %702 = vmatprep.subr.bf16.mxu0 0
  %703 = vmatpush1.bf16.msra.mxu0 %v623
  %704 = vmatprep.mubr.bf16.mxu0 %v406
  %705 = vmatmul.mubr.bf16.gmra.mrb[0].mxu0 %v405
  %v706 = vpop.f32.mrb[0].mxu0
  %v707 = vadd.f32 %v478, %v706
  %v708 = vpop.f32.mrb[0].mxu0
  %v709 = vpop.f32.mrb[0].mxu0
  %v710 = vadd.f32 %v478, %v709
  %v711 = vpop.f32.mrb[0].mxu0
  %712 = vdwg.mxu0
  %713 = vmatprep.subr.bf16.mxu0 0
  %714 = vmatpush1.bf16.msra.mxu0 %v624
  %715 = vmatprep.subr.bf16.mxu0 0
  %716 = vmatpush1.bf16.msra.mxu0 %v625
  %717 = vmatprep.subr.bf16.mxu0 0
  %718 = vmatpush1.bf16.msra.mxu0 %v626
  %719 = vmatprep.subr.bf16.mxu0 0
  %720 = vmatpush1.bf16.msra.mxu0 %v627
  %721 = vmatprep.subr.bf16.mxu0 0
  %722 = vmatpush1.bf16.msra.mxu0 %v628
  %723 = vmatprep.subr.bf16.mxu0 0
  %724 = vmatpush1.bf16.msra.mxu0 %v629
  %725 = vmatprep.subr.bf16.mxu0 0
  %726 = vmatpush1.bf16.msra.mxu0 %v630
  %727 = vmatprep.subr.bf16.mxu0 0
  %728 = vmatpush1.bf16.msra.mxu0 %v631
  %729 = vmatprep.subr.bf16.mxu0 0
  %730 = vmatpush1.bf16.msra.mxu0 %v632
  %731 = vmatprep.subr.bf16.mxu0 0
  %732 = vmatpush1.bf16.msra.mxu0 %v633
  %733 = vmatprep.subr.bf16.mxu0 0
  %734 = vmatpush1.bf16.msra.mxu0 %v634
  %735 = vmatprep.subr.bf16.mxu0 0
  %736 = vmatpush1.bf16.msra.mxu0 %v635
  %737 = vmatprep.subr.bf16.mxu0 0
  %738 = vmatpush1.bf16.msra.mxu0 %v636
  %739 = vmatprep.subr.bf16.mxu0 0
  %740 = vmatpush1.bf16.msra.mxu0 %v637
  %741 = vmatprep.subr.bf16.mxu0 0
  %742 = vmatpush1.bf16.msra.mxu0 %v638
  %743 = vmatprep.subr.bf16.mxu0 0
  %744 = vmatpush1.bf16.msra.mxu0 %v639
  %745 = vmatprep.mubr.bf16.mxu0 %v408
  %746 = vmatmul.mubr.bf16.gmra.mrb[0].mxu0 %v407
  %v747 = vpop.f32.mrb[0].mxu0
  %v748 = vadd.f32 %v707, %v747
  %v749 = vpop.f32.mrb[0].mxu0
  %v750 = vpop.f32.mrb[0].mxu0
  %v751 = vadd.f32 %v710, %v750
  %v752 = vpop.f32.mrb[0].mxu0
  %753 = vdwg.mxu0
  %v754 = vld [vmem:[%s1] sm:$0xff]
  %v755 = vld [vmem:[%s1 + $0x8] sm:$0xff]
  %v756 = vadd.f32 %v748, %v754
  %v757 = vadd.f32 %v751, %v755
  %v758 = vld [vmem:[%s6] sm:$0x1]
  %v759 = vld [vmem:[%s7] sm:$0x1]
  %760 = vadd.xlane.f32.xlu0 %v756
  %v761 = vpop.xlane.xlu0 %760
  %762 = vadd.xlane.f32.xlu0 %v757
  %v763 = vpop.xlane.xlu0 %762
  %v764 = vrcp.pop 128.0
  %v765 = vmul.f32 %v761, %v764
  %v766 = vmul.f32 %v763, %v764
  %v767 = vsub.f32 %v756, %v765
  %v768 = vsub.f32 %v757, %v766
  %v769 = vmul.f32 %v767, %v767
  %v770 = vmul.f32 %v768, %v768
  %771 = vadd.xlane.f32.xlu0 %v769
  %v772 = vpop.xlane.xlu0 %771
  %773 = vadd.xlane.f32.xlu0 %v770
  %v774 = vpop.xlane.xlu0 %773
  %v775 = vmul.f32 %v772, %v764
  %v776 = vmul.f32 %v774, %v764
  %v777 = vadd.f32 %v775, 1e-05
  %v778 = vadd.f32 %v776, 1e-05
  %v779 = vrsqrt.pop %v777
  %v780 = vrsqrt.pop %v778
  %v781 = vmul.f32 %v767, %v779
  %v782 = vmul.f32 %v768, %v780
  %v784 = vlaneseq
  %v785 = vshrl.u32 %v784, 7
  %v786 = vsub.s32 0, %v785
  %v787 = vrot.slane %v758, %v786
  %v789 = vmul.f32 %v781, %v787
  %v790 = vmul.f32 %v782, %v787
  %v792 = vlaneseq
  %v793 = vshrl.u32 %v792, 7
  %v794 = vsub.s32 0, %v793
  %v795 = vrot.slane %v759, %v794
  %v797 = vadd.f32 %v789, %v795
  %v798 = vadd.f32 %v790, %v795
  %799 = vst [vmem:[%s8] sm:$0xff] %v797
  %800 = vst [vmem:[%s8 + $0x8] sm:$0xff] %v798
  // Predicated region
  $region34: #{gpt2_forward.8} parent=0 // pred_check
    _
  $region35: #{gpt2_forward.8} parent=0 // pred_check_branch
    %802 = sbr.rel (0) target = $region37
  $region36: #{gpt2_forward.8} parent=0 // pred_region
    _
  $region37: #{gpt2_forward.8} parent=0 // pred_fallthru
    _
  // Predicated region
  $region38: #{gpt2_forward.8} parent=0 // pred_check
    _
  $region39: #{gpt2_forward.8} parent=0 // pred_check_branch
    %804 = sbr.rel (0) target = $region41
  $region40: #{gpt2_forward.8} parent=0 // pred_region
    _
  $region41: #{gpt2_forward.8} parent=0 // pred_fallthru
    _

// kernel: gpt2_forward.6
$region0: #{gpt2_forward.6}
  #allocation0 [shape = 'u32[]', space=smem, size = 0x4, offset = 0x4, fixed_abs, tag = 'smem constant byte address 0x4 - core index']
  #allocation1 [shape = 'u32[144,128]{1,0:T(1,128)}', space=vmem, size = 0x12000, scoped, tag = 'internal scratch']
  %s0 = inlined_call_operand.vmem [shape: f32[16,128], index: 0, kind: input, shape index: {}]
  %s1 = inlined_call_operand.vmem [shape: f32[16,128], index: 1, kind: input, shape index: {}]
  %s2 = inlined_call_operand.vmem [shape: bf16[128,512], index: 2, kind: input, shape index: {}]
  %s3 = inlined_call_operand.vmem [shape: f32[1,512], index: 3, kind: input, shape index: {}]
  %s4 = inlined_call_operand.hbm [shape: bf16[512,128], index: 4, kind: input, shape index: {}]
  %s5 = inlined_call_operand.vmem [shape: f32[1,128], index: 5, kind: input, shape index: {}]
  %s6 = inlined_call_operand.vmem [shape: f32[1,128], index: 6, kind: input, shape index: {}]
  %s7 = inlined_call_operand.vmem [shape: f32[1,128], index: 7, kind: input, shape index: {}]
  %s8 = inlined_call_operand.vmem [shape: f32[16,128], index: 8, kind: output, shape index: {}]
  %s9 = sld [smem:[#allocation0]]
  $region46: #{gpt2_forward.6} parent=0
    _
  %s11 = ssub.s32 1, %s9
  %s12 = scalar_select 0, %s11, %s9
  $region1: #{gpt2_forward.6} parent=0
    #allocation2 [shape = 'u8[131072]{0}', space=vmem, size = 0x20000, scoped, tag = 'input window, operand 4, single buffered']
    #allocation3 [shape = 's32[1]{0}', space=sflag, size = 0x4, scoped, tag = 'scoped memory for gpt2_forward.6']
    %13 = vsyncpa [#allocation3], 0
    // Predicated region
    $region2: #{gpt2_forward.6} parent=1 // pred_check
      _
    $region3: #{gpt2_forward.6} parent=1 // pred_check_branch
      %15 = sbr.rel (0) target = $region5
    $region4: #{gpt2_forward.6} parent=1 // pred_region
      _
    $region5: #{gpt2_forward.6} parent=1 // pred_fallthru
      _
    // Predicated region
    $region6: #{gpt2_forward.6} parent=1 // pred_check
      _
    $region7: #{gpt2_forward.6} parent=1 // pred_check_branch
      %17 = sbr.rel (0) target = $region9
    $region8: #{gpt2_forward.6} parent=1 // pred_region
      _
    $region9: #{gpt2_forward.6} parent=1 // pred_fallthru
      _
    // Predicated region
    $region10: #{gpt2_forward.6} parent=1 // pred_check
      _
    $region11: #{gpt2_forward.6} parent=1 // pred_check_branch
      %19 = sbr.rel (0) target = $region13
    $region12: #{gpt2_forward.6} parent=1 // pred_region
      _
    $region13: #{gpt2_forward.6} parent=1 // pred_fallthru
      _
    // Predicated region
    $region14: #{gpt2_forward.6} parent=1 // pred_check
      _
    $region15: #{gpt2_forward.6} parent=1 // pred_check_branch
      %21 = sbr.rel (0) target = $region17
    $region16: #{gpt2_forward.6} parent=1 // pred_region
      _
    $region17: #{gpt2_forward.6} parent=1 // pred_fallthru
      _
    // Predicated region
    $region18: #{gpt2_forward.6} parent=1 // pred_check
      _
    $region19: #{gpt2_forward.6} parent=1 // pred_check_branch
      %23 = sbr.rel (0) target = $region21
    $region20: #{gpt2_forward.6} parent=1 // pred_region
      %s25 = ssub.s32 4096, 4096
      %26 = vsyncadd [#allocation3], %s25
      %s27 = sshll.u32 [#allocation2], 4
      %s28 = int_to_ptr.vmem [resolvable:$true] %s27
      %33 = dma.hbm_to_vmem [thread:$0]  %s4, 4096, %s28, [#allocation3], 64, 64, 4
    $region21: #{gpt2_forward.6} parent=1 // pred_fallthru
      _
    // Predicated region
    $region22: #{gpt2_forward.6} parent=1 // pred_check
      _
    $region23: #{gpt2_forward.6} parent=1 // pred_check_branch
      %35 = sbr.rel (0) target = $region25
    $region24: #{gpt2_forward.6} parent=1 // pred_region
      _
    $region25: #{gpt2_forward.6} parent=1 // pred_fallthru
      _
    // Predicated region
    $region26: #{gpt2_forward.6} parent=1 // pred_check
      _
    $region27: #{gpt2_forward.6} parent=1 // pred_check_branch
      %37 = sbr.rel (0) target = $region29
    $region28: #{gpt2_forward.6} parent=1 // pred_region
      _
    $region29: #{gpt2_forward.6} parent=1 // pred_fallthru
      _
    // Predicated region
    $region30: #{gpt2_forward.6} parent=1 // pred_check
      _
    $region31: #{gpt2_forward.6} parent=1 // pred_check_branch
      %39 = sbr.rel (0) target = $region33
    $region32: #{gpt2_forward.6} parent=1 // pred_region
      _
    $region33: #{gpt2_forward.6} parent=1 // pred_fallthru
      _
    // Predicated region
    $region34: #{gpt2_forward.6} parent=1 // pred_check
      _
    $region35: #{gpt2_forward.6} parent=1 // pred_check_branch
      %41 = sbr.rel (0) target = $region37
    $region36: #{gpt2_forward.6} parent=1 // pred_region
      %42 = dma.done [#allocation3], 4096
    $region37: #{gpt2_forward.6} parent=1 // pred_fallthru
      _
    %v44 = vld [vmem:[%s0] sm:$0xff]
    %v45 = vld [vmem:[%s0 + $0x8] sm:$0xff]
    %v46 = vpack.c.bf16 %v45, %v44
    %v47 = vld [vmem:[%s2] sm:$0xff]
    %v48 = vld [vmem:[%s2 + $0x8] sm:$0xff]
    %v49 = vld [vmem:[%s2 + $0x10] sm:$0xff]
    %v50 = vld [vmem:[%s2 + $0x18] sm:$0xff]
    %v51 = vld [vmem:[%s2 + $0x20] sm:$0xff]
    %v52 = vld [vmem:[%s2 + $0x28] sm:$0xff]
    %v53 = vld [vmem:[%s2 + $0x30] sm:$0xff]
    %v54 = vld [vmem:[%s2 + $0x38] sm:$0xff]
    %v55 = vld [vmem:[%s2 + $0x40] sm:$0xff]
    %v56 = vld [vmem:[%s2 + $0x48] sm:$0xff]
    %v57 = vld [vmem:[%s2 + $0x50] sm:$0xff]
    %v58 = vld [vmem:[%s2 + $0x58] sm:$0xff]
    %v59 = vld [vmem:[%s2 + $0x60] sm:$0xff]
    %v60 = vld [vmem:[%s2 + $0x68] sm:$0xff]
    %v61 = vld [vmem:[%s2 + $0x70] sm:$0xff]
    %v62 = vld [vmem:[%s2 + $0x78] sm:$0xff]
    %v63 = vld [vmem:[%s2 + $0x80] sm:$0xff]
    %v64 = vld [vmem:[%s2 + $0x88] sm:$0xff]
    %v65 = vld [vmem:[%s2 + $0x90] sm:$0xff]
    %v66 = vld [vmem:[%s2 + $0x98] sm:$0xff]
    %v67 = vld [vmem:[%s2 + $0xa0] sm:$0xff]
    %v68 = vld [vmem:[%s2 + $0xa8] sm:$0xff]
    %v69 = vld [vmem:[%s2 + $0xb0] sm:$0xff]
    %v70 = vld [vmem:[%s2 + $0xb8] sm:$0xff]
    %v71 = vld [vmem:[%s2 + $0xc0] sm:$0xff]
    %v72 = vld [vmem:[%s2 + $0xc8] sm:$0xff]
    %v73 = vld [vmem:[%s2 + $0xd0] sm:$0xff]
    %v74 = vld [vmem:[%s2 + $0xd8] sm:$0xff]
    %v75 = vld [vmem:[%s2 + $0xe0] sm:$0xff]
    %v76 = vld [vmem:[%s2 + $0xe8] sm:$0xff]
    %v77 = vld [vmem:[%s2 + $0xf0] sm:$0xff]
    %v78 = vld [vmem:[%s2 + $0xf8] sm:$0xff]
    %v79 = vld [vmem:[%s3] sm:$0xf]
    %v81 = vlaneseq
    %v82 = vshrl.u32 %v81, 7
    %v83 = vsub.s32 0, %v82
    %v84 = vrot.slane %v79, %v83
    %v85 = vlaneseq
    %v86 = vshrl.u32 %v85, 7
    %v87 = vsub.s32 1, %v86
    %v88 = vrot.slane %v79, %v87
    %v89 = vlaneseq
    %v90 = vshrl.u32 %v89, 7
    %v91 = vsub.s32 2, %v90
    %v92 = vrot.slane %v79, %v91
    %v93 = vlaneseq
    %v94 = vshrl.u32 %v93, 7
    %v95 = vsub.s32 3, %v94
    %v96 = vrot.slane %v79, %v95
    %v133 = vunpack.c.l.b16 %v47
    %v134 = vunpack.c.h.b16 %v47
    %v135 = vunpack.c.l.b16 %v48
    %v136 = vunpack.c.h.b16 %v48
    %v137 = vunpack.c.l.b16 %v49
    %v138 = vunpack.c.h.b16 %v49
    %v139 = vunpack.c.l.b16 %v50
    %v140 = vunpack.c.h.b16 %v50
    %v141 = vunpack.c.l.b16 %v51
    %v142 = vunpack.c.h.b16 %v51
    %v143 = vunpack.c.l.b16 %v52
    %v144 = vunpack.c.h.b16 %v52
    %v145 = vunpack.c.l.b16 %v53
    %v146 = vunpack.c.h.b16 %v53
    %v147 = vunpack.c.l.b16 %v54
    %v148 = vunpack.c.h.b16 %v54
    %v149 = vunpack.c.l.b16 %v55
    %v150 = vunpack.c.h.b16 %v55
    %v151 = vunpack.c.l.b16 %v56
    %v152 = vunpack.c.h.b16 %v56
    %v153 = vunpack.c.l.b16 %v57
    %v154 = vunpack.c.h.b16 %v57
    %v155 = vunpack.c.l.b16 %v58
    %v156 = vunpack.c.h.b16 %v58
    %v157 = vunpack.c.l.b16 %v59
    %v158 = vunpack.c.h.b16 %v59
    %v159 = vunpack.c.l.b16 %v60
    %v160 = vunpack.c.h.b16 %v60
    %v161 = vunpack.c.l.b16 %v61
    %v162 = vunpack.c.h.b16 %v61
    %v163 = vunpack.c.l.b16 %v62
    %v164 = vunpack.c.h.b16 %v62
    %v165 = vunpack.c.l.b16 %v63
    %v166 = vunpack.c.h.b16 %v63
    %v167 = vunpack.c.l.b16 %v64
    %v168 = vunpack.c.h.b16 %v64
    %v169 = vunpack.c.l.b16 %v65
    %v170 = vunpack.c.h.b16 %v65
    %v171 = vunpack.c.l.b16 %v66
    %v172 = vunpack.c.h.b16 %v66
    %v173 = vunpack.c.l.b16 %v67
    %v174 = vunpack.c.h.b16 %v67
    %v175 = vunpack.c.l.b16 %v68
    %v176 = vunpack.c.h.b16 %v68
    %v177 = vunpack.c.l.b16 %v69
    %v178 = vunpack.c.h.b16 %v69
    %v179 = vunpack.c.l.b16 %v70
    %v180 = vunpack.c.h.b16 %v70
    %v181 = vunpack.c.l.b16 %v71
    %v182 = vunpack.c.h.b16 %v71
    %v183 = vunpack.c.l.b16 %v72
    %v184 = vunpack.c.h.b16 %v72
    %v185 = vunpack.c.l.b16 %v73
    %v186 = vunpack.c.h.b16 %v73
    %v187 = vunpack.c.l.b16 %v74
    %v188 = vunpack.c.h.b16 %v74
    %v189 = vunpack.c.l.b16 %v75
    %v190 = vunpack.c.h.b16 %v75
    %v191 = vunpack.c.l.b16 %v76
    %v192 = vunpack.c.h.b16 %v76
    %v193 = vunpack.c.l.b16 %v77
    %v194 = vunpack.c.h.b16 %v77
    %v195 = vunpack.c.l.b16 %v78
    %v196 = vunpack.c.h.b16 %v78
    %v197 = vpack.c.b16 %v137, %v133
    %v198 = vpack.c.b16 %v138, %v134
    %v199 = vpack.c.b16 %v139, %v135
    %v200 = vpack.c.b16 %v140, %v136
    %v201 = vpack.c.b16 %v145, %v141
    %v202 = vpack.c.b16 %v146, %v142
    %v203 = vpack.c.b16 %v147, %v143
    %v204 = vpack.c.b16 %v148, %v144
    %v205 = vpack.c.b16 %v153, %v149
    %v206 = vpack.c.b16 %v154, %v150
    %v207 = vpack.c.b16 %v155, %v151
    %v208 = vpack.c.b16 %v156, %v152
    %v209 = vpack.c.b16 %v161, %v157
    %v210 = vpack.c.b16 %v162, %v158
    %v211 = vpack.c.b16 %v163, %v159
    %v212 = vpack.c.b16 %v164, %v160
    %v213 = vpack.c.b16 %v169, %v165
    %v214 = vpack.c.b16 %v170, %v166
    %v215 = vpack.c.b16 %v171, %v167
    %v216 = vpack.c.b16 %v172, %v168
    %v217 = vpack.c.b16 %v177, %v173
    %v218 = vpack.c.b16 %v178, %v174
    %v219 = vpack.c.b16 %v179, %v175
    %v220 = vpack.c.b16 %v180, %v176
    %v221 = vpack.c.b16 %v185, %v181
    %v222 = vpack.c.b16 %v186, %v182
    %v223 = vpack.c.b16 %v187, %v183
    %v224 = vpack.c.b16 %v188, %v184
    %v225 = vpack.c.b16 %v193, %v189
    %v226 = vpack.c.b16 %v194, %v190
    %v227 = vpack.c.b16 %v195, %v191
    %v228 = vpack.c.b16 %v196, %v192
    %261 = vmatprep.subr.bf16.mxu0 %v198
    %262 = vmatpush1.bf16.msra.mxu0 %v197
    %263 = vmatprep.subr.bf16.mxu0 %v202
    %264 = vmatpush1.bf16.msra.mxu0 %v201
    %265 = vmatprep.subr.bf16.mxu0 %v206
    %266 = vmatpush1.bf16.msra.mxu0 %v205
    %267 = vmatprep.subr.bf16.mxu0 %v210
    %268 = vmatpush1.bf16.msra.mxu0 %v209
    %269 = vmatprep.subr.bf16.mxu0 %v214
    %270 = vmatpush1.bf16.msra.mxu0 %v213
    %271 = vmatprep.subr.bf16.mxu0 %v218
    %272 = vmatpush1.bf16.msra.mxu0 %v217
    %273 = vmatprep.subr.bf16.mxu0 %v222
    %274 = vmatpush1.bf16.msra.mxu0 %v221
    %275 = vmatprep.subr.bf16.mxu0 %v226
    %276 = vmatpush1.bf16.msra.mxu0 %v225
    %277 = vmatprep.subr.bf16.mxu0 0
    %278 = vmatpush1.bf16.msra.mxu0 0
    %279 = vmatprep.subr.bf16.mxu0 0
    %280 = vmatpush1.bf16.msra.mxu0 0
    %281 = vmatprep.subr.bf16.mxu0 0
    %282 = vmatpush1.bf16.msra.mxu0 0
    %283 = vmatprep.subr.bf16.mxu0 0
    %284 = vmatpush1.bf16.msra.mxu0 0
    %285 = vmatprep.subr.bf16.mxu0 0
    %286 = vmatpush1.bf16.msra.mxu0 0
    %287 = vmatprep.subr.bf16.mxu0 0
    %288 = vmatpush1.bf16.msra.mxu0 0
    %289 = vmatprep.subr.bf16.mxu0 0
    %290 = vmatpush1.bf16.msra.mxu0 0
    %291 = vmatprep.subr.bf16.mxu0 0
    %292 = vmatpush1.bf16.msra.mxu0 0
    %293 = vmatprep.mubr.bf16.mxu0 0
    %294 = vmatmul.mubr.bf16.gmra.mrb[0].mxu0 %v46
    %v295 = vpop.f32.mrb[0].mxu0
    %v296 = vadd.f32 %v84, %v295
    %v297 = vpop.f32.mrb[0].mxu0
    %v298 = vadd.f32 %v88, %v297
    %v299 = vpop.f32.mrb[0].mxu0
    %v300 = vadd.f32 %v84, %v299
    %v301 = vpop.f32.mrb[0].mxu0
    %v302 = vadd.f32 %v88, %v301
    %303 = vdwg.mxu0
    %304 = vmatprep.subr.bf16.mxu0 %v200
    %305 = vmatpush1.bf16.msra.mxu0 %v199
    %306 = vmatprep.subr.bf16.mxu0 %v204
    %307 = vmatpush1.bf16.msra.mxu0 %v203
    %308 = vmatprep.subr.bf16.mxu0 %v208
    %309 = vmatpush1.bf16.msra.mxu0 %v207
    %310 = vmatprep.subr.bf16.mxu0 %v212
    %311 = vmatpush1.bf16.msra.mxu0 %v211
    %312 = vmatprep.subr.bf16.mxu0 %v216
    %313 = vmatpush1.bf16.msra.mxu0 %v215
    %314 = vmatprep.subr.bf16.mxu0 %v220
    %315 = vmatpush1.bf16.msra.mxu0 %v219
    %316 = vmatprep.subr.bf16.mxu0 %v224
    %317 = vmatpush1.bf16.msra.mxu0 %v223
    %318 = vmatprep.subr.bf16.mxu0 %v228
    %319 = vmatpush1.bf16.msra.mxu0 %v227
    %320 = vmatprep.subr.bf16.mxu0 0
    %321 = vmatpush1.bf16.msra.mxu0 0
    %322 = vmatprep.subr.bf16.mxu0 0
    %323 = vmatpush1.bf16.msra.mxu0 0
    %324 = vmatprep.subr.bf16.mxu0 0
    %325 = vmatpush1.bf16.msra.mxu0 0
    %326 = vmatprep.subr.bf16.mxu0 0
    %327 = vmatpush1.bf16.msra.mxu0 0
    %328 = vmatprep.subr.bf16.mxu0 0
    %329 = vmatpush1.bf16.msra.mxu0 0
    %330 = vmatprep.subr.bf16.mxu0 0
    %331 = vmatpush1.bf16.msra.mxu0 0
    %332 = vmatprep.subr.bf16.mxu0 0
    %333 = vmatpush1.bf16.msra.mxu0 0
    %334 = vmatprep.subr.bf16.mxu0 0
    %335 = vmatpush1.bf16.msra.mxu0 0
    %336 = vmatprep.mubr.bf16.mxu0 0
    %337 = vmatmul.mubr.bf16.gmra.mrb[0].mxu0 %v46
    %v338 = vpop.f32.mrb[0].mxu0
    %v339 = vadd.f32 %v92, %v338
    %v340 = vpop.f32.mrb[0].mxu0
    %v341 = vadd.f32 %v96, %v340
    %v342 = vpop.f32.mrb[0].mxu0
    %v343 = vadd.f32 %v92, %v342
    %v344 = vpop.f32.mrb[0].mxu0
    %v345 = vadd.f32 %v96, %v344
    %346 = vdwg.mxu0
    %v347 = vmul.f32 %v296, 0.5
    %v348 = vmul.f32 %v298, 0.5
    %v349 = vmul.f32 %v339, 0.5
    %v350 = vmul.f32 %v341, 0.5
    %v351 = vmul.f32 %v300, 0.5
    %v352 = vmul.f32 %v302, 0.5
    %v353 = vmul.f32 %v343, 0.5
    %v354 = vmul.f32 %v345, 0.5
    %v355 = vmul.f32 %v296, 0.044715
    %v356 = vmul.f32 %v298, 0.044715
    %v357 = vmul.f32 %v339, 0.044715
    %v358 = vmul.f32 %v341, 0.044715
    %v359 = vmul.f32 %v300, 0.044715
    %v360 = vmul.f32 %v302, 0.044715
    %v361 = vmul.f32 %v343, 0.044715
    %v362 = vmul.f32 %v345, 0.044715
    %v363 = vmul.f32 %v355, %v296
    %v364 = vmul.f32 %v356, %v298
    %v365 = vmul.f32 %v357, %v339
    %v366 = vmul.f32 %v358, %v341
    %v367 = vmul.f32 %v359, %v300
    %v368 = vmul.f32 %v360, %v302
    %v369 = vmul.f32 %v361, %v343
    %v370 = vmul.f32 %v362, %v345
    %v371 = vmul.f32 %v363, %v296
    %v372 = vmul.f32 %v364, %v298
    %v373 = vmul.f32 %v365, %v339
    %v374 = vmul.f32 %v366, %v341
    %v375 = vmul.f32 %v367, %v300
    %v376 = vmul.f32 %v368, %v302
    %v377 = vmul.f32 %v369, %v343
    %v378 = vmul.f32 %v370, %v345
    %v379 = vadd.f32 %v296, %v371
    %v380 = vadd.f32 %v298, %v372
    %v381 = vadd.f32 %v339, %v373
    %v382 = vadd.f32 %v341, %v374
    %v383 = vadd.f32 %v300, %v375
    %v384 = vadd.f32 %v302, %v376
    %v385 = vadd.f32 %v343, %v377
    %v386 = vadd.f32 %v345, %v378
    %v387 = vmul.f32 %v379, 0.7978846
    %v388 = vmul.f32 %v380, 0.7978846
    %v389 = vmul.f32 %v381, 0.7978846
    %v390 = vmul.f32 %v382, 0.7978846
    %v391 = vmul.f32 %v383, 0.7978846
    %v392 = vmul.f32 %v384, 0.7978846
    %v393 = vmul.f32 %v385, 0.7978846
    %v394 = vmul.f32 %v386, 0.7978846
    %v395 = vtanh.pop %v387
    %v396 = vtanh.pop %v388
    %v397 = vtanh.pop %v389
    %v398 = vtanh.pop %v390
    %v399 = vtanh.pop %v391
    %v400 = vtanh.pop %v392
    %v401 = vtanh.pop %v393
    %v402 = vtanh.pop %v394
    %v403 = vadd.f32 %v395, 1.0
    %v404 = vadd.f32 %v396, 1.0
    %v405 = vadd.f32 %v397, 1.0
    %v406 = vadd.f32 %v398, 1.0
    %v407 = vadd.f32 %v399, 1.0
    %v408 = vadd.f32 %v400, 1.0
    %v409 = vadd.f32 %v401, 1.0
    %v410 = vadd.f32 %v402, 1.0
    %v411 = vmul.f32 %v347, %v403
    %v412 = vmul.f32 %v348, %v404
    %v413 = vmul.f32 %v349, %v405
    %v414 = vmul.f32 %v350, %v406
    %v415 = vmul.f32 %v351, %v407
    %v416 = vmul.f32 %v352, %v408
    %v417 = vmul.f32 %v353, %v409
    %v418 = vmul.f32 %v354, %v410
    %v419 = vpack.c.bf16 %v415, %v411
    %v420 = vpack.c.bf16 %v416, %v412
    %v421 = vpack.c.bf16 %v417, %v413
    %v422 = vpack.c.bf16 %v418, %v414
    %v423 = vld [vmem:[#allocation2] sm:$0xf]
    %v424 = vld [vmem:[#allocation2 + $0x4] sm:$0xf]
    %v425 = vld [vmem:[#allocation2 + $0x8] sm:$0xf]
    %v426 = vld [vmem:[#allocation2 + $0xc] sm:$0xf]
    %v427 = vld [vmem:[#allocation2 + $0x10] sm:$0xf]
    %v428 = vld [vmem:[#allocation2 + $0x14] sm:$0xf]
    %v429 = vld [vmem:[#allocation2 + $0x18] sm:$0xf]
    %v430 = vld [vmem:[#allocation2 + $0x1c] sm:$0xf]
    %v431 = vld [vmem:[#allocation2 + $0x20] sm:$0xf]
    %v432 = vld [vmem:[#allocation2 + $0x24] sm:$0xf]
    %v433 = vld [vmem:[#allocation2 + $0x28] sm:$0xf]
    %v434 = vld [vmem:[#allocation2 + $0x2c] sm:$0xf]
    %v435 = vld [vmem:[#allocation2 + $0x30] sm:$0xf]
    %v436 = vld [vmem:[#allocation2 + $0x34] sm:$0xf]
    %v437 = vld [vmem:[#allocation2 + $0x38] sm:$0xf]
    %v438 = vld [vmem:[#allocation2 + $0x3c] sm:$0xf]
    %v439 = vld [vmem:[#allocation2 + $0x40] sm:$0xf]
    %v440 = vld [vmem:[#allocation2 + $0x44] sm:$0xf]
    %v441 = vld [vmem:[#allocation2 + $0x48] sm:$0xf]
    %v442 = vld [vmem:[#allocation2 + $0x4c] sm:$0xf]
    %v443 = vld [vmem:[#allocation2 + $0x50] sm:$0xf]
    %v444 = vld [vmem:[#allocation2 + $0x54] sm:$0xf]
    %v445 = vld [vmem:[#allocation2 + $0x58] sm:$0xf]
    %v446 = vld [vmem:[#allocation2 + $0x5c] sm:$0xf]
    %v447 = vld [vmem:[#allocation2 + $0x60] sm:$0xf]
    %v448 = vld [vmem:[#allocation2 + $0x64] sm:$0xf]
    %v449 = vld [vmem:[#allocation2 + $0x68] sm:$0xf]
    %v450 = vld [vmem:[#allocation2 + $0x6c] sm:$0xf]
    %v451 = vld [vmem:[#allocation2 + $0x70] sm:$0xf]
    %v452 = vld [vmem:[#allocation2 + $0x74] sm:$0xf]
    %v453 = vld [vmem:[#allocation2 + $0x78] sm:$0xf]
    %v454 = vld [vmem:[#allocation2 + $0x7c] sm:$0xf]
    %v455 = vld [vmem:[#allocation2 + $0x80] sm:$0xf]
    %v456 = vld [vmem:[#allocation2 + $0x84] sm:$0xf]
    %v457 = vld [vmem:[#allocation2 + $0x88] sm:$0xf]
    %v458 = vld [vmem:[#allocation2 + $0x8c] sm:$0xf]
    %v459 = vld [vmem:[#allocation2 + $0x90] sm:$0xf]
    %v460 = vld [vmem:[#allocation2 + $0x94] sm:$0xf]
    %v461 = vld [vmem:[#allocation2 + $0x98] sm:$0xf]
    %v462 = vld [vmem:[#allocation2 + $0x9c] sm:$0xf]
    %v463 = vld [vmem:[#allocation2 + $0xa0] sm:$0xf]
    %v464 = vld [vmem:[#allocation2 + $0xa4] sm:$0xf]
    %v465 = vld [vmem:[#allocation2 + $0xa8] sm:$0xf]
    %v466 = vld [vmem:[#allocation2 + $0xac] sm:$0xf]
    %v467 = vld [vmem:[#allocation2 + $0xb0] sm:$0xf]
    %v468 = vld [vmem:[#allocation2 + $0xb4] sm:$0xf]
    %v469 = vld [vmem:[#allocation2 + $0xb8] sm:$0xf]
    %v470 = vld [vmem:[#allocation2 + $0xbc] sm:$0xf]
    %v471 = vld [vmem:[#allocation2 + $0xc0] sm:$0xf]
    %v472 = vld [vmem:[#allocation2 + $0xc4] sm:$0xf]
    %v473 = vld [vmem:[#allocation2 + $0xc8] sm:$0xf]
    %v474 = vld [vmem:[#allocation2 + $0xcc] sm:$0xf]
    %v475 = vld [vmem:[#allocation2 + $0xd0] sm:$0xf]
    %v476 = vld [vmem:[#allocation2 + $0xd4] sm:$0xf]
    %v477 = vld [vmem:[#allocation2 + $0xd8] sm:$0xf]
    %v478 = vld [vmem:[#allocation2 + $0xdc] sm:$0xf]
    %v479 = vld [vmem:[#allocation2 + $0xe0] sm:$0xf]
    %v480 = vld [vmem:[#allocation2 + $0xe4] sm:$0xf]
    %v481 = vld [vmem:[#allocation2 + $0xe8] sm:$0xf]
    %v482 = vld [vmem:[#allocation2 + $0xec] sm:$0xf]
    %v483 = vld [vmem:[#allocation2 + $0xf0] sm:$0xf]
    %v484 = vld [vmem:[#allocation2 + $0xf4] sm:$0xf]
    %v485 = vld [vmem:[#allocation2 + $0xf8] sm:$0xf]
    %v486 = vld [vmem:[#allocation2 + $0xfc] sm:$0xf]
    %v487 = vld [vmem:[%s5] sm:$0x1]
    %v489 = vlaneseq
    %v490 = vshrl.u32 %v489, 7
    %v491 = vsub.s32 0, %v490
    %v492 = vrot.slane %v487, %v491
    %v558 = vunpack.c.l.b16 %v423
    %v559 = vunpack.c.l.b16 %v424
    %v560 = vunpack.c.l.b16 %v425
    %v561 = vunpack.c.l.b16 %v426
    %v562 = vunpack.c.l.b16 %v427
    %v563 = vunpack.c.l.b16 %v428
    %v564 = vunpack.c.l.b16 %v429
    %v565 = vunpack.c.l.b16 %v430
    %v566 = vunpack.c.l.b16 %v431
    %v567 = vunpack.c.l.b16 %v432
    %v568 = vunpack.c.l.b16 %v433
    %v569 = vunpack.c.l.b16 %v434
    %v570 = vunpack.c.l.b16 %v435
    %v571 = vunpack.c.l.b16 %v436
    %v572 = vunpack.c.l.b16 %v437
    %v573 = vunpack.c.l.b16 %v438
    %v574 = vunpack.c.l.b16 %v439
    %v575 = vunpack.c.l.b16 %v440
    %v576 = vunpack.c.l.b16 %v441
    %v577 = vunpack.c.l.b16 %v442
    %v578 = vunpack.c.l.b16 %v443
    %v579 = vunpack.c.l.b16 %v444
    %v580 = vunpack.c.l.b16 %v445
    %v581 = vunpack.c.l.b16 %v446
    %v582 = vunpack.c.l.b16 %v447
    %v583 = vunpack.c.l.b16 %v448
    %v584 = vunpack.c.l.b16 %v449
    %v585 = vunpack.c.l.b16 %v450
    %v586 = vunpack.c.l.b16 %v451
    %v587 = vunpack.c.l.b16 %v452
    %v588 = vunpack.c.l.b16 %v453
    %v589 = vunpack.c.l.b16 %v454
    %v590 = vunpack.c.l.b16 %v455
    %v591 = vunpack.c.l.b16 %v456
    %v592 = vunpack.c.l.b16 %v457
    %v593 = vunpack.c.l.b16 %v458
    %v594 = vunpack.c.l.b16 %v459
    %v595 = vunpack.c.l.b16 %v460
    %v596 = vunpack.c.l.b16 %v461
    %v597 = vunpack.c.l.b16 %v462
    %v598 = vunpack.c.l.b16 %v463
    %v599 = vunpack.c.l.b16 %v464
    %v600 = vunpack.c.l.b16 %v465
    %v601 = vunpack.c.l.b16 %v466
    %v602 = vunpack.c.l.b16 %v467
    %v603 = vunpack.c.l.b16 %v468
    %v604 = vunpack.c.l.b16 %v469
    %v605 = vunpack.c.l.b16 %v470
    %v606 = vunpack.c.l.b16 %v471
    %v607 = vunpack.c.l.b16 %v472
    %v608 = vunpack.c.l.b16 %v473
    %v609 = vunpack.c.l.b16 %v474
    %v610 = vunpack.c.l.b16 %v475
    %v611 = vunpack.c.l.b16 %v476
    %v612 = vunpack.c.l.b16 %v477
    %v613 = vunpack.c.l.b16 %v478
    %v614 = vunpack.c.l.b16 %v479
    %v615 = vunpack.c.l.b16 %v480
    %v616 = vunpack.c.l.b16 %v481
    %v617 = vunpack.c.l.b16 %v482
    %v618 = vunpack.c.l.b16 %v483
    %v619 = vunpack.c.l.b16 %v484
    %v620 = vunpack.c.l.b16 %v485
    %v621 = vunpack.c.l.b16 %v486
    %v622 = vpack.c.b16 %v559, %v558
    %v623 = vpack.c.b16 %v561, %v560
    %v624 = vpack.c.b16 %v563, %v562
    %v625 = vpack.c.b16 %v565, %v564
    %v626 = vpack.c.b16 %v567, %v566
    %v627 = vpack.c.b16 %v569, %v568
    %v628 = vpack.c.b16 %v571, %v570
    %v629 = vpack.c.b16 %v573, %v572
    %v630 = vpack.c.b16 %v575, %v574
    %v631 = vpack.c.b16 %v577, %v576
    %v632 = vpack.c.b16 %v579, %v578
    %v633 = vpack.c.b16 %v581, %v580
    %v634 = vpack.c.b16 %v583, %v582
    %v635 = vpack.c.b16 %v585, %v584
    %v636 = vpack.c.b16 %v587, %v586
    %v637 = vpack.c.b16 %v589, %v588
    %v638 = vpack.c.b16 %v591, %v590
    %v639 = vpack.c.b16 %v593, %v592
    %v640 = vpack.c.b16 %v595, %v594
    %v641 = vpack.c.b16 %v597, %v596
    %v642 = vpack.c.b16 %v599, %v598
    %v643 = vpack.c.b16 %v601, %v600
    %v644 = vpack.c.b16 %v603, %v602
    %v645 = vpack.c.b16 %v605, %v604
    %v646 = vpack.c.b16 %v607, %v606
    %v647 = vpack.c.b16 %v609, %v608
    %v648 = vpack.c.b16 %v611, %v610
    %v649 = vpack.c.b16 %v613, %v612
    %v650 = vpack.c.b16 %v615, %v614
    %v651 = vpack.c.b16 %v617, %v616
    %v652 = vpack.c.b16 %v619, %v618
    %v653 = vpack.c.b16 %v621, %v620
    %686 = vmatprep.subr.bf16.mxu0 0
    %687 = vmatpush1.bf16.msra.mxu0 %v622
    %688 = vmatprep.subr.bf16.mxu0 0
    %689 = vmatpush1.bf16.msra.mxu0 %v623
    %690 = vmatprep.subr.bf16.mxu0 0
    %691 = vmatpush1.bf16.msra.mxu0 %v624
    %692 = vmatprep.subr.bf16.mxu0 0
    %693 = vmatpush1.bf16.msra.mxu0 %v625
    %694 = vmatprep.subr.bf16.mxu0 0
    %695 = vmatpush1.bf16.msra.mxu0 %v626
    %696 = vmatprep.subr.bf16.mxu0 0
    %697 = vmatpush1.bf16.msra.mxu0 %v627
    %698 = vmatprep.subr.bf16.mxu0 0
    %699 = vmatpush1.bf16.msra.mxu0 %v628
    %700 = vmatprep.subr.bf16.mxu0 0
    %701 = vmatpush1.bf16.msra.mxu0 %v629
    %702 = vmatprep.subr.bf16.mxu0 0
    %703 = vmatpush1.bf16.msra.mxu0 %v630
    %704 = vmatprep.subr.bf16.mxu0 0
    %705 = vmatpush1.bf16.msra.mxu0 %v631
    %706 = vmatprep.subr.bf16.mxu0 0
    %707 = vmatpush1.bf16.msra.mxu0 %v632
    %708 = vmatprep.subr.bf16.mxu0 0
    %709 = vmatpush1.bf16.msra.mxu0 %v633
    %710 = vmatprep.subr.bf16.mxu0 0
    %711 = vmatpush1.bf16.msra.mxu0 %v634
    %712 = vmatprep.subr.bf16.mxu0 0
    %713 = vmatpush1.bf16.msra.mxu0 %v635
    %714 = vmatprep.subr.bf16.mxu0 0
    %715 = vmatpush1.bf16.msra.mxu0 %v636
    %716 = vmatprep.subr.bf16.mxu0 0
    %717 = vmatpush1.bf16.msra.mxu0 %v637
    %718 = vmatprep.mubr.bf16.mxu0 %v420
    %719 = vmatmul.mubr.bf16.gmra.mrb[0].mxu0 %v419
    %v720 = vpop.f32.mrb[0].mxu0
    %v721 = vadd.f32 %v492, %v720
    %v722 = vpop.f32.mrb[0].mxu0
    %v723 = vpop.f32.mrb[0].mxu0
    %v724 = vadd.f32 %v492, %v723
    %v725 = vpop.f32.mrb[0].mxu0
    %726 = vdwg.mxu0
    %727 = vmatprep.subr.bf16.mxu0 0
    %728 = vmatpush1.bf16.msra.mxu0 %v638
    %729 = vmatprep.subr.bf16.mxu0 0
    %730 = vmatpush1.bf16.msra.mxu0 %v639
    %731 = vmatprep.subr.bf16.mxu0 0
    %732 = vmatpush1.bf16.msra.mxu0 %v640
    %733 = vmatprep.subr.bf16.mxu0 0
    %734 = vmatpush1.bf16.msra.mxu0 %v641
    %735 = vmatprep.subr.bf16.mxu0 0
    %736 = vmatpush1.bf16.msra.mxu0 %v642
    %737 = vmatprep.subr.bf16.mxu0 0
    %738 = vmatpush1.bf16.msra.mxu0 %v643
    %739 = vmatprep.subr.bf16.mxu0 0
    %740 = vmatpush1.bf16.msra.mxu0 %v644
    %741 = vmatprep.subr.bf16.mxu0 0
    %742 = vmatpush1.bf16.msra.mxu0 %v645
    %743 = vmatprep.subr.bf16.mxu0 0
    %744 = vmatpush1.bf16.msra.mxu0 %v646
    %745 = vmatprep.subr.bf16.mxu0 0
    %746 = vmatpush1.bf16.msra.mxu0 %v647
    %747 = vmatprep.subr.bf16.mxu0 0
    %748 = vmatpush1.bf16.msra.mxu0 %v648
    %749 = vmatprep.subr.bf16.mxu0 0
    %750 = vmatpush1.bf16.msra.mxu0 %v649
    %751 = vmatprep.subr.bf16.mxu0 0
    %752 = vmatpush1.bf16.msra.mxu0 %v650
    %753 = vmatprep.subr.bf16.mxu0 0
    %754 = vmatpush1.bf16.msra.mxu0 %v651
    %755 = vmatprep.subr.bf16.mxu0 0
    %756 = vmatpush1.bf16.msra.mxu0 %v652
    %757 = vmatprep.subr.bf16.mxu0 0
    %758 = vmatpush1.bf16.msra.mxu0 %v653
    %759 = vmatprep.mubr.bf16.mxu0 %v422
    %760 = vmatmul.mubr.bf16.gmra.mrb[0].mxu0 %v421
    %v761 = vpop.f32.mrb[0].mxu0
    %v762 = vadd.f32 %v721, %v761
    %v763 = vpop.f32.mrb[0].mxu0
    %v764 = vpop.f32.mrb[0].mxu0
    %v765 = vadd.f32 %v724, %v764
    %v766 = vpop.f32.mrb[0].mxu0
    %767 = vdwg.mxu0
    %v768 = vld [vmem:[%s1] sm:$0xff]
    %v769 = vld [vmem:[%s1 + $0x8] sm:$0xff]
    %v770 = vadd.f32 %v762, %v768
    %v771 = vadd.f32 %v765, %v769
    %v772 = vld [vmem:[%s6] sm:$0x1]
    %v773 = vld [vmem:[%s7] sm:$0x1]
    %774 = vadd.xlane.f32.xlu0 %v770
    %v775 = vpop.xlane.xlu0 %774
    %776 = vadd.xlane.f32.xlu0 %v771
    %v777 = vpop.xlane.xlu0 %776
    %v778 = vrcp.pop 128.0
    %v779 = vmul.f32 %v775, %v778
    %v780 = vmul.f32 %v777, %v778
    %v781 = vsub.f32 %v770, %v779
    %v782 = vsub.f32 %v771, %v780
    %v783 = vmul.f32 %v781, %v781
    %v784 = vmul.f32 %v782, %v782
    %785 = vadd.xlane.f32.xlu0 %v783
    %v786 = vpop.xlane.xlu0 %785
    %787 = vadd.xlane.f32.xlu0 %v784
    %v788 = vpop.xlane.xlu0 %787
    %v789 = vmul.f32 %v786, %v778
    %v790 = vmul.f32 %v788, %v778
    %v791 = vadd.f32 %v789, 1e-05
    %v792 = vadd.f32 %v790, 1e-05
    %v793 = vrsqrt.pop %v791
    %v794 = vrsqrt.pop %v792
    %v795 = vmul.f32 %v781, %v793
    %v796 = vmul.f32 %v782, %v794
    %v798 = vlaneseq
    %v799 = vshrl.u32 %v798, 7
    %v800 = vsub.s32 0, %v799
    %v801 = vrot.slane %v772, %v800
    %v803 = vmul.f32 %v795, %v801
    %v804 = vmul.f32 %v796, %v801
    %v806 = vlaneseq
    %v807 = vshrl.u32 %v806, 7
    %v808 = vsub.s32 0, %v807
    %v809 = vrot.slane %v773, %v808
    %v811 = vadd.f32 %v803, %v809
    %v812 = vadd.f32 %v804, %v809
    %813 = vst [vmem:[%s8] sm:$0xff] %v811
    %814 = vst [vmem:[%s8 + $0x8] sm:$0xff] %v812
    // Predicated region
    $region38: #{gpt2_forward.6} parent=1 // pred_check
      _
    $region39: #{gpt2_forward.6} parent=1 // pred_check_branch
      %816 = sbr.rel (0) target = $region41
    $region40: #{gpt2_forward.6} parent=1 // pred_region
      _
    $region41: #{gpt2_forward.6} parent=1 // pred_fallthru
      _
    // Predicated region
    $region42: #{gpt2_forward.6} parent=1 // pred_check
      _
    $region43: #{gpt2_forward.6} parent=1 // pred_check_branch
      %818 = sbr.rel (0) target = $region45
    $region44: #{gpt2_forward.6} parent=1 // pred_region
      _
    $region45: #{gpt2_forward.6} parent=1 // pred_fallthru
      _
    %819 = vsyncpa [#allocation3], 1

// kernel: gpt2_forward.9
$region0: #{gpt2_forward.9}
  #allocation0 [shape = 'u32[]', space=smem, size = 0x4, offset = 0x4, fixed_abs, tag = 'smem constant byte address 0x4 - core index']
  #allocation1 [shape = 'u32[144,128]{1,0:T(1,128)}', space=vmem, size = 0x12000, scoped, tag = 'internal scratch']
  %s0 = inlined_call_operand.vmem [shape: f32[16,128], index: 0, kind: input, shape index: {}]
  %s1 = inlined_call_operand.vmem [shape: f32[1,128], index: 1, kind: input, shape index: {}]
  %s2 = inlined_call_operand.vmem [shape: f32[1,128], index: 2, kind: input, shape index: {}]
  %s3 = inlined_call_operand.hbm [shape: f32[16,128], index: 3, kind: output, shape index: {}]
  %s4 = sld [smem:[#allocation0]]
  $region22: #{gpt2_forward.9} parent=0
    _
  %s6 = ssub.s32 1, %s4
  %s7 = scalar_select 0, %s6, %s4
  $region1: #{gpt2_forward.9} parent=0
    #allocation2 [shape = 'u8[8192]{0}', space=vmem, size = 0x2000, scoped, tag = 'output window, operand 0, single buffered']
    #allocation3 [shape = 's32[1]{0}', space=sflag, size = 0x4, scoped, tag = 'scoped memory for gpt2_forward.9']
    %8 = vsyncpa [#allocation3], 0
    // Predicated region
    $region2: #{gpt2_forward.9} parent=1 // pred_check
      _
    $region3: #{gpt2_forward.9} parent=1 // pred_check_branch
      %10 = sbr.rel (0) target = $region5
    $region4: #{gpt2_forward.9} parent=1 // pred_region
      _
    $region5: #{gpt2_forward.9} parent=1 // pred_fallthru
      _
    // Predicated region
    $region6: #{gpt2_forward.9} parent=1 // pred_check
      _
    $region7: #{gpt2_forward.9} parent=1 // pred_check_branch
      %12 = sbr.rel (0) target = $region9
    $region8: #{gpt2_forward.9} parent=1 // pred_region
      _
    $region9: #{gpt2_forward.9} parent=1 // pred_fallthru
      _
    // Predicated region
    $region10: #{gpt2_forward.9} parent=1 // pred_check
      _
    $region11: #{gpt2_forward.9} parent=1 // pred_check_branch
      %14 = sbr.rel (0) target = $region13
    $region12: #{gpt2_forward.9} parent=1 // pred_region
      _
    $region13: #{gpt2_forward.9} parent=1 // pred_fallthru
      _
    %v15 = vld [vmem:[%s0] sm:$0xff]
    %v16 = vld [vmem:[%s0 + $0x8] sm:$0xff]
    %v17 = vld [vmem:[%s1] sm:$0x1]
    %v18 = vld [vmem:[%s2] sm:$0x1]
    %19 = vadd.xlane.f32.xlu0 %v15
    %v20 = vpop.xlane.xlu0 %19
    %21 = vadd.xlane.f32.xlu0 %v16
    %v22 = vpop.xlane.xlu0 %21
    %v23 = vrcp.pop 128.0
    %v24 = vmul.f32 %v20, %v23
    %v25 = vmul.f32 %v22, %v23
    %v26 = vsub.f32 %v15, %v24
    %v27 = vsub.f32 %v16, %v25
    %v28 = vmul.f32 %v26, %v26
    %v29 = vmul.f32 %v27, %v27
    %30 = vadd.xlane.f32.xlu0 %v28
    %v31 = vpop.xlane.xlu0 %30
    %32 = vadd.xlane.f32.xlu0 %v29
    %v33 = vpop.xlane.xlu0 %32
    %v34 = vmul.f32 %v31, %v23
    %v35 = vmul.f32 %v33, %v23
    %v36 = vadd.f32 %v34, 1e-05
    %v37 = vadd.f32 %v35, 1e-05
    %v38 = vrsqrt.pop %v36
    %v39 = vrsqrt.pop %v37
    %v40 = vmul.f32 %v26, %v38
    %v41 = vmul.f32 %v27, %v39
    %v43 = vlaneseq
    %v44 = vshrl.u32 %v43, 7
    %v45 = vsub.s32 0, %v44
    %v46 = vrot.slane %v17, %v45
    %v48 = vmul.f32 %v40, %v46
    %v49 = vmul.f32 %v41, %v46
    %v51 = vlaneseq
    %v52 = vshrl.u32 %v51, 7
    %v53 = vsub.s32 0, %v52
    %v54 = vrot.slane %v18, %v53
    %v56 = vadd.f32 %v48, %v54
    %v57 = vadd.f32 %v49, %v54
    %58 = vst [vmem:[#allocation2] sm:$0xff] %v56
    %59 = vst [vmem:[#allocation2 + $0x8] sm:$0xff] %v57
    // Predicated region
    $region14: #{gpt2_forward.9} parent=1 // pred_check
      _
    $region15: #{gpt2_forward.9} parent=1 // pred_check_branch
      %61 = sbr.rel (0) target = $region17
    $region16: #{gpt2_forward.9} parent=1 // pred_region
      %s63 = ssub.s32 256, 256
      %64 = vsyncadd [#allocation3], %s63
      %s65 = sshll.u32 [#allocation2], 4
      %s66 = int_to_ptr.vmem [resolvable:$true] %s65
      %71 = dma.vmem_to_hbm [thread:$0]  %s66, 256, %s3, [#allocation3], 128, 128, 8
    $region17: #{gpt2_forward.9} parent=1 // pred_fallthru
      _
    // Predicated region
    $region18: #{gpt2_forward.9} parent=1 // pred_check
      _
    $region19: #{gpt2_forward.9} parent=1 // pred_check_branch
      %73 = sbr.rel (0) target = $region21
    $region20: #{gpt2_forward.9} parent=1 // pred_region
      %74 = dma.done [#allocation3], 256
    $region21: #{gpt2_forward.9} parent=1 // pred_fallthru
      _
    %75 = vsyncpa [#allocation3], 1

</llo_original>
